<compile_context>
chip_gen: v5e
topology: v5e:2x2
jax: 0.10.0
libtpu: 0.0.40
codegen_flags: <defaults>
</compile_context>

<pallas_src>
import functools

import numpy as np
import jax
import jax.numpy as jnp
from jax import lax
from jax.experimental import pallas as pl
from jax.experimental.pallas import tpu as pltpu


def _tree_sum(terms):
    """Pairwise-balanced sum (shorter dependency chains than a linear chain)."""
    terms = list(terms)
    while len(terms) > 1:
        nxt = [a + b for a, b in zip(terms[::2], terms[1::2])]
        if len(terms) % 2:
            nxt.append(terms[-1])
        terms = nxt
    return terms[0]


def _auto_budgets():
    """(input-block byte budget, vmem_limit_bytes), sized per TPU generation."""
    try:
        kind = jax.devices()[0].device_kind.lower()
    except Exception:  # pragma: no cover - defensive
        kind = ""
    if "v5 lite" in kind or "v5e" in kind or "v5lite" in kind:
        # 128 MiB physical VMEM, default scoped limit only 16 MiB -> raise it.
        return 6 << 20, 64 << 20
    if "v6" in kind:
        # v6e: 128 MiB physical, 1.3-1.4 TB/s HBM -> use big blocks.
        return 12 << 20, 96 << 20
    if "v7" in kind or "7x" in kind:
        # v7x: only 64 MiB VMEM per TensorCore, 2 TCs -> smaller blocks.
        return 5 << 20, 44 << 20
    return 4 << 20, 48 << 20


def _make_kernel(depth, C, hq, Wt):
    """All `depth` downconv layers for one (batch, H-chunk, W-chunk) block."""
    n_streams = 1 << depth

    def widx(l, kh, kw, o, i):
        return (((l * 2 + kh) * 2 + kw) * C + o) * C + i

    def kernel(w_ref, b_ref, a_ref, x_ref, o_ref):
        # w_ref : (depth*4*C*C,) f32 SMEM   w[l, kh, kw, o, i]
        # b_ref : (depth*C,)     f32 SMEM   bias
        # a_ref : (depth*C,)     f32 SMEM   PReLU alpha
        # x_ref : (1, C, hq, 2**depth, Wt)  raw NCHW rows; dim 3 = row % 2**depth
        # o_ref : (1, C, hq, Wt)            valid cols at lane stride 2**depth
        lane = lax.broadcasted_iota(jnp.int32, (1, Wt), 1)

        # One (hq, Wt) f32 slab per (H-residue, channel).  The residue encodes
        # the full H-tap path, so no H decimation is ever needed in-kernel.
        streams = [[x_ref[0, c, :, r, :].astype(jnp.float32) for c in range(C)]
                   for r in range(n_streams)]

        for l in range(depth):
            step = 1 << l
            # Lanes holding this layer's kw=0 tap positions use the kw=0
            # weight, kw=1 positions the kw=1 weight (other lanes: don't care).
            mask = ((lane >> l) & 1) == 0                      # (1, Wt) bool
            # Hoisted, explicitly broadcast patterned weights (reused by every
            # output stream of this layer; JAX does not CSE broadcasts).
            wpat = [[[jnp.broadcast_to(
                          jnp.where(mask,
                                    w_ref[widx(l, kh, 0, o, i)],
                                    w_ref[widx(l, kh, 1, o, i)]),
                          (hq, Wt))
                      for i in range(C)] for o in range(C)] for kh in range(2)]

            new_streams = []
            for s in range(len(streams) // 2):
                taps = (streams[2 * s], streams[2 * s + 1])     # kh = 0, 1
                outs = []
                for o in range(C):
                    # Channel mix of both H-taps with lane-patterned weights:
                    # one slab-MAC per (kh, in-channel), accumulator stays a
                    # single fused expression (no repeated RMW passes).
                    acc = _tree_sum([wpat[kh][o][i] * taps[kh][i]
                                     for kh in range(2) for i in range(C)])
                    # Combine the two kw taps: u[p] = acc[p] + acc[p + step]
                    # (roll by -step expressed as a positive cyclic shift; the
                    # wrap-around only ever lands on invalid lanes).
                    u = acc + pltpu.roll(acc, Wt - step, axis=1)
                    y = u + b_ref[l * C + o]
                    outs.append(jnp.where(y > 0, y, a_ref[l * C + o] * y))
                new_streams.append(outs)
            streams = new_streams

        final = streams[0]
        for c in range(C):
            o_ref[0, c, :, :] = final[c].astype(o_ref.dtype)

    return kernel


def downconv_forward(x, wflat, bflat, aflat, *, depth,
                     block_budget_bytes=None, vmem_limit_bytes=None,
                     min_grid_steps=8):
    """x: (B, C, H, W) NCHW -> (B, C, H // 2**depth, W // 2**depth)."""
    B, C, H, W = x.shape
    if depth == 0:
        return x
    s = 1 << depth
    assert H % s == 0 and W % s == 0, \
        "spatial dims must be divisible by 2**depth (even-size case only)"
    Hf, Wf = H // s, W // s

    if block_budget_bytes is None or vmem_limit_bytes is None:
        bb, vl = _auto_budgets()
        block_budget_bytes = block_budget_bytes or bb
        vmem_limit_bytes = vmem_limit_bytes or vl

    itemsize = x.dtype.itemsize

    # --- W chunking: only needed when a single final-row group is too big.
    #     Chunks must be multiples of 128 lanes (or the full W) per the (8,128)
    #     block rule; chunk boundaries stay multiples of 2**depth.
    nw = 1
    if C * s * W * itemsize > block_budget_bytes:
        for cand in range(2, Wf + 1):
            wt = W // cand
            if (Wf % cand == 0 and wt % 128 == 0
                    and C * s * wt * itemsize <= block_budget_bytes):
                nw = cand
                break
    Wt = W // nw

    # --- H chunking: hq = final output rows per block.  The output block's
    #     sublane dim is hq, so it must be a multiple of 8 or the full Hf.
    cands = sorted({d for d in range(1, Hf + 1)
                    if Hf % d == 0 and (d % 8 == 0 or d == Hf)})
    row_block = C * s * Wt * itemsize
    fit = [d for d in cands if d * row_block <= block_budget_bytes]
    hq = max(fit) if fit else cands[0]
    # Keep enough grid steps to feed both v7x TensorCores / the pipeline.
    while (B * (Hf // hq) * nw) < min_grid_steps:
        smaller = [d for d in cands if d < hq]
        if not smaller:
            break
        hq = max(smaller)

    # Free reshape (no data movement): split H into (final row, residue).
    x5 = x.reshape(B, C, Hf, s, W)

    kernel = _make_kernel(depth, C, hq, Wt)

    macs = 4 * C * C * B * sum((H >> (l + 1)) * (W >> (l + 1))
                               for l in range(depth))
    cost = pl.CostEstimate(
        flops=2 * macs,
        transcendentals=0,
        bytes_accessed=int(x.size) * itemsize + B * C * Hf * W * itemsize)

    out_full = pl.pallas_call(
        kernel,
        out_shape=jax.ShapeDtypeStruct((B, C, Hf, W), x.dtype),
        grid_spec=pl.GridSpec(
            grid=(B, Hf // hq, W // Wt),
            in_specs=[
                pl.BlockSpec(memory_space=pltpu.MemorySpace.SMEM),   # weights
                pl.BlockSpec(memory_space=pltpu.MemorySpace.SMEM),   # bias
                pl.BlockSpec(memory_space=pltpu.MemorySpace.SMEM),   # alpha
                pl.BlockSpec((1, C, hq, s, Wt),
                             lambda b, i, j: (b, 0, i, 0, j)),
            ],
            out_specs=pl.BlockSpec((1, C, hq, Wt),
                                   lambda b, i, j: (b, 0, i, j)),
        ),
        compiler_params=pltpu.CompilerParams(
            dimension_semantics=("parallel", "parallel", "parallel"),
            vmem_limit_bytes=vmem_limit_bytes),
        cost_estimate=cost,
    )(wflat, bflat, aflat, x5)

    # Valid output columns sit at lane stride 2**depth; compact them (output is
    # already 2**depth x smaller than the input, so this pass is cheap).
    return out_full[:, :, :, ::s]


class DownConvPallas:
    """JAX/Pallas re-implementation of DownConv (2d case)."""

    def __init__(self, in_shape, in_ch, depth=3, key=None):
        assert len(in_shape) == 2, "only 2d supported here"
        # TODO(synk): 3d variant (Conv3d) of the original module is not implemented.
        self.in_shape = np.array(in_shape)
        self.in_ch = in_ch
        self.depth = depth
        if key is None:
            key = jax.random.PRNGKey(0)
        self.params = []
        C = in_ch
        fan_in = C * 2 * 2
        bound = 1.0 / np.sqrt(fan_in)
        for _ in range(depth):
            key, kw_, kb = jax.random.split(key, 3)
            weight = jax.random.uniform(kw_, (C, C, 2, 2), jnp.float32, -bound, bound)
            bias = jax.random.uniform(kb, (C,), jnp.float32, -bound, bound)
            alpha = jnp.full((C,), 0.25, jnp.float32)     # PReLU default init
            self.params.append((weight, bias, alpha))
        # Flat SMEM operand packing:
        #   wflat[(((l*2+kh)*2+kw)*C + o)*C + i] = weight_l[o, i, kh, kw]
        self.wflat = jnp.concatenate(
            [w.transpose(2, 3, 0, 1).reshape(-1) for (w, _, _) in self.params])
        self.bflat = jnp.concatenate([b for (_, b, _) in self.params])
        self.aflat = jnp.concatenate([a for (_, _, a) in self.params])
        self._fwd = jax.jit(functools.partial(downconv_forward, depth=depth))

    def __call__(self, x):
        return self._fwd(x, self.wflat, self.bflat, self.aflat)


def _reference(x, params):
    """Pure-JAX reference (mirrors PyTorch Conv2d(k=2,s=2) + PReLU)."""
    for (weight, bias, alpha) in params:
        y = lax.conv_general_dilated(
            x, weight, window_strides=(2, 2), padding="VALID",
            dimension_numbers=("NCHW", "OIHW", "NCHW"))
        y = y + bias[None, :, None, None]
        x = jnp.where(y > 0, y, alpha[None, :, None, None] * y)
    return x


if __name__ == "__main__":
    B, C, H, W = 2, 4, 16, 16
    depth = 3
    key = jax.random.PRNGKey(0)
    kx, kp = jax.random.split(key)
    x = jax.random.normal(kx, (B, C, H, W), jnp.float32)

    model = DownConvPallas((H, W), C, depth=depth, key=kp)
    out = jax.block_until_ready(model(x))

    assert out.shape == (B, C, H // (2 ** depth), W // (2 ** depth)), out.shape
    ref = jax.block_until_ready(_reference(x, model.params))
    assert np.allclose(np.asarray(out), np.asarray(ref), atol=1e-5, rtol=1e-5)

    print("KERNEL_OK")
</pallas_src>

<mosaic_0001>
module attributes {stable_mosaic.version = 11 : i64} {
  func.func @kernel(%arg0: i32, %arg1: i32, %arg2: i32, %arg3: memref<192xf32, #tpu.memory_space<smem>>, %arg4: memref<12xf32, #tpu.memory_space<smem>>, %arg5: memref<12xf32, #tpu.memory_space<smem>>, %arg6: memref<1x4x2x8x16xf32, #tpu.memory_space<vmem>>, %arg7: memref<1x4x2x16xf32, #tpu.memory_space<vmem>>) attributes {dimension_semantics = [#tpu.dimension_semantics<parallel>, #tpu.dimension_semantics<parallel>, #tpu.dimension_semantics<parallel>], iteration_bounds = array<i64: 2, 1, 1>, scalar_prefetch = 0 : i64, scratch_operands = 0 : i64, tpu.core_type = #tpu.core_type<tc>, window_params = [{transform_indices = @transform_0, window_bounds = array<i64: 192>}, {transform_indices = @transform_1, window_bounds = array<i64: 12>}, {transform_indices = @transform_2, window_bounds = array<i64: 12>}, {transform_indices = @transform_3, window_bounds = array<i64: 1, 4, 2, 8, 16>}, {transform_indices = @transform_4, window_bounds = array<i64: 1, 4, 2, 16>}]} {
    %0 = tpu.iota {dimensions = array<i32: 1>} : vector<1x16xi32>
    %c0 = arith.constant 0 : index
    %c0_0 = arith.constant 0 : index
    %c0_1 = arith.constant 0 : index
    %c0_2 = arith.constant 0 : index
    %c0_3 = arith.constant 0 : index
    %1 = vector.load %arg6[%c0, %c0_0, %c0_1, %c0_2, %c0_3] : memref<1x4x2x8x16xf32, #tpu.memory_space<vmem>>, vector<1x1x2x1x16xf32>
    %2 = vector.shape_cast %1 : vector<1x1x2x1x16xf32> to vector<2x16xf32>
    %c0_4 = arith.constant 0 : index
    %c1 = arith.constant 1 : index
    %c0_5 = arith.constant 0 : index
    %c0_6 = arith.constant 0 : index
    %c0_7 = arith.constant 0 : index
    %3 = vector.load %arg6[%c0_4, %c1, %c0_5, %c0_6, %c0_7] : memref<1x4x2x8x16xf32, #tpu.memory_space<vmem>>, vector<1x1x2x1x16xf32>
    %4 = vector.shape_cast %3 : vector<1x1x2x1x16xf32> to vector<2x16xf32>
    %c0_8 = arith.constant 0 : index
    %c2 = arith.constant 2 : index
    %c0_9 = arith.constant 0 : index
    %c0_10 = arith.constant 0 : index
    %c0_11 = arith.constant 0 : index
    %5 = vector.load %arg6[%c0_8, %c2, %c0_9, %c0_10, %c0_11] : memref<1x4x2x8x16xf32, #tpu.memory_space<vmem>>, vector<1x1x2x1x16xf32>
    %6 = vector.shape_cast %5 : vector<1x1x2x1x16xf32> to vector<2x16xf32>
    %c0_12 = arith.constant 0 : index
    %c3 = arith.constant 3 : index
    %c0_13 = arith.constant 0 : index
    %c0_14 = arith.constant 0 : index
    %c0_15 = arith.constant 0 : index
    %7 = vector.load %arg6[%c0_12, %c3, %c0_13, %c0_14, %c0_15] : memref<1x4x2x8x16xf32, #tpu.memory_space<vmem>>, vector<1x1x2x1x16xf32>
    %8 = vector.shape_cast %7 : vector<1x1x2x1x16xf32> to vector<2x16xf32>
    %c0_16 = arith.constant 0 : index
    %c0_17 = arith.constant 0 : index
    %c0_18 = arith.constant 0 : index
    %c1_19 = arith.constant 1 : index
    %c0_20 = arith.constant 0 : index
    %9 = vector.load %arg6[%c0_16, %c0_17, %c0_18, %c1_19, %c0_20] : memref<1x4x2x8x16xf32, #tpu.memory_space<vmem>>, vector<1x1x2x1x16xf32>
    %10 = vector.shape_cast %9 : vector<1x1x2x1x16xf32> to vector<2x16xf32>
    %c0_21 = arith.constant 0 : index
    %c1_22 = arith.constant 1 : index
    %c0_23 = arith.constant 0 : index
    %c1_24 = arith.constant 1 : index
    %c0_25 = arith.constant 0 : index
    %11 = vector.load %arg6[%c0_21, %c1_22, %c0_23, %c1_24, %c0_25] : memref<1x4x2x8x16xf32, #tpu.memory_space<vmem>>, vector<1x1x2x1x16xf32>
    %12 = vector.shape_cast %11 : vector<1x1x2x1x16xf32> to vector<2x16xf32>
    %c0_26 = arith.constant 0 : index
    %c2_27 = arith.constant 2 : index
    %c0_28 = arith.constant 0 : index
    %c1_29 = arith.constant 1 : index
    %c0_30 = arith.constant 0 : index
    %13 = vector.load %arg6[%c0_26, %c2_27, %c0_28, %c1_29, %c0_30] : memref<1x4x2x8x16xf32, #tpu.memory_space<vmem>>, vector<1x1x2x1x16xf32>
    %14 = vector.shape_cast %13 : vector<1x1x2x1x16xf32> to vector<2x16xf32>
    %c0_31 = arith.constant 0 : index
    %c3_32 = arith.constant 3 : index
    %c0_33 = arith.constant 0 : index
    %c1_34 = arith.constant 1 : index
    %c0_35 = arith.constant 0 : index
    %15 = vector.load %arg6[%c0_31, %c3_32, %c0_33, %c1_34, %c0_35] : memref<1x4x2x8x16xf32, #tpu.memory_space<vmem>>, vector<1x1x2x1x16xf32>
    %16 = vector.shape_cast %15 : vector<1x1x2x1x16xf32> to vector<2x16xf32>
    %c0_36 = arith.constant 0 : index
    %c0_37 = arith.constant 0 : index
    %c0_38 = arith.constant 0 : index
    %c2_39 = arith.constant 2 : index
    %c0_40 = arith.constant 0 : index
    %17 = vector.load %arg6[%c0_36, %c0_37, %c0_38, %c2_39, %c0_40] : memref<1x4x2x8x16xf32, #tpu.memory_space<vmem>>, vector<1x1x2x1x16xf32>
    %18 = vector.shape_cast %17 : vector<1x1x2x1x16xf32> to vector<2x16xf32>
    %c0_41 = arith.constant 0 : index
    %c1_42 = arith.constant 1 : index
    %c0_43 = arith.constant 0 : index
    %c2_44 = arith.constant 2 : index
    %c0_45 = arith.constant 0 : index
    %19 = vector.load %arg6[%c0_41, %c1_42, %c0_43, %c2_44, %c0_45] : memref<1x4x2x8x16xf32, #tpu.memory_space<vmem>>, vector<1x1x2x1x16xf32>
    %20 = vector.shape_cast %19 : vector<1x1x2x1x16xf32> to vector<2x16xf32>
    %c0_46 = arith.constant 0 : index
    %c2_47 = arith.constant 2 : index
    %c0_48 = arith.constant 0 : index
    %c2_49 = arith.constant 2 : index
    %c0_50 = arith.constant 0 : index
    %21 = vector.load %arg6[%c0_46, %c2_47, %c0_48, %c2_49, %c0_50] : memref<1x4x2x8x16xf32, #tpu.memory_space<vmem>>, vector<1x1x2x1x16xf32>
    %22 = vector.shape_cast %21 : vector<1x1x2x1x16xf32> to vector<2x16xf32>
    %c0_51 = arith.constant 0 : index
    %c3_52 = arith.constant 3 : index
    %c0_53 = arith.constant 0 : index
    %c2_54 = arith.constant 2 : index
    %c0_55 = arith.constant 0 : index
    %23 = vector.load %arg6[%c0_51, %c3_52, %c0_53, %c2_54, %c0_55] : memref<1x4x2x8x16xf32, #tpu.memory_space<vmem>>, vector<1x1x2x1x16xf32>
    %24 = vector.shape_cast %23 : vector<1x1x2x1x16xf32> to vector<2x16xf32>
    %c0_56 = arith.constant 0 : index
    %c0_57 = arith.constant 0 : index
    %c0_58 = arith.constant 0 : index
    %c3_59 = arith.constant 3 : index
    %c0_60 = arith.constant 0 : index
    %25 = vector.load %arg6[%c0_56, %c0_57, %c0_58, %c3_59, %c0_60] : memref<1x4x2x8x16xf32, #tpu.memory_space<vmem>>, vector<1x1x2x1x16xf32>
    %26 = vector.shape_cast %25 : vector<1x1x2x1x16xf32> to vector<2x16xf32>
    %c0_61 = arith.constant 0 : index
    %c1_62 = arith.constant 1 : index
    %c0_63 = arith.constant 0 : index
    %c3_64 = arith.constant 3 : index
    %c0_65 = arith.constant 0 : index
    %27 = vector.load %arg6[%c0_61, %c1_62, %c0_63, %c3_64, %c0_65] : memref<1x4x2x8x16xf32, #tpu.memory_space<vmem>>, vector<1x1x2x1x16xf32>
    %28 = vector.shape_cast %27 : vector<1x1x2x1x16xf32> to vector<2x16xf32>
    %c0_66 = arith.constant 0 : index
    %c2_67 = arith.constant 2 : index
    %c0_68 = arith.constant 0 : index
    %c3_69 = arith.constant 3 : index
    %c0_70 = arith.constant 0 : index
    %29 = vector.load %arg6[%c0_66, %c2_67, %c0_68, %c3_69, %c0_70] : memref<1x4x2x8x16xf32, #tpu.memory_space<vmem>>, vector<1x1x2x1x16xf32>
    %30 = vector.shape_cast %29 : vector<1x1x2x1x16xf32> to vector<2x16xf32>
    %c0_71 = arith.constant 0 : index
    %c3_72 = arith.constant 3 : index
    %c0_73 = arith.constant 0 : index
    %c3_74 = arith.constant 3 : index
    %c0_75 = arith.constant 0 : index
    %31 = vector.load %arg6[%c0_71, %c3_72, %c0_73, %c3_74, %c0_75] : memref<1x4x2x8x16xf32, #tpu.memory_space<vmem>>, vector<1x1x2x1x16xf32>
    %32 = vector.shape_cast %31 : vector<1x1x2x1x16xf32> to vector<2x16xf32>
    %c0_76 = arith.constant 0 : index
    %c0_77 = arith.constant 0 : index
    %c0_78 = arith.constant 0 : index
    %c4 = arith.constant 4 : index
    %c0_79 = arith.constant 0 : index
    %33 = vector.load %arg6[%c0_76, %c0_77, %c0_78, %c4, %c0_79] : memref<1x4x2x8x16xf32, #tpu.memory_space<vmem>>, vector<1x1x2x1x16xf32>
    %34 = vector.shape_cast %33 : vector<1x1x2x1x16xf32> to vector<2x16xf32>
    %c0_80 = arith.constant 0 : index
    %c1_81 = arith.constant 1 : index
    %c0_82 = arith.constant 0 : index
    %c4_83 = arith.constant 4 : index
    %c0_84 = arith.constant 0 : index
    %35 = vector.load %arg6[%c0_80, %c1_81, %c0_82, %c4_83, %c0_84] : memref<1x4x2x8x16xf32, #tpu.memory_space<vmem>>, vector<1x1x2x1x16xf32>
    %36 = vector.shape_cast %35 : vector<1x1x2x1x16xf32> to vector<2x16xf32>
    %c0_85 = arith.constant 0 : index
    %c2_86 = arith.constant 2 : index
    %c0_87 = arith.constant 0 : index
    %c4_88 = arith.constant 4 : index
    %c0_89 = arith.constant 0 : index
    %37 = vector.load %arg6[%c0_85, %c2_86, %c0_87, %c4_88, %c0_89] : memref<1x4x2x8x16xf32, #tpu.memory_space<vmem>>, vector<1x1x2x1x16xf32>
    %38 = vector.shape_cast %37 : vector<1x1x2x1x16xf32> to vector<2x16xf32>
    %c0_90 = arith.constant 0 : index
    %c3_91 = arith.constant 3 : index
    %c0_92 = arith.constant 0 : index
    %c4_93 = arith.constant 4 : index
    %c0_94 = arith.constant 0 : index
    %39 = vector.load %arg6[%c0_90, %c3_91, %c0_92, %c4_93, %c0_94] : memref<1x4x2x8x16xf32, #tpu.memory_space<vmem>>, vector<1x1x2x1x16xf32>
    %40 = vector.shape_cast %39 : vector<1x1x2x1x16xf32> to vector<2x16xf32>
    %c0_95 = arith.constant 0 : index
    %c0_96 = arith.constant 0 : index
    %c0_97 = arith.constant 0 : index
    %c5 = arith.constant 5 : index
    %c0_98 = arith.constant 0 : index
    %41 = vector.load %arg6[%c0_95, %c0_96, %c0_97, %c5, %c0_98] : memref<1x4x2x8x16xf32, #tpu.memory_space<vmem>>, vector<1x1x2x1x16xf32>
    %42 = vector.shape_cast %41 : vector<1x1x2x1x16xf32> to vector<2x16xf32>
    %c0_99 = arith.constant 0 : index
    %c1_100 = arith.constant 1 : index
    %c0_101 = arith.constant 0 : index
    %c5_102 = arith.constant 5 : index
    %c0_103 = arith.constant 0 : index
    %43 = vector.load %arg6[%c0_99, %c1_100, %c0_101, %c5_102, %c0_103] : memref<1x4x2x8x16xf32, #tpu.memory_space<vmem>>, vector<1x1x2x1x16xf32>
    %44 = vector.shape_cast %43 : vector<1x1x2x1x16xf32> to vector<2x16xf32>
    %c0_104 = arith.constant 0 : index
    %c2_105 = arith.constant 2 : index
    %c0_106 = arith.constant 0 : index
    %c5_107 = arith.constant 5 : index
    %c0_108 = arith.constant 0 : index
    %45 = vector.load %arg6[%c0_104, %c2_105, %c0_106, %c5_107, %c0_108] : memref<1x4x2x8x16xf32, #tpu.memory_space<vmem>>, vector<1x1x2x1x16xf32>
    %46 = vector.shape_cast %45 : vector<1x1x2x1x16xf32> to vector<2x16xf32>
    %c0_109 = arith.constant 0 : index
    %c3_110 = arith.constant 3 : index
    %c0_111 = arith.constant 0 : index
    %c5_112 = arith.constant 5 : index
    %c0_113 = arith.constant 0 : index
    %47 = vector.load %arg6[%c0_109, %c3_110, %c0_111, %c5_112, %c0_113] : memref<1x4x2x8x16xf32, #tpu.memory_space<vmem>>, vector<1x1x2x1x16xf32>
    %48 = vector.shape_cast %47 : vector<1x1x2x1x16xf32> to vector<2x16xf32>
    %c0_114 = arith.constant 0 : index
    %c0_115 = arith.constant 0 : index
    %c0_116 = arith.constant 0 : index
    %c6 = arith.constant 6 : index
    %c0_117 = arith.constant 0 : index
    %49 = vector.load %arg6[%c0_114, %c0_115, %c0_116, %c6, %c0_117] : memref<1x4x2x8x16xf32, #tpu.memory_space<vmem>>, vector<1x1x2x1x16xf32>
    %50 = vector.shape_cast %49 : vector<1x1x2x1x16xf32> to vector<2x16xf32>
    %c0_118 = arith.constant 0 : index
    %c1_119 = arith.constant 1 : index
    %c0_120 = arith.constant 0 : index
    %c6_121 = arith.constant 6 : index
    %c0_122 = arith.constant 0 : index
    %51 = vector.load %arg6[%c0_118, %c1_119, %c0_120, %c6_121, %c0_122] : memref<1x4x2x8x16xf32, #tpu.memory_space<vmem>>, vector<1x1x2x1x16xf32>
    %52 = vector.shape_cast %51 : vector<1x1x2x1x16xf32> to vector<2x16xf32>
    %c0_123 = arith.constant 0 : index
    %c2_124 = arith.constant 2 : index
    %c0_125 = arith.constant 0 : index
    %c6_126 = arith.constant 6 : index
    %c0_127 = arith.constant 0 : index
    %53 = vector.load %arg6[%c0_123, %c2_124, %c0_125, %c6_126, %c0_127] : memref<1x4x2x8x16xf32, #tpu.memory_space<vmem>>, vector<1x1x2x1x16xf32>
    %54 = vector.shape_cast %53 : vector<1x1x2x1x16xf32> to vector<2x16xf32>
    %c0_128 = arith.constant 0 : index
    %c3_129 = arith.constant 3 : index
    %c0_130 = arith.constant 0 : index
    %c6_131 = arith.constant 6 : index
    %c0_132 = arith.constant 0 : index
    %55 = vector.load %arg6[%c0_128, %c3_129, %c0_130, %c6_131, %c0_132] : memref<1x4x2x8x16xf32, #tpu.memory_space<vmem>>, vector<1x1x2x1x16xf32>
    %56 = vector.shape_cast %55 : vector<1x1x2x1x16xf32> to vector<2x16xf32>
    %c0_133 = arith.constant 0 : index
    %c0_134 = arith.constant 0 : index
    %c0_135 = arith.constant 0 : index
    %c7 = arith.constant 7 : index
    %c0_136 = arith.constant 0 : index
    %57 = vector.load %arg6[%c0_133, %c0_134, %c0_135, %c7, %c0_136] : memref<1x4x2x8x16xf32, #tpu.memory_space<vmem>>, vector<1x1x2x1x16xf32>
    %58 = vector.shape_cast %57 : vector<1x1x2x1x16xf32> to vector<2x16xf32>
    %c0_137 = arith.constant 0 : index
    %c1_138 = arith.constant 1 : index
    %c0_139 = arith.constant 0 : index
    %c7_140 = arith.constant 7 : index
    %c0_141 = arith.constant 0 : index
    %59 = vector.load %arg6[%c0_137, %c1_138, %c0_139, %c7_140, %c0_141] : memref<1x4x2x8x16xf32, #tpu.memory_space<vmem>>, vector<1x1x2x1x16xf32>
    %60 = vector.shape_cast %59 : vector<1x1x2x1x16xf32> to vector<2x16xf32>
    %c0_142 = arith.constant 0 : index
    %c2_143 = arith.constant 2 : index
    %c0_144 = arith.constant 0 : index
    %c7_145 = arith.constant 7 : index
    %c0_146 = arith.constant 0 : index
    %61 = vector.load %arg6[%c0_142, %c2_143, %c0_144, %c7_145, %c0_146] : memref<1x4x2x8x16xf32, #tpu.memory_space<vmem>>, vector<1x1x2x1x16xf32>
    %62 = vector.shape_cast %61 : vector<1x1x2x1x16xf32> to vector<2x16xf32>
    %c0_147 = arith.constant 0 : index
    %c3_148 = arith.constant 3 : index
    %c0_149 = arith.constant 0 : index
    %c7_150 = arith.constant 7 : index
    %c0_151 = arith.constant 0 : index
    %63 = vector.load %arg6[%c0_147, %c3_148, %c0_149, %c7_150, %c0_151] : memref<1x4x2x8x16xf32, #tpu.memory_space<vmem>>, vector<1x1x2x1x16xf32>
    %64 = vector.shape_cast %63 : vector<1x1x2x1x16xf32> to vector<2x16xf32>
    %c0_i32 = arith.constant 0 : i32
    %65 = vector.broadcast %c0_i32 : i32 to vector<1x16xi32>
    %66 = arith.shrsi %0, %65 : vector<1x16xi32>
    %c1_i32 = arith.constant 1 : i32
    %67 = vector.broadcast %c1_i32 : i32 to vector<1x16xi32>
    %68 = arith.andi %66, %67 : vector<1x16xi32>
    %c0_i32_152 = arith.constant 0 : i32
    %69 = vector.broadcast %c0_i32_152 : i32 to vector<1x16xi32>
    %70 = arith.cmpi eq, %68, %69 : vector<1x16xi32>
    %c0_153 = arith.constant 0 : index
    %71 = memref.load %arg3[%c0_153] : memref<192xf32, #tpu.memory_space<smem>>
    %c16 = arith.constant 16 : index
    %72 = memref.load %arg3[%c16] : memref<192xf32, #tpu.memory_space<smem>>
    %73 = vector.broadcast %71 : f32 to vector<1x16xf32>
    %74 = vector.broadcast %72 : f32 to vector<1x16xf32>
    %75 = arith.select %70, %73, %74 : vector<1x16xi1>, vector<1x16xf32>
    %76 = vector.shape_cast %75 : vector<1x16xf32> to vector<1x16xf32>
    %77 = vector.broadcast %76 : vector<1x16xf32> to vector<2x16xf32>
    %c1_154 = arith.constant 1 : index
    %78 = memref.load %arg3[%c1_154] : memref<192xf32, #tpu.memory_space<smem>>
    %c17 = arith.constant 17 : index
    %79 = memref.load %arg3[%c17] : memref<192xf32, #tpu.memory_space<smem>>
    %80 = vector.broadcast %78 : f32 to vector<1x16xf32>
    %81 = vector.broadcast %79 : f32 to vector<1x16xf32>
    %82 = arith.select %70, %80, %81 : vector<1x16xi1>, vector<1x16xf32>
    %83 = vector.shape_cast %82 : vector<1x16xf32> to vector<1x16xf32>
    %84 = vector.broadcast %83 : vector<1x16xf32> to vector<2x16xf32>
    %c2_155 = arith.constant 2 : index
    %85 = memref.load %arg3[%c2_155] : memref<192xf32, #tpu.memory_space<smem>>
    %c18 = arith.constant 18 : index
    %86 = memref.load %arg3[%c18] : memref<192xf32, #tpu.memory_space<smem>>
    %87 = vector.broadcast %85 : f32 to vector<1x16xf32>
    %88 = vector.broadcast %86 : f32 to vector<1x16xf32>
    %89 = arith.select %70, %87, %88 : vector<1x16xi1>, vector<1x16xf32>
    %90 = vector.shape_cast %89 : vector<1x16xf32> to vector<1x16xf32>
    %91 = vector.broadcast %90 : vector<1x16xf32> to vector<2x16xf32>
    %c3_156 = arith.constant 3 : index
    %92 = memref.load %arg3[%c3_156] : memref<192xf32, #tpu.memory_space<smem>>
    %c19 = arith.constant 19 : index
    %93 = memref.load %arg3[%c19] : memref<192xf32, #tpu.memory_space<smem>>
    %94 = vector.broadcast %92 : f32 to vector<1x16xf32>
    %95 = vector.broadcast %93 : f32 to vector<1x16xf32>
    %96 = arith.select %70, %94, %95 : vector<1x16xi1>, vector<1x16xf32>
    %97 = vector.shape_cast %96 : vector<1x16xf32> to vector<1x16xf32>
    %98 = vector.broadcast %97 : vector<1x16xf32> to vector<2x16xf32>
    %c4_157 = arith.constant 4 : index
    %99 = memref.load %arg3[%c4_157] : memref<192xf32, #tpu.memory_space<smem>>
    %c20 = arith.constant 20 : index
    %100 = memref.load %arg3[%c20] : memref<192xf32, #tpu.memory_space<smem>>
    %101 = vector.broadcast %99 : f32 to vector<1x16xf32>
    %102 = vector.broadcast %100 : f32 to vector<1x16xf32>
    %103 = arith.select %70, %101, %102 : vector<1x16xi1>, vector<1x16xf32>
    %104 = vector.shape_cast %103 : vector<1x16xf32> to vector<1x16xf32>
    %105 = vector.broadcast %104 : vector<1x16xf32> to vector<2x16xf32>
    %c5_158 = arith.constant 5 : index
    %106 = memref.load %arg3[%c5_158] : memref<192xf32, #tpu.memory_space<smem>>
    %c21 = arith.constant 21 : index
    %107 = memref.load %arg3[%c21] : memref<192xf32, #tpu.memory_space<smem>>
    %108 = vector.broadcast %106 : f32 to vector<1x16xf32>
    %109 = vector.broadcast %107 : f32 to vector<1x16xf32>
    %110 = arith.select %70, %108, %109 : vector<1x16xi1>, vector<1x16xf32>
    %111 = vector.shape_cast %110 : vector<1x16xf32> to vector<1x16xf32>
    %112 = vector.broadcast %111 : vector<1x16xf32> to vector<2x16xf32>
    %c6_159 = arith.constant 6 : index
    %113 = memref.load %arg3[%c6_159] : memref<192xf32, #tpu.memory_space<smem>>
    %c22 = arith.constant 22 : index
    %114 = memref.load %arg3[%c22] : memref<192xf32, #tpu.memory_space<smem>>
    %115 = vector.broadcast %113 : f32 to vector<1x16xf32>
    %116 = vector.broadcast %114 : f32 to vector<1x16xf32>
    %117 = arith.select %70, %115, %116 : vector<1x16xi1>, vector<1x16xf32>
    %118 = vector.shape_cast %117 : vector<1x16xf32> to vector<1x16xf32>
    %119 = vector.broadcast %118 : vector<1x16xf32> to vector<2x16xf32>
    %c7_160 = arith.constant 7 : index
    %120 = memref.load %arg3[%c7_160] : memref<192xf32, #tpu.memory_space<smem>>
    %c23 = arith.constant 23 : index
    %121 = memref.load %arg3[%c23] : memref<192xf32, #tpu.memory_space<smem>>
    %122 = vector.broadcast %120 : f32 to vector<1x16xf32>
    %123 = vector.broadcast %121 : f32 to vector<1x16xf32>
    %124 = arith.select %70, %122, %123 : vector<1x16xi1>, vector<1x16xf32>
    %125 = vector.shape_cast %124 : vector<1x16xf32> to vector<1x16xf32>
    %126 = vector.broadcast %125 : vector<1x16xf32> to vector<2x16xf32>
    %c8 = arith.constant 8 : index
    %127 = memref.load %arg3[%c8] : memref<192xf32, #tpu.memory_space<smem>>
    %c24 = arith.constant 24 : index
    %128 = memref.load %arg3[%c24] : memref<192xf32, #tpu.memory_space<smem>>
    %129 = vector.broadcast %127 : f32 to vector<1x16xf32>
    %130 = vector.broadcast %128 : f32 to vector<1x16xf32>
    %131 = arith.select %70, %129, %130 : vector<1x16xi1>, vector<1x16xf32>
    %132 = vector.shape_cast %131 : vector<1x16xf32> to vector<1x16xf32>
    %133 = vector.broadcast %132 : vector<1x16xf32> to vector<2x16xf32>
    %c9 = arith.constant 9 : index
    %134 = memref.load %arg3[%c9] : memref<192xf32, #tpu.memory_space<smem>>
    %c25 = arith.constant 25 : index
    %135 = memref.load %arg3[%c25] : memref<192xf32, #tpu.memory_space<smem>>
    %136 = vector.broadcast %134 : f32 to vector<1x16xf32>
    %137 = vector.broadcast %135 : f32 to vector<1x16xf32>
    %138 = arith.select %70, %136, %137 : vector<1x16xi1>, vector<1x16xf32>
    %139 = vector.shape_cast %138 : vector<1x16xf32> to vector<1x16xf32>
    %140 = vector.broadcast %139 : vector<1x16xf32> to vector<2x16xf32>
    %c10 = arith.constant 10 : index
    %141 = memref.load %arg3[%c10] : memref<192xf32, #tpu.memory_space<smem>>
    %c26 = arith.constant 26 : index
    %142 = memref.load %arg3[%c26] : memref<192xf32, #tpu.memory_space<smem>>
    %143 = vector.broadcast %141 : f32 to vector<1x16xf32>
    %144 = vector.broadcast %142 : f32 to vector<1x16xf32>
    %145 = arith.select %70, %143, %144 : vector<1x16xi1>, vector<1x16xf32>
    %146 = vector.shape_cast %145 : vector<1x16xf32> to vector<1x16xf32>
    %147 = vector.broadcast %146 : vector<1x16xf32> to vector<2x16xf32>
    %c11 = arith.constant 11 : index
    %148 = memref.load %arg3[%c11] : memref<192xf32, #tpu.memory_space<smem>>
    %c27 = arith.constant 27 : index
    %149 = memref.load %arg3[%c27] : memref<192xf32, #tpu.memory_space<smem>>
    %150 = vector.broadcast %148 : f32 to vector<1x16xf32>
    %151 = vector.broadcast %149 : f32 to vector<1x16xf32>
    %152 = arith.select %70, %150, %151 : vector<1x16xi1>, vector<1x16xf32>
    %153 = vector.shape_cast %152 : vector<1x16xf32> to vector<1x16xf32>
    %154 = vector.broadcast %153 : vector<1x16xf32> to vector<2x16xf32>
    %c12 = arith.constant 12 : index
    %155 = memref.load %arg3[%c12] : memref<192xf32, #tpu.memory_space<smem>>
    %c28 = arith.constant 28 : index
    %156 = memref.load %arg3[%c28] : memref<192xf32, #tpu.memory_space<smem>>
    %157 = vector.broadcast %155 : f32 to vector<1x16xf32>
    %158 = vector.broadcast %156 : f32 to vector<1x16xf32>
    %159 = arith.select %70, %157, %158 : vector<1x16xi1>, vector<1x16xf32>
    %160 = vector.shape_cast %159 : vector<1x16xf32> to vector<1x16xf32>
    %161 = vector.broadcast %160 : vector<1x16xf32> to vector<2x16xf32>
    %c13 = arith.constant 13 : index
    %162 = memref.load %arg3[%c13] : memref<192xf32, #tpu.memory_space<smem>>
    %c29 = arith.constant 29 : index
    %163 = memref.load %arg3[%c29] : memref<192xf32, #tpu.memory_space<smem>>
    %164 = vector.broadcast %162 : f32 to vector<1x16xf32>
    %165 = vector.broadcast %163 : f32 to vector<1x16xf32>
    %166 = arith.select %70, %164, %165 : vector<1x16xi1>, vector<1x16xf32>
    %167 = vector.shape_cast %166 : vector<1x16xf32> to vector<1x16xf32>
    %168 = vector.broadcast %167 : vector<1x16xf32> to vector<2x16xf32>
    %c14 = arith.constant 14 : index
    %169 = memref.load %arg3[%c14] : memref<192xf32, #tpu.memory_space<smem>>
    %c30 = arith.constant 30 : index
    %170 = memref.load %arg3[%c30] : memref<192xf32, #tpu.memory_space<smem>>
    %171 = vector.broadcast %169 : f32 to vector<1x16xf32>
    %172 = vector.broadcast %170 : f32 to vector<1x16xf32>
    %173 = arith.select %70, %171, %172 : vector<1x16xi1>, vector<1x16xf32>
    %174 = vector.shape_cast %173 : vector<1x16xf32> to vector<1x16xf32>
    %175 = vector.broadcast %174 : vector<1x16xf32> to vector<2x16xf32>
    %c15 = arith.constant 15 : index
    %176 = memref.load %arg3[%c15] : memref<192xf32, #tpu.memory_space<smem>>
    %c31 = arith.constant 31 : index
    %177 = memref.load %arg3[%c31] : memref<192xf32, #tpu.memory_space<smem>>
    %178 = vector.broadcast %176 : f32 to vector<1x16xf32>
    %179 = vector.broadcast %177 : f32 to vector<1x16xf32>
    %180 = arith.select %70, %178, %179 : vector<1x16xi1>, vector<1x16xf32>
    %181 = vector.shape_cast %180 : vector<1x16xf32> to vector<1x16xf32>
    %182 = vector.broadcast %181 : vector<1x16xf32> to vector<2x16xf32>
    %c32 = arith.constant 32 : index
    %183 = memref.load %arg3[%c32] : memref<192xf32, #tpu.memory_space<smem>>
    %c48 = arith.constant 48 : index
    %184 = memref.load %arg3[%c48] : memref<192xf32, #tpu.memory_space<smem>>
    %185 = vector.broadcast %183 : f32 to vector<1x16xf32>
    %186 = vector.broadcast %184 : f32 to vector<1x16xf32>
    %187 = arith.select %70, %185, %186 : vector<1x16xi1>, vector<1x16xf32>
    %188 = vector.shape_cast %187 : vector<1x16xf32> to vector<1x16xf32>
    %189 = vector.broadcast %188 : vector<1x16xf32> to vector<2x16xf32>
    %c33 = arith.constant 33 : index
    %190 = memref.load %arg3[%c33] : memref<192xf32, #tpu.memory_space<smem>>
    %c49 = arith.constant 49 : index
    %191 = memref.load %arg3[%c49] : memref<192xf32, #tpu.memory_space<smem>>
    %192 = vector.broadcast %190 : f32 to vector<1x16xf32>
    %193 = vector.broadcast %191 : f32 to vector<1x16xf32>
    %194 = arith.select %70, %192, %193 : vector<1x16xi1>, vector<1x16xf32>
    %195 = vector.shape_cast %194 : vector<1x16xf32> to vector<1x16xf32>
    %196 = vector.broadcast %195 : vector<1x16xf32> to vector<2x16xf32>
    %c34 = arith.constant 34 : index
    %197 = memref.load %arg3[%c34] : memref<192xf32, #tpu.memory_space<smem>>
    %c50 = arith.constant 50 : index
    %198 = memref.load %arg3[%c50] : memref<192xf32, #tpu.memory_space<smem>>
    %199 = vector.broadcast %197 : f32 to vector<1x16xf32>
    %200 = vector.broadcast %198 : f32 to vector<1x16xf32>
    %201 = arith.select %70, %199, %200 : vector<1x16xi1>, vector<1x16xf32>
    %202 = vector.shape_cast %201 : vector<1x16xf32> to vector<1x16xf32>
    %203 = vector.broadcast %202 : vector<1x16xf32> to vector<2x16xf32>
    %c35 = arith.constant 35 : index
    %204 = memref.load %arg3[%c35] : memref<192xf32, #tpu.memory_space<smem>>
    %c51 = arith.constant 51 : index
    %205 = memref.load %arg3[%c51] : memref<192xf32, #tpu.memory_space<smem>>
    %206 = vector.broadcast %204 : f32 to vector<1x16xf32>
    %207 = vector.broadcast %205 : f32 to vector<1x16xf32>
    %208 = arith.select %70, %206, %207 : vector<1x16xi1>, vector<1x16xf32>
    %209 = vector.shape_cast %208 : vector<1x16xf32> to vector<1x16xf32>
    %210 = vector.broadcast %209 : vector<1x16xf32> to vector<2x16xf32>
    %c36 = arith.constant 36 : index
    %211 = memref.load %arg3[%c36] : memref<192xf32, #tpu.memory_space<smem>>
    %c52 = arith.constant 52 : index
    %212 = memref.load %arg3[%c52] : memref<192xf32, #tpu.memory_space<smem>>
    %213 = vector.broadcast %211 : f32 to vector<1x16xf32>
    %214 = vector.broadcast %212 : f32 to vector<1x16xf32>
    %215 = arith.select %70, %213, %214 : vector<1x16xi1>, vector<1x16xf32>
    %216 = vector.shape_cast %215 : vector<1x16xf32> to vector<1x16xf32>
    %217 = vector.broadcast %216 : vector<1x16xf32> to vector<2x16xf32>
    %c37 = arith.constant 37 : index
    %218 = memref.load %arg3[%c37] : memref<192xf32, #tpu.memory_space<smem>>
    %c53 = arith.constant 53 : index
    %219 = memref.load %arg3[%c53] : memref<192xf32, #tpu.memory_space<smem>>
    %220 = vector.broadcast %218 : f32 to vector<1x16xf32>
    %221 = vector.broadcast %219 : f32 to vector<1x16xf32>
    %222 = arith.select %70, %220, %221 : vector<1x16xi1>, vector<1x16xf32>
    %223 = vector.shape_cast %222 : vector<1x16xf32> to vector<1x16xf32>
    %224 = vector.broadcast %223 : vector<1x16xf32> to vector<2x16xf32>
    %c38 = arith.constant 38 : index
    %225 = memref.load %arg3[%c38] : memref<192xf32, #tpu.memory_space<smem>>
    %c54 = arith.constant 54 : index
    %226 = memref.load %arg3[%c54] : memref<192xf32, #tpu.memory_space<smem>>
    %227 = vector.broadcast %225 : f32 to vector<1x16xf32>
    %228 = vector.broadcast %226 : f32 to vector<1x16xf32>
    %229 = arith.select %70, %227, %228 : vector<1x16xi1>, vector<1x16xf32>
    %230 = vector.shape_cast %229 : vector<1x16xf32> to vector<1x16xf32>
    %231 = vector.broadcast %230 : vector<1x16xf32> to vector<2x16xf32>
    %c39 = arith.constant 39 : index
    %232 = memref.load %arg3[%c39] : memref<192xf32, #tpu.memory_space<smem>>
    %c55 = arith.constant 55 : index
    %233 = memref.load %arg3[%c55] : memref<192xf32, #tpu.memory_space<smem>>
    %234 = vector.broadcast %232 : f32 to vector<1x16xf32>
    %235 = vector.broadcast %233 : f32 to vector<1x16xf32>
    %236 = arith.select %70, %234, %235 : vector<1x16xi1>, vector<1x16xf32>
    %237 = vector.shape_cast %236 : vector<1x16xf32> to vector<1x16xf32>
    %238 = vector.broadcast %237 : vector<1x16xf32> to vector<2x16xf32>
    %c40 = arith.constant 40 : index
    %239 = memref.load %arg3[%c40] : memref<192xf32, #tpu.memory_space<smem>>
    %c56 = arith.constant 56 : index
    %240 = memref.load %arg3[%c56] : memref<192xf32, #tpu.memory_space<smem>>
    %241 = vector.broadcast %239 : f32 to vector<1x16xf32>
    %242 = vector.broadcast %240 : f32 to vector<1x16xf32>
    %243 = arith.select %70, %241, %242 : vector<1x16xi1>, vector<1x16xf32>
    %244 = vector.shape_cast %243 : vector<1x16xf32> to vector<1x16xf32>
    %245 = vector.broadcast %244 : vector<1x16xf32> to vector<2x16xf32>
    %c41 = arith.constant 41 : index
    %246 = memref.load %arg3[%c41] : memref<192xf32, #tpu.memory_space<smem>>
    %c57 = arith.constant 57 : index
    %247 = memref.load %arg3[%c57] : memref<192xf32, #tpu.memory_space<smem>>
    %248 = vector.broadcast %246 : f32 to vector<1x16xf32>
    %249 = vector.broadcast %247 : f32 to vector<1x16xf32>
    %250 = arith.select %70, %248, %249 : vector<1x16xi1>, vector<1x16xf32>
    %251 = vector.shape_cast %250 : vector<1x16xf32> to vector<1x16xf32>
    %252 = vector.broadcast %251 : vector<1x16xf32> to vector<2x16xf32>
    %c42 = arith.constant 42 : index
    %253 = memref.load %arg3[%c42] : memref<192xf32, #tpu.memory_space<smem>>
    %c58 = arith.constant 58 : index
    %254 = memref.load %arg3[%c58] : memref<192xf32, #tpu.memory_space<smem>>
    %255 = vector.broadcast %253 : f32 to vector<1x16xf32>
    %256 = vector.broadcast %254 : f32 to vector<1x16xf32>
    %257 = arith.select %70, %255, %256 : vector<1x16xi1>, vector<1x16xf32>
    %258 = vector.shape_cast %257 : vector<1x16xf32> to vector<1x16xf32>
    %259 = vector.broadcast %258 : vector<1x16xf32> to vector<2x16xf32>
    %c43 = arith.constant 43 : index
    %260 = memref.load %arg3[%c43] : memref<192xf32, #tpu.memory_space<smem>>
    %c59 = arith.constant 59 : index
    %261 = memref.load %arg3[%c59] : memref<192xf32, #tpu.memory_space<smem>>
    %262 = vector.broadcast %260 : f32 to vector<1x16xf32>
    %263 = vector.broadcast %261 : f32 to vector<1x16xf32>
    %264 = arith.select %70, %262, %263 : vector<1x16xi1>, vector<1x16xf32>
    %265 = vector.shape_cast %264 : vector<1x16xf32> to vector<1x16xf32>
    %266 = vector.broadcast %265 : vector<1x16xf32> to vector<2x16xf32>
    %c44 = arith.constant 44 : index
    %267 = memref.load %arg3[%c44] : memref<192xf32, #tpu.memory_space<smem>>
    %c60 = arith.constant 60 : index
    %268 = memref.load %arg3[%c60] : memref<192xf32, #tpu.memory_space<smem>>
    %269 = vector.broadcast %267 : f32 to vector<1x16xf32>
    %270 = vector.broadcast %268 : f32 to vector<1x16xf32>
    %271 = arith.select %70, %269, %270 : vector<1x16xi1>, vector<1x16xf32>
    %272 = vector.shape_cast %271 : vector<1x16xf32> to vector<1x16xf32>
    %273 = vector.broadcast %272 : vector<1x16xf32> to vector<2x16xf32>
    %c45 = arith.constant 45 : index
    %274 = memref.load %arg3[%c45] : memref<192xf32, #tpu.memory_space<smem>>
    %c61 = arith.constant 61 : index
    %275 = memref.load %arg3[%c61] : memref<192xf32, #tpu.memory_space<smem>>
    %276 = vector.broadcast %274 : f32 to vector<1x16xf32>
    %277 = vector.broadcast %275 : f32 to vector<1x16xf32>
    %278 = arith.select %70, %276, %277 : vector<1x16xi1>, vector<1x16xf32>
    %279 = vector.shape_cast %278 : vector<1x16xf32> to vector<1x16xf32>
    %280 = vector.broadcast %279 : vector<1x16xf32> to vector<2x16xf32>
    %c46 = arith.constant 46 : index
    %281 = memref.load %arg3[%c46] : memref<192xf32, #tpu.memory_space<smem>>
    %c62 = arith.constant 62 : index
    %282 = memref.load %arg3[%c62] : memref<192xf32, #tpu.memory_space<smem>>
    %283 = vector.broadcast %281 : f32 to vector<1x16xf32>
    %284 = vector.broadcast %282 : f32 to vector<1x16xf32>
    %285 = arith.select %70, %283, %284 : vector<1x16xi1>, vector<1x16xf32>
    %286 = vector.shape_cast %285 : vector<1x16xf32> to vector<1x16xf32>
    %287 = vector.broadcast %286 : vector<1x16xf32> to vector<2x16xf32>
    %c47 = arith.constant 47 : index
    %288 = memref.load %arg3[%c47] : memref<192xf32, #tpu.memory_space<smem>>
    %c63 = arith.constant 63 : index
    %289 = memref.load %arg3[%c63] : memref<192xf32, #tpu.memory_space<smem>>
    %290 = vector.broadcast %288 : f32 to vector<1x16xf32>
    %291 = vector.broadcast %289 : f32 to vector<1x16xf32>
    %292 = arith.select %70, %290, %291 : vector<1x16xi1>, vector<1x16xf32>
    %293 = vector.shape_cast %292 : vector<1x16xf32> to vector<1x16xf32>
    %294 = vector.broadcast %293 : vector<1x16xf32> to vector<2x16xf32>
    %295 = arith.mulf %77, %2 : vector<2x16xf32>
    %296 = arith.mulf %84, %4 : vector<2x16xf32>
    %297 = arith.mulf %91, %6 : vector<2x16xf32>
    %298 = arith.mulf %98, %8 : vector<2x16xf32>
    %299 = arith.mulf %189, %10 : vector<2x16xf32>
    %300 = arith.mulf %196, %12 : vector<2x16xf32>
    %301 = arith.mulf %203, %14 : vector<2x16xf32>
    %302 = arith.mulf %210, %16 : vector<2x16xf32>
    %303 = arith.addf %295, %296 : vector<2x16xf32>
    %304 = arith.addf %297, %298 : vector<2x16xf32>
    %305 = arith.addf %299, %300 : vector<2x16xf32>
    %306 = arith.addf %301, %302 : vector<2x16xf32>
    %307 = arith.addf %303, %304 : vector<2x16xf32>
    %308 = arith.addf %305, %306 : vector<2x16xf32>
    %309 = arith.addf %307, %308 : vector<2x16xf32>
    %c15_i32 = arith.constant 15 : i32
    %310 = tpu.dynamic_rotate %309 by %c15_i32 dim 1 : vector<2x16xf32>, i32 -> vector<2x16xf32>
    %311 = arith.addf %309, %310 : vector<2x16xf32>
    %c0_161 = arith.constant 0 : index
    %312 = memref.load %arg4[%c0_161] : memref<12xf32, #tpu.memory_space<smem>>
    %313 = vector.broadcast %312 : f32 to vector<2x16xf32>
    %314 = arith.addf %311, %313 : vector<2x16xf32>
    %cst = arith.constant 0.000000e+00 : f32
    %315 = vector.broadcast %cst : f32 to vector<2x16xf32>
    %316 = arith.cmpf ogt, %314, %315 : vector<2x16xf32>
    %c0_162 = arith.constant 0 : index
    %317 = memref.load %arg5[%c0_162] : memref<12xf32, #tpu.memory_space<smem>>
    %318 = vector.broadcast %317 : f32 to vector<2x16xf32>
    %319 = arith.mulf %318, %314 : vector<2x16xf32>
    %320 = arith.select %316, %314, %319 : vector<2x16xi1>, vector<2x16xf32>
    %321 = arith.mulf %105, %2 : vector<2x16xf32>
    %322 = arith.mulf %112, %4 : vector<2x16xf32>
    %323 = arith.mulf %119, %6 : vector<2x16xf32>
    %324 = arith.mulf %126, %8 : vector<2x16xf32>
    %325 = arith.mulf %217, %10 : vector<2x16xf32>
    %326 = arith.mulf %224, %12 : vector<2x16xf32>
    %327 = arith.mulf %231, %14 : vector<2x16xf32>
    %328 = arith.mulf %238, %16 : vector<2x16xf32>
    %329 = arith.addf %321, %322 : vector<2x16xf32>
    %330 = arith.addf %323, %324 : vector<2x16xf32>
    %331 = arith.addf %325, %326 : vector<2x16xf32>
    %332 = arith.addf %327, %328 : vector<2x16xf32>
    %333 = arith.addf %329, %330 : vector<2x16xf32>
    %334 = arith.addf %331, %332 : vector<2x16xf32>
    %335 = arith.addf %333, %334 : vector<2x16xf32>
    %c15_i32_163 = arith.constant 15 : i32
    %336 = tpu.dynamic_rotate %335 by %c15_i32_163 dim 1 : vector<2x16xf32>, i32 -> vector<2x16xf32>
    %337 = arith.addf %335, %336 : vector<2x16xf32>
    %c1_164 = arith.constant 1 : index
    %338 = memref.load %arg4[%c1_164] : memref<12xf32, #tpu.memory_space<smem>>
    %339 = vector.broadcast %338 : f32 to vector<2x16xf32>
    %340 = arith.addf %337, %339 : vector<2x16xf32>
    %cst_165 = arith.constant 0.000000e+00 : f32
    %341 = vector.broadcast %cst_165 : f32 to vector<2x16xf32>
    %342 = arith.cmpf ogt, %340, %341 : vector<2x16xf32>
    %c1_166 = arith.constant 1 : index
    %343 = memref.load %arg5[%c1_166] : memref<12xf32, #tpu.memory_space<smem>>
    %344 = vector.broadcast %343 : f32 to vector<2x16xf32>
    %345 = arith.mulf %344, %340 : vector<2x16xf32>
    %346 = arith.select %342, %340, %345 : vector<2x16xi1>, vector<2x16xf32>
    %347 = arith.mulf %133, %2 : vector<2x16xf32>
    %348 = arith.mulf %140, %4 : vector<2x16xf32>
    %349 = arith.mulf %147, %6 : vector<2x16xf32>
    %350 = arith.mulf %154, %8 : vector<2x16xf32>
    %351 = arith.mulf %245, %10 : vector<2x16xf32>
    %352 = arith.mulf %252, %12 : vector<2x16xf32>
    %353 = arith.mulf %259, %14 : vector<2x16xf32>
    %354 = arith.mulf %266, %16 : vector<2x16xf32>
    %355 = arith.addf %347, %348 : vector<2x16xf32>
    %356 = arith.addf %349, %350 : vector<2x16xf32>
    %357 = arith.addf %351, %352 : vector<2x16xf32>
    %358 = arith.addf %353, %354 : vector<2x16xf32>
    %359 = arith.addf %355, %356 : vector<2x16xf32>
    %360 = arith.addf %357, %358 : vector<2x16xf32>
    %361 = arith.addf %359, %360 : vector<2x16xf32>
    %c15_i32_167 = arith.constant 15 : i32
    %362 = tpu.dynamic_rotate %361 by %c15_i32_167 dim 1 : vector<2x16xf32>, i32 -> vector<2x16xf32>
    %363 = arith.addf %361, %362 : vector<2x16xf32>
    %c2_168 = arith.constant 2 : index
    %364 = memref.load %arg4[%c2_168] : memref<12xf32, #tpu.memory_space<smem>>
    %365 = vector.broadcast %364 : f32 to vector<2x16xf32>
    %366 = arith.addf %363, %365 : vector<2x16xf32>
    %cst_169 = arith.constant 0.000000e+00 : f32
    %367 = vector.broadcast %cst_169 : f32 to vector<2x16xf32>
    %368 = arith.cmpf ogt, %366, %367 : vector<2x16xf32>
    %c2_170 = arith.constant 2 : index
    %369 = memref.load %arg5[%c2_170] : memref<12xf32, #tpu.memory_space<smem>>
    %370 = vector.broadcast %369 : f32 to vector<2x16xf32>
    %371 = arith.mulf %370, %366 : vector<2x16xf32>
    %372 = arith.select %368, %366, %371 : vector<2x16xi1>, vector<2x16xf32>
    %373 = arith.mulf %161, %2 : vector<2x16xf32>
    %374 = arith.mulf %168, %4 : vector<2x16xf32>
    %375 = arith.mulf %175, %6 : vector<2x16xf32>
    %376 = arith.mulf %182, %8 : vector<2x16xf32>
    %377 = arith.mulf %273, %10 : vector<2x16xf32>
    %378 = arith.mulf %280, %12 : vector<2x16xf32>
    %379 = arith.mulf %287, %14 : vector<2x16xf32>
    %380 = arith.mulf %294, %16 : vector<2x16xf32>
    %381 = arith.addf %373, %374 : vector<2x16xf32>
    %382 = arith.addf %375, %376 : vector<2x16xf32>
    %383 = arith.addf %377, %378 : vector<2x16xf32>
    %384 = arith.addf %379, %380 : vector<2x16xf32>
    %385 = arith.addf %381, %382 : vector<2x16xf32>
    %386 = arith.addf %383, %384 : vector<2x16xf32>
    %387 = arith.addf %385, %386 : vector<2x16xf32>
    %c15_i32_171 = arith.constant 15 : i32
    %388 = tpu.dynamic_rotate %387 by %c15_i32_171 dim 1 : vector<2x16xf32>, i32 -> vector<2x16xf32>
    %389 = arith.addf %387, %388 : vector<2x16xf32>
    %c3_172 = arith.constant 3 : index
    %390 = memref.load %arg4[%c3_172] : memref<12xf32, #tpu.memory_space<smem>>
    %391 = vector.broadcast %390 : f32 to vector<2x16xf32>
    %392 = arith.addf %389, %391 : vector<2x16xf32>
    %cst_173 = arith.constant 0.000000e+00 : f32
    %393 = vector.broadcast %cst_173 : f32 to vector<2x16xf32>
    %394 = arith.cmpf ogt, %392, %393 : vector<2x16xf32>
    %c3_174 = arith.constant 3 : index
    %395 = memref.load %arg5[%c3_174] : memref<12xf32, #tpu.memory_space<smem>>
    %396 = vector.broadcast %395 : f32 to vector<2x16xf32>
    %397 = arith.mulf %396, %392 : vector<2x16xf32>
    %398 = arith.select %394, %392, %397 : vector<2x16xi1>, vector<2x16xf32>
    %399 = arith.mulf %77, %18 : vector<2x16xf32>
    %400 = arith.mulf %84, %20 : vector<2x16xf32>
    %401 = arith.mulf %91, %22 : vector<2x16xf32>
    %402 = arith.mulf %98, %24 : vector<2x16xf32>
    %403 = arith.mulf %189, %26 : vector<2x16xf32>
    %404 = arith.mulf %196, %28 : vector<2x16xf32>
    %405 = arith.mulf %203, %30 : vector<2x16xf32>
    %406 = arith.mulf %210, %32 : vector<2x16xf32>
    %407 = arith.addf %399, %400 : vector<2x16xf32>
    %408 = arith.addf %401, %402 : vector<2x16xf32>
    %409 = arith.addf %403, %404 : vector<2x16xf32>
    %410 = arith.addf %405, %406 : vector<2x16xf32>
    %411 = arith.addf %407, %408 : vector<2x16xf32>
    %412 = arith.addf %409, %410 : vector<2x16xf32>
    %413 = arith.addf %411, %412 : vector<2x16xf32>
    %c15_i32_175 = arith.constant 15 : i32
    %414 = tpu.dynamic_rotate %413 by %c15_i32_175 dim 1 : vector<2x16xf32>, i32 -> vector<2x16xf32>
    %415 = arith.addf %413, %414 : vector<2x16xf32>
    %c0_176 = arith.constant 0 : index
    %416 = memref.load %arg4[%c0_176] : memref<12xf32, #tpu.memory_space<smem>>
    %417 = vector.broadcast %416 : f32 to vector<2x16xf32>
    %418 = arith.addf %415, %417 : vector<2x16xf32>
    %cst_177 = arith.constant 0.000000e+00 : f32
    %419 = vector.broadcast %cst_177 : f32 to vector<2x16xf32>
    %420 = arith.cmpf ogt, %418, %419 : vector<2x16xf32>
    %c0_178 = arith.constant 0 : index
    %421 = memref.load %arg5[%c0_178] : memref<12xf32, #tpu.memory_space<smem>>
    %422 = vector.broadcast %421 : f32 to vector<2x16xf32>
    %423 = arith.mulf %422, %418 : vector<2x16xf32>
    %424 = arith.select %420, %418, %423 : vector<2x16xi1>, vector<2x16xf32>
    %425 = arith.mulf %105, %18 : vector<2x16xf32>
    %426 = arith.mulf %112, %20 : vector<2x16xf32>
    %427 = arith.mulf %119, %22 : vector<2x16xf32>
    %428 = arith.mulf %126, %24 : vector<2x16xf32>
    %429 = arith.mulf %217, %26 : vector<2x16xf32>
    %430 = arith.mulf %224, %28 : vector<2x16xf32>
    %431 = arith.mulf %231, %30 : vector<2x16xf32>
    %432 = arith.mulf %238, %32 : vector<2x16xf32>
    %433 = arith.addf %425, %426 : vector<2x16xf32>
    %434 = arith.addf %427, %428 : vector<2x16xf32>
    %435 = arith.addf %429, %430 : vector<2x16xf32>
    %436 = arith.addf %431, %432 : vector<2x16xf32>
    %437 = arith.addf %433, %434 : vector<2x16xf32>
    %438 = arith.addf %435, %436 : vector<2x16xf32>
    %439 = arith.addf %437, %438 : vector<2x16xf32>
    %c15_i32_179 = arith.constant 15 : i32
    %440 = tpu.dynamic_rotate %439 by %c15_i32_179 dim 1 : vector<2x16xf32>, i32 -> vector<2x16xf32>
    %441 = arith.addf %439, %440 : vector<2x16xf32>
    %c1_180 = arith.constant 1 : index
    %442 = memref.load %arg4[%c1_180] : memref<12xf32, #tpu.memory_space<smem>>
    %443 = vector.broadcast %442 : f32 to vector<2x16xf32>
    %444 = arith.addf %441, %443 : vector<2x16xf32>
    %cst_181 = arith.constant 0.000000e+00 : f32
    %445 = vector.broadcast %cst_181 : f32 to vector<2x16xf32>
    %446 = arith.cmpf ogt, %444, %445 : vector<2x16xf32>
    %c1_182 = arith.constant 1 : index
    %447 = memref.load %arg5[%c1_182] : memref<12xf32, #tpu.memory_space<smem>>
    %448 = vector.broadcast %447 : f32 to vector<2x16xf32>
    %449 = arith.mulf %448, %444 : vector<2x16xf32>
    %450 = arith.select %446, %444, %449 : vector<2x16xi1>, vector<2x16xf32>
    %451 = arith.mulf %133, %18 : vector<2x16xf32>
    %452 = arith.mulf %140, %20 : vector<2x16xf32>
    %453 = arith.mulf %147, %22 : vector<2x16xf32>
    %454 = arith.mulf %154, %24 : vector<2x16xf32>
    %455 = arith.mulf %245, %26 : vector<2x16xf32>
    %456 = arith.mulf %252, %28 : vector<2x16xf32>
    %457 = arith.mulf %259, %30 : vector<2x16xf32>
    %458 = arith.mulf %266, %32 : vector<2x16xf32>
    %459 = arith.addf %451, %452 : vector<2x16xf32>
    %460 = arith.addf %453, %454 : vector<2x16xf32>
    %461 = arith.addf %455, %456 : vector<2x16xf32>
    %462 = arith.addf %457, %458 : vector<2x16xf32>
    %463 = arith.addf %459, %460 : vector<2x16xf32>
    %464 = arith.addf %461, %462 : vector<2x16xf32>
    %465 = arith.addf %463, %464 : vector<2x16xf32>
    %c15_i32_183 = arith.constant 15 : i32
    %466 = tpu.dynamic_rotate %465 by %c15_i32_183 dim 1 : vector<2x16xf32>, i32 -> vector<2x16xf32>
    %467 = arith.addf %465, %466 : vector<2x16xf32>
    %c2_184 = arith.constant 2 : index
    %468 = memref.load %arg4[%c2_184] : memref<12xf32, #tpu.memory_space<smem>>
    %469 = vector.broadcast %468 : f32 to vector<2x16xf32>
    %470 = arith.addf %467, %469 : vector<2x16xf32>
    %cst_185 = arith.constant 0.000000e+00 : f32
    %471 = vector.broadcast %cst_185 : f32 to vector<2x16xf32>
    %472 = arith.cmpf ogt, %470, %471 : vector<2x16xf32>
    %c2_186 = arith.constant 2 : index
    %473 = memref.load %arg5[%c2_186] : memref<12xf32, #tpu.memory_space<smem>>
    %474 = vector.broadcast %473 : f32 to vector<2x16xf32>
    %475 = arith.mulf %474, %470 : vector<2x16xf32>
    %476 = arith.select %472, %470, %475 : vector<2x16xi1>, vector<2x16xf32>
    %477 = arith.mulf %161, %18 : vector<2x16xf32>
    %478 = arith.mulf %168, %20 : vector<2x16xf32>
    %479 = arith.mulf %175, %22 : vector<2x16xf32>
    %480 = arith.mulf %182, %24 : vector<2x16xf32>
    %481 = arith.mulf %273, %26 : vector<2x16xf32>
    %482 = arith.mulf %280, %28 : vector<2x16xf32>
    %483 = arith.mulf %287, %30 : vector<2x16xf32>
    %484 = arith.mulf %294, %32 : vector<2x16xf32>
    %485 = arith.addf %477, %478 : vector<2x16xf32>
    %486 = arith.addf %479, %480 : vector<2x16xf32>
    %487 = arith.addf %481, %482 : vector<2x16xf32>
    %488 = arith.addf %483, %484 : vector<2x16xf32>
    %489 = arith.addf %485, %486 : vector<2x16xf32>
    %490 = arith.addf %487, %488 : vector<2x16xf32>
    %491 = arith.addf %489, %490 : vector<2x16xf32>
    %c15_i32_187 = arith.constant 15 : i32
    %492 = tpu.dynamic_rotate %491 by %c15_i32_187 dim 1 : vector<2x16xf32>, i32 -> vector<2x16xf32>
    %493 = arith.addf %491, %492 : vector<2x16xf32>
    %c3_188 = arith.constant 3 : index
    %494 = memref.load %arg4[%c3_188] : memref<12xf32, #tpu.memory_space<smem>>
    %495 = vector.broadcast %494 : f32 to vector<2x16xf32>
    %496 = arith.addf %493, %495 : vector<2x16xf32>
    %cst_189 = arith.constant 0.000000e+00 : f32
    %497 = vector.broadcast %cst_189 : f32 to vector<2x16xf32>
    %498 = arith.cmpf ogt, %496, %497 : vector<2x16xf32>
    %c3_190 = arith.constant 3 : index
    %499 = memref.load %arg5[%c3_190] : memref<12xf32, #tpu.memory_space<smem>>
    %500 = vector.broadcast %499 : f32 to vector<2x16xf32>
    %501 = arith.mulf %500, %496 : vector<2x16xf32>
    %502 = arith.select %498, %496, %501 : vector<2x16xi1>, vector<2x16xf32>
    %503 = arith.mulf %77, %34 : vector<2x16xf32>
    %504 = arith.mulf %84, %36 : vector<2x16xf32>
    %505 = arith.mulf %91, %38 : vector<2x16xf32>
    %506 = arith.mulf %98, %40 : vector<2x16xf32>
    %507 = arith.mulf %189, %42 : vector<2x16xf32>
    %508 = arith.mulf %196, %44 : vector<2x16xf32>
    %509 = arith.mulf %203, %46 : vector<2x16xf32>
    %510 = arith.mulf %210, %48 : vector<2x16xf32>
    %511 = arith.addf %503, %504 : vector<2x16xf32>
    %512 = arith.addf %505, %506 : vector<2x16xf32>
    %513 = arith.addf %507, %508 : vector<2x16xf32>
    %514 = arith.addf %509, %510 : vector<2x16xf32>
    %515 = arith.addf %511, %512 : vector<2x16xf32>
    %516 = arith.addf %513, %514 : vector<2x16xf32>
    %517 = arith.addf %515, %516 : vector<2x16xf32>
    %c15_i32_191 = arith.constant 15 : i32
    %518 = tpu.dynamic_rotate %517 by %c15_i32_191 dim 1 : vector<2x16xf32>, i32 -> vector<2x16xf32>
    %519 = arith.addf %517, %518 : vector<2x16xf32>
    %c0_192 = arith.constant 0 : index
    %520 = memref.load %arg4[%c0_192] : memref<12xf32, #tpu.memory_space<smem>>
    %521 = vector.broadcast %520 : f32 to vector<2x16xf32>
    %522 = arith.addf %519, %521 : vector<2x16xf32>
    %cst_193 = arith.constant 0.000000e+00 : f32
    %523 = vector.broadcast %cst_193 : f32 to vector<2x16xf32>
    %524 = arith.cmpf ogt, %522, %523 : vector<2x16xf32>
    %c0_194 = arith.constant 0 : index
    %525 = memref.load %arg5[%c0_194] : memref<12xf32, #tpu.memory_space<smem>>
    %526 = vector.broadcast %525 : f32 to vector<2x16xf32>
    %527 = arith.mulf %526, %522 : vector<2x16xf32>
    %528 = arith.select %524, %522, %527 : vector<2x16xi1>, vector<2x16xf32>
    %529 = arith.mulf %105, %34 : vector<2x16xf32>
    %530 = arith.mulf %112, %36 : vector<2x16xf32>
    %531 = arith.mulf %119, %38 : vector<2x16xf32>
    %532 = arith.mulf %126, %40 : vector<2x16xf32>
    %533 = arith.mulf %217, %42 : vector<2x16xf32>
    %534 = arith.mulf %224, %44 : vector<2x16xf32>
    %535 = arith.mulf %231, %46 : vector<2x16xf32>
    %536 = arith.mulf %238, %48 : vector<2x16xf32>
    %537 = arith.addf %529, %530 : vector<2x16xf32>
    %538 = arith.addf %531, %532 : vector<2x16xf32>
    %539 = arith.addf %533, %534 : vector<2x16xf32>
    %540 = arith.addf %535, %536 : vector<2x16xf32>
    %541 = arith.addf %537, %538 : vector<2x16xf32>
    %542 = arith.addf %539, %540 : vector<2x16xf32>
    %543 = arith.addf %541, %542 : vector<2x16xf32>
    %c15_i32_195 = arith.constant 15 : i32
    %544 = tpu.dynamic_rotate %543 by %c15_i32_195 dim 1 : vector<2x16xf32>, i32 -> vector<2x16xf32>
    %545 = arith.addf %543, %544 : vector<2x16xf32>
    %c1_196 = arith.constant 1 : index
    %546 = memref.load %arg4[%c1_196] : memref<12xf32, #tpu.memory_space<smem>>
    %547 = vector.broadcast %546 : f32 to vector<2x16xf32>
    %548 = arith.addf %545, %547 : vector<2x16xf32>
    %cst_197 = arith.constant 0.000000e+00 : f32
    %549 = vector.broadcast %cst_197 : f32 to vector<2x16xf32>
    %550 = arith.cmpf ogt, %548, %549 : vector<2x16xf32>
    %c1_198 = arith.constant 1 : index
    %551 = memref.load %arg5[%c1_198] : memref<12xf32, #tpu.memory_space<smem>>
    %552 = vector.broadcast %551 : f32 to vector<2x16xf32>
    %553 = arith.mulf %552, %548 : vector<2x16xf32>
    %554 = arith.select %550, %548, %553 : vector<2x16xi1>, vector<2x16xf32>
    %555 = arith.mulf %133, %34 : vector<2x16xf32>
    %556 = arith.mulf %140, %36 : vector<2x16xf32>
    %557 = arith.mulf %147, %38 : vector<2x16xf32>
    %558 = arith.mulf %154, %40 : vector<2x16xf32>
    %559 = arith.mulf %245, %42 : vector<2x16xf32>
    %560 = arith.mulf %252, %44 : vector<2x16xf32>
    %561 = arith.mulf %259, %46 : vector<2x16xf32>
    %562 = arith.mulf %266, %48 : vector<2x16xf32>
    %563 = arith.addf %555, %556 : vector<2x16xf32>
    %564 = arith.addf %557, %558 : vector<2x16xf32>
    %565 = arith.addf %559, %560 : vector<2x16xf32>
    %566 = arith.addf %561, %562 : vector<2x16xf32>
    %567 = arith.addf %563, %564 : vector<2x16xf32>
    %568 = arith.addf %565, %566 : vector<2x16xf32>
    %569 = arith.addf %567, %568 : vector<2x16xf32>
    %c15_i32_199 = arith.constant 15 : i32
    %570 = tpu.dynamic_rotate %569 by %c15_i32_199 dim 1 : vector<2x16xf32>, i32 -> vector<2x16xf32>
    %571 = arith.addf %569, %570 : vector<2x16xf32>
    %c2_200 = arith.constant 2 : index
    %572 = memref.load %arg4[%c2_200] : memref<12xf32, #tpu.memory_space<smem>>
    %573 = vector.broadcast %572 : f32 to vector<2x16xf32>
    %574 = arith.addf %571, %573 : vector<2x16xf32>
    %cst_201 = arith.constant 0.000000e+00 : f32
    %575 = vector.broadcast %cst_201 : f32 to vector<2x16xf32>
    %576 = arith.cmpf ogt, %574, %575 : vector<2x16xf32>
    %c2_202 = arith.constant 2 : index
    %577 = memref.load %arg5[%c2_202] : memref<12xf32, #tpu.memory_space<smem>>
    %578 = vector.broadcast %577 : f32 to vector<2x16xf32>
    %579 = arith.mulf %578, %574 : vector<2x16xf32>
    %580 = arith.select %576, %574, %579 : vector<2x16xi1>, vector<2x16xf32>
    %581 = arith.mulf %161, %34 : vector<2x16xf32>
    %582 = arith.mulf %168, %36 : vector<2x16xf32>
    %583 = arith.mulf %175, %38 : vector<2x16xf32>
    %584 = arith.mulf %182, %40 : vector<2x16xf32>
    %585 = arith.mulf %273, %42 : vector<2x16xf32>
    %586 = arith.mulf %280, %44 : vector<2x16xf32>
    %587 = arith.mulf %287, %46 : vector<2x16xf32>
    %588 = arith.mulf %294, %48 : vector<2x16xf32>
    %589 = arith.addf %581, %582 : vector<2x16xf32>
    %590 = arith.addf %583, %584 : vector<2x16xf32>
    %591 = arith.addf %585, %586 : vector<2x16xf32>
    %592 = arith.addf %587, %588 : vector<2x16xf32>
    %593 = arith.addf %589, %590 : vector<2x16xf32>
    %594 = arith.addf %591, %592 : vector<2x16xf32>
    %595 = arith.addf %593, %594 : vector<2x16xf32>
    %c15_i32_203 = arith.constant 15 : i32
    %596 = tpu.dynamic_rotate %595 by %c15_i32_203 dim 1 : vector<2x16xf32>, i32 -> vector<2x16xf32>
    %597 = arith.addf %595, %596 : vector<2x16xf32>
    %c3_204 = arith.constant 3 : index
    %598 = memref.load %arg4[%c3_204] : memref<12xf32, #tpu.memory_space<smem>>
    %599 = vector.broadcast %598 : f32 to vector<2x16xf32>
    %600 = arith.addf %597, %599 : vector<2x16xf32>
    %cst_205 = arith.constant 0.000000e+00 : f32
    %601 = vector.broadcast %cst_205 : f32 to vector<2x16xf32>
    %602 = arith.cmpf ogt, %600, %601 : vector<2x16xf32>
    %c3_206 = arith.constant 3 : index
    %603 = memref.load %arg5[%c3_206] : memref<12xf32, #tpu.memory_space<smem>>
    %604 = vector.broadcast %603 : f32 to vector<2x16xf32>
    %605 = arith.mulf %604, %600 : vector<2x16xf32>
    %606 = arith.select %602, %600, %605 : vector<2x16xi1>, vector<2x16xf32>
    %607 = arith.mulf %77, %50 : vector<2x16xf32>
    %608 = arith.mulf %84, %52 : vector<2x16xf32>
    %609 = arith.mulf %91, %54 : vector<2x16xf32>
    %610 = arith.mulf %98, %56 : vector<2x16xf32>
    %611 = arith.mulf %189, %58 : vector<2x16xf32>
    %612 = arith.mulf %196, %60 : vector<2x16xf32>
    %613 = arith.mulf %203, %62 : vector<2x16xf32>
    %614 = arith.mulf %210, %64 : vector<2x16xf32>
    %615 = arith.addf %607, %608 : vector<2x16xf32>
    %616 = arith.addf %609, %610 : vector<2x16xf32>
    %617 = arith.addf %611, %612 : vector<2x16xf32>
    %618 = arith.addf %613, %614 : vector<2x16xf32>
    %619 = arith.addf %615, %616 : vector<2x16xf32>
    %620 = arith.addf %617, %618 : vector<2x16xf32>
    %621 = arith.addf %619, %620 : vector<2x16xf32>
    %c15_i32_207 = arith.constant 15 : i32
    %622 = tpu.dynamic_rotate %621 by %c15_i32_207 dim 1 : vector<2x16xf32>, i32 -> vector<2x16xf32>
    %623 = arith.addf %621, %622 : vector<2x16xf32>
    %c0_208 = arith.constant 0 : index
    %624 = memref.load %arg4[%c0_208] : memref<12xf32, #tpu.memory_space<smem>>
    %625 = vector.broadcast %624 : f32 to vector<2x16xf32>
    %626 = arith.addf %623, %625 : vector<2x16xf32>
    %cst_209 = arith.constant 0.000000e+00 : f32
    %627 = vector.broadcast %cst_209 : f32 to vector<2x16xf32>
    %628 = arith.cmpf ogt, %626, %627 : vector<2x16xf32>
    %c0_210 = arith.constant 0 : index
    %629 = memref.load %arg5[%c0_210] : memref<12xf32, #tpu.memory_space<smem>>
    %630 = vector.broadcast %629 : f32 to vector<2x16xf32>
    %631 = arith.mulf %630, %626 : vector<2x16xf32>
    %632 = arith.select %628, %626, %631 : vector<2x16xi1>, vector<2x16xf32>
    %633 = arith.mulf %105, %50 : vector<2x16xf32>
    %634 = arith.mulf %112, %52 : vector<2x16xf32>
    %635 = arith.mulf %119, %54 : vector<2x16xf32>
    %636 = arith.mulf %126, %56 : vector<2x16xf32>
    %637 = arith.mulf %217, %58 : vector<2x16xf32>
    %638 = arith.mulf %224, %60 : vector<2x16xf32>
    %639 = arith.mulf %231, %62 : vector<2x16xf32>
    %640 = arith.mulf %238, %64 : vector<2x16xf32>
    %641 = arith.addf %633, %634 : vector<2x16xf32>
    %642 = arith.addf %635, %636 : vector<2x16xf32>
    %643 = arith.addf %637, %638 : vector<2x16xf32>
    %644 = arith.addf %639, %640 : vector<2x16xf32>
    %645 = arith.addf %641, %642 : vector<2x16xf32>
    %646 = arith.addf %643, %644 : vector<2x16xf32>
    %647 = arith.addf %645, %646 : vector<2x16xf32>
    %c15_i32_211 = arith.constant 15 : i32
    %648 = tpu.dynamic_rotate %647 by %c15_i32_211 dim 1 : vector<2x16xf32>, i32 -> vector<2x16xf32>
    %649 = arith.addf %647, %648 : vector<2x16xf32>
    %c1_212 = arith.constant 1 : index
    %650 = memref.load %arg4[%c1_212] : memref<12xf32, #tpu.memory_space<smem>>
    %651 = vector.broadcast %650 : f32 to vector<2x16xf32>
    %652 = arith.addf %649, %651 : vector<2x16xf32>
    %cst_213 = arith.constant 0.000000e+00 : f32
    %653 = vector.broadcast %cst_213 : f32 to vector<2x16xf32>
    %654 = arith.cmpf ogt, %652, %653 : vector<2x16xf32>
    %c1_214 = arith.constant 1 : index
    %655 = memref.load %arg5[%c1_214] : memref<12xf32, #tpu.memory_space<smem>>
    %656 = vector.broadcast %655 : f32 to vector<2x16xf32>
    %657 = arith.mulf %656, %652 : vector<2x16xf32>
    %658 = arith.select %654, %652, %657 : vector<2x16xi1>, vector<2x16xf32>
    %659 = arith.mulf %133, %50 : vector<2x16xf32>
    %660 = arith.mulf %140, %52 : vector<2x16xf32>
    %661 = arith.mulf %147, %54 : vector<2x16xf32>
    %662 = arith.mulf %154, %56 : vector<2x16xf32>
    %663 = arith.mulf %245, %58 : vector<2x16xf32>
    %664 = arith.mulf %252, %60 : vector<2x16xf32>
    %665 = arith.mulf %259, %62 : vector<2x16xf32>
    %666 = arith.mulf %266, %64 : vector<2x16xf32>
    %667 = arith.addf %659, %660 : vector<2x16xf32>
    %668 = arith.addf %661, %662 : vector<2x16xf32>
    %669 = arith.addf %663, %664 : vector<2x16xf32>
    %670 = arith.addf %665, %666 : vector<2x16xf32>
    %671 = arith.addf %667, %668 : vector<2x16xf32>
    %672 = arith.addf %669, %670 : vector<2x16xf32>
    %673 = arith.addf %671, %672 : vector<2x16xf32>
    %c15_i32_215 = arith.constant 15 : i32
    %674 = tpu.dynamic_rotate %673 by %c15_i32_215 dim 1 : vector<2x16xf32>, i32 -> vector<2x16xf32>
    %675 = arith.addf %673, %674 : vector<2x16xf32>
    %c2_216 = arith.constant 2 : index
    %676 = memref.load %arg4[%c2_216] : memref<12xf32, #tpu.memory_space<smem>>
    %677 = vector.broadcast %676 : f32 to vector<2x16xf32>
    %678 = arith.addf %675, %677 : vector<2x16xf32>
    %cst_217 = arith.constant 0.000000e+00 : f32
    %679 = vector.broadcast %cst_217 : f32 to vector<2x16xf32>
    %680 = arith.cmpf ogt, %678, %679 : vector<2x16xf32>
    %c2_218 = arith.constant 2 : index
    %681 = memref.load %arg5[%c2_218] : memref<12xf32, #tpu.memory_space<smem>>
    %682 = vector.broadcast %681 : f32 to vector<2x16xf32>
    %683 = arith.mulf %682, %678 : vector<2x16xf32>
    %684 = arith.select %680, %678, %683 : vector<2x16xi1>, vector<2x16xf32>
    %685 = arith.mulf %161, %50 : vector<2x16xf32>
    %686 = arith.mulf %168, %52 : vector<2x16xf32>
    %687 = arith.mulf %175, %54 : vector<2x16xf32>
    %688 = arith.mulf %182, %56 : vector<2x16xf32>
    %689 = arith.mulf %273, %58 : vector<2x16xf32>
    %690 = arith.mulf %280, %60 : vector<2x16xf32>
    %691 = arith.mulf %287, %62 : vector<2x16xf32>
    %692 = arith.mulf %294, %64 : vector<2x16xf32>
    %693 = arith.addf %685, %686 : vector<2x16xf32>
    %694 = arith.addf %687, %688 : vector<2x16xf32>
    %695 = arith.addf %689, %690 : vector<2x16xf32>
    %696 = arith.addf %691, %692 : vector<2x16xf32>
    %697 = arith.addf %693, %694 : vector<2x16xf32>
    %698 = arith.addf %695, %696 : vector<2x16xf32>
    %699 = arith.addf %697, %698 : vector<2x16xf32>
    %c15_i32_219 = arith.constant 15 : i32
    %700 = tpu.dynamic_rotate %699 by %c15_i32_219 dim 1 : vector<2x16xf32>, i32 -> vector<2x16xf32>
    %701 = arith.addf %699, %700 : vector<2x16xf32>
    %c3_220 = arith.constant 3 : index
    %702 = memref.load %arg4[%c3_220] : memref<12xf32, #tpu.memory_space<smem>>
    %703 = vector.broadcast %702 : f32 to vector<2x16xf32>
    %704 = arith.addf %701, %703 : vector<2x16xf32>
    %cst_221 = arith.constant 0.000000e+00 : f32
    %705 = vector.broadcast %cst_221 : f32 to vector<2x16xf32>
    %706 = arith.cmpf ogt, %704, %705 : vector<2x16xf32>
    %c3_222 = arith.constant 3 : index
    %707 = memref.load %arg5[%c3_222] : memref<12xf32, #tpu.memory_space<smem>>
    %708 = vector.broadcast %707 : f32 to vector<2x16xf32>
    %709 = arith.mulf %708, %704 : vector<2x16xf32>
    %710 = arith.select %706, %704, %709 : vector<2x16xi1>, vector<2x16xf32>
    %c1_i32_223 = arith.constant 1 : i32
    %711 = vector.broadcast %c1_i32_223 : i32 to vector<1x16xi32>
    %712 = arith.shrsi %0, %711 : vector<1x16xi32>
    %c1_i32_224 = arith.constant 1 : i32
    %713 = vector.broadcast %c1_i32_224 : i32 to vector<1x16xi32>
    %714 = arith.andi %712, %713 : vector<1x16xi32>
    %c0_i32_225 = arith.constant 0 : i32
    %715 = vector.broadcast %c0_i32_225 : i32 to vector<1x16xi32>
    %716 = arith.cmpi eq, %714, %715 : vector<1x16xi32>
    %c64 = arith.constant 64 : index
    %717 = memref.load %arg3[%c64] : memref<192xf32, #tpu.memory_space<smem>>
    %c80 = arith.constant 80 : index
    %718 = memref.load %arg3[%c80] : memref<192xf32, #tpu.memory_space<smem>>
    %719 = vector.broadcast %717 : f32 to vector<1x16xf32>
    %720 = vector.broadcast %718 : f32 to vector<1x16xf32>
    %721 = arith.select %716, %719, %720 : vector<1x16xi1>, vector<1x16xf32>
    %722 = vector.shape_cast %721 : vector<1x16xf32> to vector<1x16xf32>
    %723 = vector.broadcast %722 : vector<1x16xf32> to vector<2x16xf32>
    %c65 = arith.constant 65 : index
    %724 = memref.load %arg3[%c65] : memref<192xf32, #tpu.memory_space<smem>>
    %c81 = arith.constant 81 : index
    %725 = memref.load %arg3[%c81] : memref<192xf32, #tpu.memory_space<smem>>
    %726 = vector.broadcast %724 : f32 to vector<1x16xf32>
    %727 = vector.broadcast %725 : f32 to vector<1x16xf32>
    %728 = arith.select %716, %726, %727 : vector<1x16xi1>, vector<1x16xf32>
    %729 = vector.shape_cast %728 : vector<1x16xf32> to vector<1x16xf32>
    %730 = vector.broadcast %729 : vector<1x16xf32> to vector<2x16xf32>
    %c66 = arith.constant 66 : index
    %731 = memref.load %arg3[%c66] : memref<192xf32, #tpu.memory_space<smem>>
    %c82 = arith.constant 82 : index
    %732 = memref.load %arg3[%c82] : memref<192xf32, #tpu.memory_space<smem>>
    %733 = vector.broadcast %731 : f32 to vector<1x16xf32>
    %734 = vector.broadcast %732 : f32 to vector<1x16xf32>
    %735 = arith.select %716, %733, %734 : vector<1x16xi1>, vector<1x16xf32>
    %736 = vector.shape_cast %735 : vector<1x16xf32> to vector<1x16xf32>
    %737 = vector.broadcast %736 : vector<1x16xf32> to vector<2x16xf32>
    %c67 = arith.constant 67 : index
    %738 = memref.load %arg3[%c67] : memref<192xf32, #tpu.memory_space<smem>>
    %c83 = arith.constant 83 : index
    %739 = memref.load %arg3[%c83] : memref<192xf32, #tpu.memory_space<smem>>
    %740 = vector.broadcast %738 : f32 to vector<1x16xf32>
    %741 = vector.broadcast %739 : f32 to vector<1x16xf32>
    %742 = arith.select %716, %740, %741 : vector<1x16xi1>, vector<1x16xf32>
    %743 = vector.shape_cast %742 : vector<1x16xf32> to vector<1x16xf32>
    %744 = vector.broadcast %743 : vector<1x16xf32> to vector<2x16xf32>
    %c68 = arith.constant 68 : index
    %745 = memref.load %arg3[%c68] : memref<192xf32, #tpu.memory_space<smem>>
    %c84 = arith.constant 84 : index
    %746 = memref.load %arg3[%c84] : memref<192xf32, #tpu.memory_space<smem>>
    %747 = vector.broadcast %745 : f32 to vector<1x16xf32>
    %748 = vector.broadcast %746 : f32 to vector<1x16xf32>
    %749 = arith.select %716, %747, %748 : vector<1x16xi1>, vector<1x16xf32>
    %750 = vector.shape_cast %749 : vector<1x16xf32> to vector<1x16xf32>
    %751 = vector.broadcast %750 : vector<1x16xf32> to vector<2x16xf32>
    %c69 = arith.constant 69 : index
    %752 = memref.load %arg3[%c69] : memref<192xf32, #tpu.memory_space<smem>>
    %c85 = arith.constant 85 : index
    %753 = memref.load %arg3[%c85] : memref<192xf32, #tpu.memory_space<smem>>
    %754 = vector.broadcast %752 : f32 to vector<1x16xf32>
    %755 = vector.broadcast %753 : f32 to vector<1x16xf32>
    %756 = arith.select %716, %754, %755 : vector<1x16xi1>, vector<1x16xf32>
    %757 = vector.shape_cast %756 : vector<1x16xf32> to vector<1x16xf32>
    %758 = vector.broadcast %757 : vector<1x16xf32> to vector<2x16xf32>
    %c70 = arith.constant 70 : index
    %759 = memref.load %arg3[%c70] : memref<192xf32, #tpu.memory_space<smem>>
    %c86 = arith.constant 86 : index
    %760 = memref.load %arg3[%c86] : memref<192xf32, #tpu.memory_space<smem>>
    %761 = vector.broadcast %759 : f32 to vector<1x16xf32>
    %762 = vector.broadcast %760 : f32 to vector<1x16xf32>
    %763 = arith.select %716, %761, %762 : vector<1x16xi1>, vector<1x16xf32>
    %764 = vector.shape_cast %763 : vector<1x16xf32> to vector<1x16xf32>
    %765 = vector.broadcast %764 : vector<1x16xf32> to vector<2x16xf32>
    %c71 = arith.constant 71 : index
    %766 = memref.load %arg3[%c71] : memref<192xf32, #tpu.memory_space<smem>>
    %c87 = arith.constant 87 : index
    %767 = memref.load %arg3[%c87] : memref<192xf32, #tpu.memory_space<smem>>
    %768 = vector.broadcast %766 : f32 to vector<1x16xf32>
    %769 = vector.broadcast %767 : f32 to vector<1x16xf32>
    %770 = arith.select %716, %768, %769 : vector<1x16xi1>, vector<1x16xf32>
    %771 = vector.shape_cast %770 : vector<1x16xf32> to vector<1x16xf32>
    %772 = vector.broadcast %771 : vector<1x16xf32> to vector<2x16xf32>
    %c72 = arith.constant 72 : index
    %773 = memref.load %arg3[%c72] : memref<192xf32, #tpu.memory_space<smem>>
    %c88 = arith.constant 88 : index
    %774 = memref.load %arg3[%c88] : memref<192xf32, #tpu.memory_space<smem>>
    %775 = vector.broadcast %773 : f32 to vector<1x16xf32>
    %776 = vector.broadcast %774 : f32 to vector<1x16xf32>
    %777 = arith.select %716, %775, %776 : vector<1x16xi1>, vector<1x16xf32>
    %778 = vector.shape_cast %777 : vector<1x16xf32> to vector<1x16xf32>
    %779 = vector.broadcast %778 : vector<1x16xf32> to vector<2x16xf32>
    %c73 = arith.constant 73 : index
    %780 = memref.load %arg3[%c73] : memref<192xf32, #tpu.memory_space<smem>>
    %c89 = arith.constant 89 : index
    %781 = memref.load %arg3[%c89] : memref<192xf32, #tpu.memory_space<smem>>
    %782 = vector.broadcast %780 : f32 to vector<1x16xf32>
    %783 = vector.broadcast %781 : f32 to vector<1x16xf32>
    %784 = arith.select %716, %782, %783 : vector<1x16xi1>, vector<1x16xf32>
    %785 = vector.shape_cast %784 : vector<1x16xf32> to vector<1x16xf32>
    %786 = vector.broadcast %785 : vector<1x16xf32> to vector<2x16xf32>
    %c74 = arith.constant 74 : index
    %787 = memref.load %arg3[%c74] : memref<192xf32, #tpu.memory_space<smem>>
    %c90 = arith.constant 90 : index
    %788 = memref.load %arg3[%c90] : memref<192xf32, #tpu.memory_space<smem>>
    %789 = vector.broadcast %787 : f32 to vector<1x16xf32>
    %790 = vector.broadcast %788 : f32 to vector<1x16xf32>
    %791 = arith.select %716, %789, %790 : vector<1x16xi1>, vector<1x16xf32>
    %792 = vector.shape_cast %791 : vector<1x16xf32> to vector<1x16xf32>
    %793 = vector.broadcast %792 : vector<1x16xf32> to vector<2x16xf32>
    %c75 = arith.constant 75 : index
    %794 = memref.load %arg3[%c75] : memref<192xf32, #tpu.memory_space<smem>>
    %c91 = arith.constant 91 : index
    %795 = memref.load %arg3[%c91] : memref<192xf32, #tpu.memory_space<smem>>
    %796 = vector.broadcast %794 : f32 to vector<1x16xf32>
    %797 = vector.broadcast %795 : f32 to vector<1x16xf32>
    %798 = arith.select %716, %796, %797 : vector<1x16xi1>, vector<1x16xf32>
    %799 = vector.shape_cast %798 : vector<1x16xf32> to vector<1x16xf32>
    %800 = vector.broadcast %799 : vector<1x16xf32> to vector<2x16xf32>
    %c76 = arith.constant 76 : index
    %801 = memref.load %arg3[%c76] : memref<192xf32, #tpu.memory_space<smem>>
    %c92 = arith.constant 92 : index
    %802 = memref.load %arg3[%c92] : memref<192xf32, #tpu.memory_space<smem>>
    %803 = vector.broadcast %801 : f32 to vector<1x16xf32>
    %804 = vector.broadcast %802 : f32 to vector<1x16xf32>
    %805 = arith.select %716, %803, %804 : vector<1x16xi1>, vector<1x16xf32>
    %806 = vector.shape_cast %805 : vector<1x16xf32> to vector<1x16xf32>
    %807 = vector.broadcast %806 : vector<1x16xf32> to vector<2x16xf32>
    %c77 = arith.constant 77 : index
    %808 = memref.load %arg3[%c77] : memref<192xf32, #tpu.memory_space<smem>>
    %c93 = arith.constant 93 : index
    %809 = memref.load %arg3[%c93] : memref<192xf32, #tpu.memory_space<smem>>
    %810 = vector.broadcast %808 : f32 to vector<1x16xf32>
    %811 = vector.broadcast %809 : f32 to vector<1x16xf32>
    %812 = arith.select %716, %810, %811 : vector<1x16xi1>, vector<1x16xf32>
    %813 = vector.shape_cast %812 : vector<1x16xf32> to vector<1x16xf32>
    %814 = vector.broadcast %813 : vector<1x16xf32> to vector<2x16xf32>
    %c78 = arith.constant 78 : index
    %815 = memref.load %arg3[%c78] : memref<192xf32, #tpu.memory_space<smem>>
    %c94 = arith.constant 94 : index
    %816 = memref.load %arg3[%c94] : memref<192xf32, #tpu.memory_space<smem>>
    %817 = vector.broadcast %815 : f32 to vector<1x16xf32>
    %818 = vector.broadcast %816 : f32 to vector<1x16xf32>
    %819 = arith.select %716, %817, %818 : vector<1x16xi1>, vector<1x16xf32>
    %820 = vector.shape_cast %819 : vector<1x16xf32> to vector<1x16xf32>
    %821 = vector.broadcast %820 : vector<1x16xf32> to vector<2x16xf32>
    %c79 = arith.constant 79 : index
    %822 = memref.load %arg3[%c79] : memref<192xf32, #tpu.memory_space<smem>>
    %c95 = arith.constant 95 : index
    %823 = memref.load %arg3[%c95] : memref<192xf32, #tpu.memory_space<smem>>
    %824 = vector.broadcast %822 : f32 to vector<1x16xf32>
    %825 = vector.broadcast %823 : f32 to vector<1x16xf32>
    %826 = arith.select %716, %824, %825 : vector<1x16xi1>, vector<1x16xf32>
    %827 = vector.shape_cast %826 : vector<1x16xf32> to vector<1x16xf32>
    %828 = vector.broadcast %827 : vector<1x16xf32> to vector<2x16xf32>
    %c96 = arith.constant 96 : index
    %829 = memref.load %arg3[%c96] : memref<192xf32, #tpu.memory_space<smem>>
    %c112 = arith.constant 112 : index
    %830 = memref.load %arg3[%c112] : memref<192xf32, #tpu.memory_space<smem>>
    %831 = vector.broadcast %829 : f32 to vector<1x16xf32>
    %832 = vector.broadcast %830 : f32 to vector<1x16xf32>
    %833 = arith.select %716, %831, %832 : vector<1x16xi1>, vector<1x16xf32>
    %834 = vector.shape_cast %833 : vector<1x16xf32> to vector<1x16xf32>
    %835 = vector.broadcast %834 : vector<1x16xf32> to vector<2x16xf32>
    %c97 = arith.constant 97 : index
    %836 = memref.load %arg3[%c97] : memref<192xf32, #tpu.memory_space<smem>>
    %c113 = arith.constant 113 : index
    %837 = memref.load %arg3[%c113] : memref<192xf32, #tpu.memory_space<smem>>
    %838 = vector.broadcast %836 : f32 to vector<1x16xf32>
    %839 = vector.broadcast %837 : f32 to vector<1x16xf32>
    %840 = arith.select %716, %838, %839 : vector<1x16xi1>, vector<1x16xf32>
    %841 = vector.shape_cast %840 : vector<1x16xf32> to vector<1x16xf32>
    %842 = vector.broadcast %841 : vector<1x16xf32> to vector<2x16xf32>
    %c98 = arith.constant 98 : index
    %843 = memref.load %arg3[%c98] : memref<192xf32, #tpu.memory_space<smem>>
    %c114 = arith.constant 114 : index
    %844 = memref.load %arg3[%c114] : memref<192xf32, #tpu.memory_space<smem>>
    %845 = vector.broadcast %843 : f32 to vector<1x16xf32>
    %846 = vector.broadcast %844 : f32 to vector<1x16xf32>
    %847 = arith.select %716, %845, %846 : vector<1x16xi1>, vector<1x16xf32>
    %848 = vector.shape_cast %847 : vector<1x16xf32> to vector<1x16xf32>
    %849 = vector.broadcast %848 : vector<1x16xf32> to vector<2x16xf32>
    %c99 = arith.constant 99 : index
    %850 = memref.load %arg3[%c99] : memref<192xf32, #tpu.memory_space<smem>>
    %c115 = arith.constant 115 : index
    %851 = memref.load %arg3[%c115] : memref<192xf32, #tpu.memory_space<smem>>
    %852 = vector.broadcast %850 : f32 to vector<1x16xf32>
    %853 = vector.broadcast %851 : f32 to vector<1x16xf32>
    %854 = arith.select %716, %852, %853 : vector<1x16xi1>, vector<1x16xf32>
    %855 = vector.shape_cast %854 : vector<1x16xf32> to vector<1x16xf32>
    %856 = vector.broadcast %855 : vector<1x16xf32> to vector<2x16xf32>
    %c100 = arith.constant 100 : index
    %857 = memref.load %arg3[%c100] : memref<192xf32, #tpu.memory_space<smem>>
    %c116 = arith.constant 116 : index
    %858 = memref.load %arg3[%c116] : memref<192xf32, #tpu.memory_space<smem>>
    %859 = vector.broadcast %857 : f32 to vector<1x16xf32>
    %860 = vector.broadcast %858 : f32 to vector<1x16xf32>
    %861 = arith.select %716, %859, %860 : vector<1x16xi1>, vector<1x16xf32>
    %862 = vector.shape_cast %861 : vector<1x16xf32> to vector<1x16xf32>
    %863 = vector.broadcast %862 : vector<1x16xf32> to vector<2x16xf32>
    %c101 = arith.constant 101 : index
    %864 = memref.load %arg3[%c101] : memref<192xf32, #tpu.memory_space<smem>>
    %c117 = arith.constant 117 : index
    %865 = memref.load %arg3[%c117] : memref<192xf32, #tpu.memory_space<smem>>
    %866 = vector.broadcast %864 : f32 to vector<1x16xf32>
    %867 = vector.broadcast %865 : f32 to vector<1x16xf32>
    %868 = arith.select %716, %866, %867 : vector<1x16xi1>, vector<1x16xf32>
    %869 = vector.shape_cast %868 : vector<1x16xf32> to vector<1x16xf32>
    %870 = vector.broadcast %869 : vector<1x16xf32> to vector<2x16xf32>
    %c102 = arith.constant 102 : index
    %871 = memref.load %arg3[%c102] : memref<192xf32, #tpu.memory_space<smem>>
    %c118 = arith.constant 118 : index
    %872 = memref.load %arg3[%c118] : memref<192xf32, #tpu.memory_space<smem>>
    %873 = vector.broadcast %871 : f32 to vector<1x16xf32>
    %874 = vector.broadcast %872 : f32 to vector<1x16xf32>
    %875 = arith.select %716, %873, %874 : vector<1x16xi1>, vector<1x16xf32>
    %876 = vector.shape_cast %875 : vector<1x16xf32> to vector<1x16xf32>
    %877 = vector.broadcast %876 : vector<1x16xf32> to vector<2x16xf32>
    %c103 = arith.constant 103 : index
    %878 = memref.load %arg3[%c103] : memref<192xf32, #tpu.memory_space<smem>>
    %c119 = arith.constant 119 : index
    %879 = memref.load %arg3[%c119] : memref<192xf32, #tpu.memory_space<smem>>
    %880 = vector.broadcast %878 : f32 to vector<1x16xf32>
    %881 = vector.broadcast %879 : f32 to vector<1x16xf32>
    %882 = arith.select %716, %880, %881 : vector<1x16xi1>, vector<1x16xf32>
    %883 = vector.shape_cast %882 : vector<1x16xf32> to vector<1x16xf32>
    %884 = vector.broadcast %883 : vector<1x16xf32> to vector<2x16xf32>
    %c104 = arith.constant 104 : index
    %885 = memref.load %arg3[%c104] : memref<192xf32, #tpu.memory_space<smem>>
    %c120 = arith.constant 120 : index
    %886 = memref.load %arg3[%c120] : memref<192xf32, #tpu.memory_space<smem>>
    %887 = vector.broadcast %885 : f32 to vector<1x16xf32>
    %888 = vector.broadcast %886 : f32 to vector<1x16xf32>
    %889 = arith.select %716, %887, %888 : vector<1x16xi1>, vector<1x16xf32>
    %890 = vector.shape_cast %889 : vector<1x16xf32> to vector<1x16xf32>
    %891 = vector.broadcast %890 : vector<1x16xf32> to vector<2x16xf32>
    %c105 = arith.constant 105 : index
    %892 = memref.load %arg3[%c105] : memref<192xf32, #tpu.memory_space<smem>>
    %c121 = arith.constant 121 : index
    %893 = memref.load %arg3[%c121] : memref<192xf32, #tpu.memory_space<smem>>
    %894 = vector.broadcast %892 : f32 to vector<1x16xf32>
    %895 = vector.broadcast %893 : f32 to vector<1x16xf32>
    %896 = arith.select %716, %894, %895 : vector<1x16xi1>, vector<1x16xf32>
    %897 = vector.shape_cast %896 : vector<1x16xf32> to vector<1x16xf32>
    %898 = vector.broadcast %897 : vector<1x16xf32> to vector<2x16xf32>
    %c106 = arith.constant 106 : index
    %899 = memref.load %arg3[%c106] : memref<192xf32, #tpu.memory_space<smem>>
    %c122 = arith.constant 122 : index
    %900 = memref.load %arg3[%c122] : memref<192xf32, #tpu.memory_space<smem>>
    %901 = vector.broadcast %899 : f32 to vector<1x16xf32>
    %902 = vector.broadcast %900 : f32 to vector<1x16xf32>
    %903 = arith.select %716, %901, %902 : vector<1x16xi1>, vector<1x16xf32>
    %904 = vector.shape_cast %903 : vector<1x16xf32> to vector<1x16xf32>
    %905 = vector.broadcast %904 : vector<1x16xf32> to vector<2x16xf32>
    %c107 = arith.constant 107 : index
    %906 = memref.load %arg3[%c107] : memref<192xf32, #tpu.memory_space<smem>>
    %c123 = arith.constant 123 : index
    %907 = memref.load %arg3[%c123] : memref<192xf32, #tpu.memory_space<smem>>
    %908 = vector.broadcast %906 : f32 to vector<1x16xf32>
    %909 = vector.broadcast %907 : f32 to vector<1x16xf32>
    %910 = arith.select %716, %908, %909 : vector<1x16xi1>, vector<1x16xf32>
    %911 = vector.shape_cast %910 : vector<1x16xf32> to vector<1x16xf32>
    %912 = vector.broadcast %911 : vector<1x16xf32> to vector<2x16xf32>
    %c108 = arith.constant 108 : index
    %913 = memref.load %arg3[%c108] : memref<192xf32, #tpu.memory_space<smem>>
    %c124 = arith.constant 124 : index
    %914 = memref.load %arg3[%c124] : memref<192xf32, #tpu.memory_space<smem>>
    %915 = vector.broadcast %913 : f32 to vector<1x16xf32>
    %916 = vector.broadcast %914 : f32 to vector<1x16xf32>
    %917 = arith.select %716, %915, %916 : vector<1x16xi1>, vector<1x16xf32>
    %918 = vector.shape_cast %917 : vector<1x16xf32> to vector<1x16xf32>
    %919 = vector.broadcast %918 : vector<1x16xf32> to vector<2x16xf32>
    %c109 = arith.constant 109 : index
    %920 = memref.load %arg3[%c109] : memref<192xf32, #tpu.memory_space<smem>>
    %c125 = arith.constant 125 : index
    %921 = memref.load %arg3[%c125] : memref<192xf32, #tpu.memory_space<smem>>
    %922 = vector.broadcast %920 : f32 to vector<1x16xf32>
    %923 = vector.broadcast %921 : f32 to vector<1x16xf32>
    %924 = arith.select %716, %922, %923 : vector<1x16xi1>, vector<1x16xf32>
    %925 = vector.shape_cast %924 : vector<1x16xf32> to vector<1x16xf32>
    %926 = vector.broadcast %925 : vector<1x16xf32> to vector<2x16xf32>
    %c110 = arith.constant 110 : index
    %927 = memref.load %arg3[%c110] : memref<192xf32, #tpu.memory_space<smem>>
    %c126 = arith.constant 126 : index
    %928 = memref.load %arg3[%c126] : memref<192xf32, #tpu.memory_space<smem>>
    %929 = vector.broadcast %927 : f32 to vector<1x16xf32>
    %930 = vector.broadcast %928 : f32 to vector<1x16xf32>
    %931 = arith.select %716, %929, %930 : vector<1x16xi1>, vector<1x16xf32>
    %932 = vector.shape_cast %931 : vector<1x16xf32> to vector<1x16xf32>
    %933 = vector.broadcast %932 : vector<1x16xf32> to vector<2x16xf32>
    %c111 = arith.constant 111 : index
    %934 = memref.load %arg3[%c111] : memref<192xf32, #tpu.memory_space<smem>>
    %c127 = arith.constant 127 : index
    %935 = memref.load %arg3[%c127] : memref<192xf32, #tpu.memory_space<smem>>
    %936 = vector.broadcast %934 : f32 to vector<1x16xf32>
    %937 = vector.broadcast %935 : f32 to vector<1x16xf32>
    %938 = arith.select %716, %936, %937 : vector<1x16xi1>, vector<1x16xf32>
    %939 = vector.shape_cast %938 : vector<1x16xf32> to vector<1x16xf32>
    %940 = vector.broadcast %939 : vector<1x16xf32> to vector<2x16xf32>
    %941 = arith.mulf %723, %320 : vector<2x16xf32>
    %942 = arith.mulf %730, %346 : vector<2x16xf32>
    %943 = arith.mulf %737, %372 : vector<2x16xf32>
    %944 = arith.mulf %744, %398 : vector<2x16xf32>
    %945 = arith.mulf %835, %424 : vector<2x16xf32>
    %946 = arith.mulf %842, %450 : vector<2x16xf32>
    %947 = arith.mulf %849, %476 : vector<2x16xf32>
    %948 = arith.mulf %856, %502 : vector<2x16xf32>
    %949 = arith.addf %941, %942 : vector<2x16xf32>
    %950 = arith.addf %943, %944 : vector<2x16xf32>
    %951 = arith.addf %945, %946 : vector<2x16xf32>
    %952 = arith.addf %947, %948 : vector<2x16xf32>
    %953 = arith.addf %949, %950 : vector<2x16xf32>
    %954 = arith.addf %951, %952 : vector<2x16xf32>
    %955 = arith.addf %953, %954 : vector<2x16xf32>
    %c14_i32 = arith.constant 14 : i32
    %956 = tpu.dynamic_rotate %955 by %c14_i32 dim 1 : vector<2x16xf32>, i32 -> vector<2x16xf32>
    %957 = arith.addf %955, %956 : vector<2x16xf32>
    %c4_226 = arith.constant 4 : index
    %958 = memref.load %arg4[%c4_226] : memref<12xf32, #tpu.memory_space<smem>>
    %959 = vector.broadcast %958 : f32 to vector<2x16xf32>
    %960 = arith.addf %957, %959 : vector<2x16xf32>
    %cst_227 = arith.constant 0.000000e+00 : f32
    %961 = vector.broadcast %cst_227 : f32 to vector<2x16xf32>
    %962 = arith.cmpf ogt, %960, %961 : vector<2x16xf32>
    %c4_228 = arith.constant 4 : index
    %963 = memref.load %arg5[%c4_228] : memref<12xf32, #tpu.memory_space<smem>>
    %964 = vector.broadcast %963 : f32 to vector<2x16xf32>
    %965 = arith.mulf %964, %960 : vector<2x16xf32>
    %966 = arith.select %962, %960, %965 : vector<2x16xi1>, vector<2x16xf32>
    %967 = arith.mulf %751, %320 : vector<2x16xf32>
    %968 = arith.mulf %758, %346 : vector<2x16xf32>
    %969 = arith.mulf %765, %372 : vector<2x16xf32>
    %970 = arith.mulf %772, %398 : vector<2x16xf32>
    %971 = arith.mulf %863, %424 : vector<2x16xf32>
    %972 = arith.mulf %870, %450 : vector<2x16xf32>
    %973 = arith.mulf %877, %476 : vector<2x16xf32>
    %974 = arith.mulf %884, %502 : vector<2x16xf32>
    %975 = arith.addf %967, %968 : vector<2x16xf32>
    %976 = arith.addf %969, %970 : vector<2x16xf32>
    %977 = arith.addf %971, %972 : vector<2x16xf32>
    %978 = arith.addf %973, %974 : vector<2x16xf32>
    %979 = arith.addf %975, %976 : vector<2x16xf32>
    %980 = arith.addf %977, %978 : vector<2x16xf32>
    %981 = arith.addf %979, %980 : vector<2x16xf32>
    %c14_i32_229 = arith.constant 14 : i32
    %982 = tpu.dynamic_rotate %981 by %c14_i32_229 dim 1 : vector<2x16xf32>, i32 -> vector<2x16xf32>
    %983 = arith.addf %981, %982 : vector<2x16xf32>
    %c5_230 = arith.constant 5 : index
    %984 = memref.load %arg4[%c5_230] : memref<12xf32, #tpu.memory_space<smem>>
    %985 = vector.broadcast %984 : f32 to vector<2x16xf32>
    %986 = arith.addf %983, %985 : vector<2x16xf32>
    %cst_231 = arith.constant 0.000000e+00 : f32
    %987 = vector.broadcast %cst_231 : f32 to vector<2x16xf32>
    %988 = arith.cmpf ogt, %986, %987 : vector<2x16xf32>
    %c5_232 = arith.constant 5 : index
    %989 = memref.load %arg5[%c5_232] : memref<12xf32, #tpu.memory_space<smem>>
    %990 = vector.broadcast %989 : f32 to vector<2x16xf32>
    %991 = arith.mulf %990, %986 : vector<2x16xf32>
    %992 = arith.select %988, %986, %991 : vector<2x16xi1>, vector<2x16xf32>
    %993 = arith.mulf %779, %320 : vector<2x16xf32>
    %994 = arith.mulf %786, %346 : vector<2x16xf32>
    %995 = arith.mulf %793, %372 : vector<2x16xf32>
    %996 = arith.mulf %800, %398 : vector<2x16xf32>
    %997 = arith.mulf %891, %424 : vector<2x16xf32>
    %998 = arith.mulf %898, %450 : vector<2x16xf32>
    %999 = arith.mulf %905, %476 : vector<2x16xf32>
    %1000 = arith.mulf %912, %502 : vector<2x16xf32>
    %1001 = arith.addf %993, %994 : vector<2x16xf32>
    %1002 = arith.addf %995, %996 : vector<2x16xf32>
    %1003 = arith.addf %997, %998 : vector<2x16xf32>
    %1004 = arith.addf %999, %1000 : vector<2x16xf32>
    %1005 = arith.addf %1001, %1002 : vector<2x16xf32>
    %1006 = arith.addf %1003, %1004 : vector<2x16xf32>
    %1007 = arith.addf %1005, %1006 : vector<2x16xf32>
    %c14_i32_233 = arith.constant 14 : i32
    %1008 = tpu.dynamic_rotate %1007 by %c14_i32_233 dim 1 : vector<2x16xf32>, i32 -> vector<2x16xf32>
    %1009 = arith.addf %1007, %1008 : vector<2x16xf32>
    %c6_234 = arith.constant 6 : index
    %1010 = memref.load %arg4[%c6_234] : memref<12xf32, #tpu.memory_space<smem>>
    %1011 = vector.broadcast %1010 : f32 to vector<2x16xf32>
    %1012 = arith.addf %1009, %1011 : vector<2x16xf32>
    %cst_235 = arith.constant 0.000000e+00 : f32
    %1013 = vector.broadcast %cst_235 : f32 to vector<2x16xf32>
    %1014 = arith.cmpf ogt, %1012, %1013 : vector<2x16xf32>
    %c6_236 = arith.constant 6 : index
    %1015 = memref.load %arg5[%c6_236] : memref<12xf32, #tpu.memory_space<smem>>
    %1016 = vector.broadcast %1015 : f32 to vector<2x16xf32>
    %1017 = arith.mulf %1016, %1012 : vector<2x16xf32>
    %1018 = arith.select %1014, %1012, %1017 : vector<2x16xi1>, vector<2x16xf32>
    %1019 = arith.mulf %807, %320 : vector<2x16xf32>
    %1020 = arith.mulf %814, %346 : vector<2x16xf32>
    %1021 = arith.mulf %821, %372 : vector<2x16xf32>
    %1022 = arith.mulf %828, %398 : vector<2x16xf32>
    %1023 = arith.mulf %919, %424 : vector<2x16xf32>
    %1024 = arith.mulf %926, %450 : vector<2x16xf32>
    %1025 = arith.mulf %933, %476 : vector<2x16xf32>
    %1026 = arith.mulf %940, %502 : vector<2x16xf32>
    %1027 = arith.addf %1019, %1020 : vector<2x16xf32>
    %1028 = arith.addf %1021, %1022 : vector<2x16xf32>
    %1029 = arith.addf %1023, %1024 : vector<2x16xf32>
    %1030 = arith.addf %1025, %1026 : vector<2x16xf32>
    %1031 = arith.addf %1027, %1028 : vector<2x16xf32>
    %1032 = arith.addf %1029, %1030 : vector<2x16xf32>
    %1033 = arith.addf %1031, %1032 : vector<2x16xf32>
    %c14_i32_237 = arith.constant 14 : i32
    %1034 = tpu.dynamic_rotate %1033 by %c14_i32_237 dim 1 : vector<2x16xf32>, i32 -> vector<2x16xf32>
    %1035 = arith.addf %1033, %1034 : vector<2x16xf32>
    %c7_238 = arith.constant 7 : index
    %1036 = memref.load %arg4[%c7_238] : memref<12xf32, #tpu.memory_space<smem>>
    %1037 = vector.broadcast %1036 : f32 to vector<2x16xf32>
    %1038 = arith.addf %1035, %1037 : vector<2x16xf32>
    %cst_239 = arith.constant 0.000000e+00 : f32
    %1039 = vector.broadcast %cst_239 : f32 to vector<2x16xf32>
    %1040 = arith.cmpf ogt, %1038, %1039 : vector<2x16xf32>
    %c7_240 = arith.constant 7 : index
    %1041 = memref.load %arg5[%c7_240] : memref<12xf32, #tpu.memory_space<smem>>
    %1042 = vector.broadcast %1041 : f32 to vector<2x16xf32>
    %1043 = arith.mulf %1042, %1038 : vector<2x16xf32>
    %1044 = arith.select %1040, %1038, %1043 : vector<2x16xi1>, vector<2x16xf32>
    %1045 = arith.mulf %723, %528 : vector<2x16xf32>
    %1046 = arith.mulf %730, %554 : vector<2x16xf32>
    %1047 = arith.mulf %737, %580 : vector<2x16xf32>
    %1048 = arith.mulf %744, %606 : vector<2x16xf32>
    %1049 = arith.mulf %835, %632 : vector<2x16xf32>
    %1050 = arith.mulf %842, %658 : vector<2x16xf32>
    %1051 = arith.mulf %849, %684 : vector<2x16xf32>
    %1052 = arith.mulf %856, %710 : vector<2x16xf32>
    %1053 = arith.addf %1045, %1046 : vector<2x16xf32>
    %1054 = arith.addf %1047, %1048 : vector<2x16xf32>
    %1055 = arith.addf %1049, %1050 : vector<2x16xf32>
    %1056 = arith.addf %1051, %1052 : vector<2x16xf32>
    %1057 = arith.addf %1053, %1054 : vector<2x16xf32>
    %1058 = arith.addf %1055, %1056 : vector<2x16xf32>
    %1059 = arith.addf %1057, %1058 : vector<2x16xf32>
    %c14_i32_241 = arith.constant 14 : i32
    %1060 = tpu.dynamic_rotate %1059 by %c14_i32_241 dim 1 : vector<2x16xf32>, i32 -> vector<2x16xf32>
    %1061 = arith.addf %1059, %1060 : vector<2x16xf32>
    %c4_242 = arith.constant 4 : index
    %1062 = memref.load %arg4[%c4_242] : memref<12xf32, #tpu.memory_space<smem>>
    %1063 = vector.broadcast %1062 : f32 to vector<2x16xf32>
    %1064 = arith.addf %1061, %1063 : vector<2x16xf32>
    %cst_243 = arith.constant 0.000000e+00 : f32
    %1065 = vector.broadcast %cst_243 : f32 to vector<2x16xf32>
    %1066 = arith.cmpf ogt, %1064, %1065 : vector<2x16xf32>
    %c4_244 = arith.constant 4 : index
    %1067 = memref.load %arg5[%c4_244] : memref<12xf32, #tpu.memory_space<smem>>
    %1068 = vector.broadcast %1067 : f32 to vector<2x16xf32>
    %1069 = arith.mulf %1068, %1064 : vector<2x16xf32>
    %1070 = arith.select %1066, %1064, %1069 : vector<2x16xi1>, vector<2x16xf32>
    %1071 = arith.mulf %751, %528 : vector<2x16xf32>
    %1072 = arith.mulf %758, %554 : vector<2x16xf32>
    %1073 = arith.mulf %765, %580 : vector<2x16xf32>
    %1074 = arith.mulf %772, %606 : vector<2x16xf32>
    %1075 = arith.mulf %863, %632 : vector<2x16xf32>
    %1076 = arith.mulf %870, %658 : vector<2x16xf32>
    %1077 = arith.mulf %877, %684 : vector<2x16xf32>
    %1078 = arith.mulf %884, %710 : vector<2x16xf32>
    %1079 = arith.addf %1071, %1072 : vector<2x16xf32>
    %1080 = arith.addf %1073, %1074 : vector<2x16xf32>
    %1081 = arith.addf %1075, %1076 : vector<2x16xf32>
    %1082 = arith.addf %1077, %1078 : vector<2x16xf32>
    %1083 = arith.addf %1079, %1080 : vector<2x16xf32>
    %1084 = arith.addf %1081, %1082 : vector<2x16xf32>
    %1085 = arith.addf %1083, %1084 : vector<2x16xf32>
    %c14_i32_245 = arith.constant 14 : i32
    %1086 = tpu.dynamic_rotate %1085 by %c14_i32_245 dim 1 : vector<2x16xf32>, i32 -> vector<2x16xf32>
    %1087 = arith.addf %1085, %1086 : vector<2x16xf32>
    %c5_246 = arith.constant 5 : index
    %1088 = memref.load %arg4[%c5_246] : memref<12xf32, #tpu.memory_space<smem>>
    %1089 = vector.broadcast %1088 : f32 to vector<2x16xf32>
    %1090 = arith.addf %1087, %1089 : vector<2x16xf32>
    %cst_247 = arith.constant 0.000000e+00 : f32
    %1091 = vector.broadcast %cst_247 : f32 to vector<2x16xf32>
    %1092 = arith.cmpf ogt, %1090, %1091 : vector<2x16xf32>
    %c5_248 = arith.constant 5 : index
    %1093 = memref.load %arg5[%c5_248] : memref<12xf32, #tpu.memory_space<smem>>
    %1094 = vector.broadcast %1093 : f32 to vector<2x16xf32>
    %1095 = arith.mulf %1094, %1090 : vector<2x16xf32>
    %1096 = arith.select %1092, %1090, %1095 : vector<2x16xi1>, vector<2x16xf32>
    %1097 = arith.mulf %779, %528 : vector<2x16xf32>
    %1098 = arith.mulf %786, %554 : vector<2x16xf32>
    %1099 = arith.mulf %793, %580 : vector<2x16xf32>
    %1100 = arith.mulf %800, %606 : vector<2x16xf32>
    %1101 = arith.mulf %891, %632 : vector<2x16xf32>
    %1102 = arith.mulf %898, %658 : vector<2x16xf32>
    %1103 = arith.mulf %905, %684 : vector<2x16xf32>
    %1104 = arith.mulf %912, %710 : vector<2x16xf32>
    %1105 = arith.addf %1097, %1098 : vector<2x16xf32>
    %1106 = arith.addf %1099, %1100 : vector<2x16xf32>
    %1107 = arith.addf %1101, %1102 : vector<2x16xf32>
    %1108 = arith.addf %1103, %1104 : vector<2x16xf32>
    %1109 = arith.addf %1105, %1106 : vector<2x16xf32>
    %1110 = arith.addf %1107, %1108 : vector<2x16xf32>
    %1111 = arith.addf %1109, %1110 : vector<2x16xf32>
    %c14_i32_249 = arith.constant 14 : i32
    %1112 = tpu.dynamic_rotate %1111 by %c14_i32_249 dim 1 : vector<2x16xf32>, i32 -> vector<2x16xf32>
    %1113 = arith.addf %1111, %1112 : vector<2x16xf32>
    %c6_250 = arith.constant 6 : index
    %1114 = memref.load %arg4[%c6_250] : memref<12xf32, #tpu.memory_space<smem>>
    %1115 = vector.broadcast %1114 : f32 to vector<2x16xf32>
    %1116 = arith.addf %1113, %1115 : vector<2x16xf32>
    %cst_251 = arith.constant 0.000000e+00 : f32
    %1117 = vector.broadcast %cst_251 : f32 to vector<2x16xf32>
    %1118 = arith.cmpf ogt, %1116, %1117 : vector<2x16xf32>
    %c6_252 = arith.constant 6 : index
    %1119 = memref.load %arg5[%c6_252] : memref<12xf32, #tpu.memory_space<smem>>
    %1120 = vector.broadcast %1119 : f32 to vector<2x16xf32>
    %1121 = arith.mulf %1120, %1116 : vector<2x16xf32>
    %1122 = arith.select %1118, %1116, %1121 : vector<2x16xi1>, vector<2x16xf32>
    %1123 = arith.mulf %807, %528 : vector<2x16xf32>
    %1124 = arith.mulf %814, %554 : vector<2x16xf32>
    %1125 = arith.mulf %821, %580 : vector<2x16xf32>
    %1126 = arith.mulf %828, %606 : vector<2x16xf32>
    %1127 = arith.mulf %919, %632 : vector<2x16xf32>
    %1128 = arith.mulf %926, %658 : vector<2x16xf32>
    %1129 = arith.mulf %933, %684 : vector<2x16xf32>
    %1130 = arith.mulf %940, %710 : vector<2x16xf32>
    %1131 = arith.addf %1123, %1124 : vector<2x16xf32>
    %1132 = arith.addf %1125, %1126 : vector<2x16xf32>
    %1133 = arith.addf %1127, %1128 : vector<2x16xf32>
    %1134 = arith.addf %1129, %1130 : vector<2x16xf32>
    %1135 = arith.addf %1131, %1132 : vector<2x16xf32>
    %1136 = arith.addf %1133, %1134 : vector<2x16xf32>
    %1137 = arith.addf %1135, %1136 : vector<2x16xf32>
    %c14_i32_253 = arith.constant 14 : i32
    %1138 = tpu.dynamic_rotate %1137 by %c14_i32_253 dim 1 : vector<2x16xf32>, i32 -> vector<2x16xf32>
    %1139 = arith.addf %1137, %1138 : vector<2x16xf32>
    %c7_254 = arith.constant 7 : index
    %1140 = memref.load %arg4[%c7_254] : memref<12xf32, #tpu.memory_space<smem>>
    %1141 = vector.broadcast %1140 : f32 to vector<2x16xf32>
    %1142 = arith.addf %1139, %1141 : vector<2x16xf32>
    %cst_255 = arith.constant 0.000000e+00 : f32
    %1143 = vector.broadcast %cst_255 : f32 to vector<2x16xf32>
    %1144 = arith.cmpf ogt, %1142, %1143 : vector<2x16xf32>
    %c7_256 = arith.constant 7 : index
    %1145 = memref.load %arg5[%c7_256] : memref<12xf32, #tpu.memory_space<smem>>
    %1146 = vector.broadcast %1145 : f32 to vector<2x16xf32>
    %1147 = arith.mulf %1146, %1142 : vector<2x16xf32>
    %1148 = arith.select %1144, %1142, %1147 : vector<2x16xi1>, vector<2x16xf32>
    %c2_i32 = arith.constant 2 : i32
    %1149 = vector.broadcast %c2_i32 : i32 to vector<1x16xi32>
    %1150 = arith.shrsi %0, %1149 : vector<1x16xi32>
    %c1_i32_257 = arith.constant 1 : i32
    %1151 = vector.broadcast %c1_i32_257 : i32 to vector<1x16xi32>
    %1152 = arith.andi %1150, %1151 : vector<1x16xi32>
    %c0_i32_258 = arith.constant 0 : i32
    %1153 = vector.broadcast %c0_i32_258 : i32 to vector<1x16xi32>
    %1154 = arith.cmpi eq, %1152, %1153 : vector<1x16xi32>
    %c128 = arith.constant 128 : index
    %1155 = memref.load %arg3[%c128] : memref<192xf32, #tpu.memory_space<smem>>
    %c144 = arith.constant 144 : index
    %1156 = memref.load %arg3[%c144] : memref<192xf32, #tpu.memory_space<smem>>
    %1157 = vector.broadcast %1155 : f32 to vector<1x16xf32>
    %1158 = vector.broadcast %1156 : f32 to vector<1x16xf32>
    %1159 = arith.select %1154, %1157, %1158 : vector<1x16xi1>, vector<1x16xf32>
    %1160 = vector.shape_cast %1159 : vector<1x16xf32> to vector<1x16xf32>
    %1161 = vector.broadcast %1160 : vector<1x16xf32> to vector<2x16xf32>
    %c129 = arith.constant 129 : index
    %1162 = memref.load %arg3[%c129] : memref<192xf32, #tpu.memory_space<smem>>
    %c145 = arith.constant 145 : index
    %1163 = memref.load %arg3[%c145] : memref<192xf32, #tpu.memory_space<smem>>
    %1164 = vector.broadcast %1162 : f32 to vector<1x16xf32>
    %1165 = vector.broadcast %1163 : f32 to vector<1x16xf32>
    %1166 = arith.select %1154, %1164, %1165 : vector<1x16xi1>, vector<1x16xf32>
    %1167 = vector.shape_cast %1166 : vector<1x16xf32> to vector<1x16xf32>
    %1168 = vector.broadcast %1167 : vector<1x16xf32> to vector<2x16xf32>
    %c130 = arith.constant 130 : index
    %1169 = memref.load %arg3[%c130] : memref<192xf32, #tpu.memory_space<smem>>
    %c146 = arith.constant 146 : index
    %1170 = memref.load %arg3[%c146] : memref<192xf32, #tpu.memory_space<smem>>
    %1171 = vector.broadcast %1169 : f32 to vector<1x16xf32>
    %1172 = vector.broadcast %1170 : f32 to vector<1x16xf32>
    %1173 = arith.select %1154, %1171, %1172 : vector<1x16xi1>, vector<1x16xf32>
    %1174 = vector.shape_cast %1173 : vector<1x16xf32> to vector<1x16xf32>
    %1175 = vector.broadcast %1174 : vector<1x16xf32> to vector<2x16xf32>
    %c131 = arith.constant 131 : index
    %1176 = memref.load %arg3[%c131] : memref<192xf32, #tpu.memory_space<smem>>
    %c147 = arith.constant 147 : index
    %1177 = memref.load %arg3[%c147] : memref<192xf32, #tpu.memory_space<smem>>
    %1178 = vector.broadcast %1176 : f32 to vector<1x16xf32>
    %1179 = vector.broadcast %1177 : f32 to vector<1x16xf32>
    %1180 = arith.select %1154, %1178, %1179 : vector<1x16xi1>, vector<1x16xf32>
    %1181 = vector.shape_cast %1180 : vector<1x16xf32> to vector<1x16xf32>
    %1182 = vector.broadcast %1181 : vector<1x16xf32> to vector<2x16xf32>
    %c132 = arith.constant 132 : index
    %1183 = memref.load %arg3[%c132] : memref<192xf32, #tpu.memory_space<smem>>
    %c148 = arith.constant 148 : index
    %1184 = memref.load %arg3[%c148] : memref<192xf32, #tpu.memory_space<smem>>
    %1185 = vector.broadcast %1183 : f32 to vector<1x16xf32>
    %1186 = vector.broadcast %1184 : f32 to vector<1x16xf32>
    %1187 = arith.select %1154, %1185, %1186 : vector<1x16xi1>, vector<1x16xf32>
    %1188 = vector.shape_cast %1187 : vector<1x16xf32> to vector<1x16xf32>
    %1189 = vector.broadcast %1188 : vector<1x16xf32> to vector<2x16xf32>
    %c133 = arith.constant 133 : index
    %1190 = memref.load %arg3[%c133] : memref<192xf32, #tpu.memory_space<smem>>
    %c149 = arith.constant 149 : index
    %1191 = memref.load %arg3[%c149] : memref<192xf32, #tpu.memory_space<smem>>
    %1192 = vector.broadcast %1190 : f32 to vector<1x16xf32>
    %1193 = vector.broadcast %1191 : f32 to vector<1x16xf32>
    %1194 = arith.select %1154, %1192, %1193 : vector<1x16xi1>, vector<1x16xf32>
    %1195 = vector.shape_cast %1194 : vector<1x16xf32> to vector<1x16xf32>
    %1196 = vector.broadcast %1195 : vector<1x16xf32> to vector<2x16xf32>
    %c134 = arith.constant 134 : index
    %1197 = memref.load %arg3[%c134] : memref<192xf32, #tpu.memory_space<smem>>
    %c150 = arith.constant 150 : index
    %1198 = memref.load %arg3[%c150] : memref<192xf32, #tpu.memory_space<smem>>
    %1199 = vector.broadcast %1197 : f32 to vector<1x16xf32>
    %1200 = vector.broadcast %1198 : f32 to vector<1x16xf32>
    %1201 = arith.select %1154, %1199, %1200 : vector<1x16xi1>, vector<1x16xf32>
    %1202 = vector.shape_cast %1201 : vector<1x16xf32> to vector<1x16xf32>
    %1203 = vector.broadcast %1202 : vector<1x16xf32> to vector<2x16xf32>
    %c135 = arith.constant 135 : index
    %1204 = memref.load %arg3[%c135] : memref<192xf32, #tpu.memory_space<smem>>
    %c151 = arith.constant 151 : index
    %1205 = memref.load %arg3[%c151] : memref<192xf32, #tpu.memory_space<smem>>
    %1206 = vector.broadcast %1204 : f32 to vector<1x16xf32>
    %1207 = vector.broadcast %1205 : f32 to vector<1x16xf32>
    %1208 = arith.select %1154, %1206, %1207 : vector<1x16xi1>, vector<1x16xf32>
    %1209 = vector.shape_cast %1208 : vector<1x16xf32> to vector<1x16xf32>
    %1210 = vector.broadcast %1209 : vector<1x16xf32> to vector<2x16xf32>
    %c136 = arith.constant 136 : index
    %1211 = memref.load %arg3[%c136] : memref<192xf32, #tpu.memory_space<smem>>
    %c152 = arith.constant 152 : index
    %1212 = memref.load %arg3[%c152] : memref<192xf32, #tpu.memory_space<smem>>
    %1213 = vector.broadcast %1211 : f32 to vector<1x16xf32>
    %1214 = vector.broadcast %1212 : f32 to vector<1x16xf32>
    %1215 = arith.select %1154, %1213, %1214 : vector<1x16xi1>, vector<1x16xf32>
    %1216 = vector.shape_cast %1215 : vector<1x16xf32> to vector<1x16xf32>
    %1217 = vector.broadcast %1216 : vector<1x16xf32> to vector<2x16xf32>
    %c137 = arith.constant 137 : index
    %1218 = memref.load %arg3[%c137] : memref<192xf32, #tpu.memory_space<smem>>
    %c153 = arith.constant 153 : index
    %1219 = memref.load %arg3[%c153] : memref<192xf32, #tpu.memory_space<smem>>
    %1220 = vector.broadcast %1218 : f32 to vector<1x16xf32>
    %1221 = vector.broadcast %1219 : f32 to vector<1x16xf32>
    %1222 = arith.select %1154, %1220, %1221 : vector<1x16xi1>, vector<1x16xf32>
    %1223 = vector.shape_cast %1222 : vector<1x16xf32> to vector<1x16xf32>
    %1224 = vector.broadcast %1223 : vector<1x16xf32> to vector<2x16xf32>
    %c138 = arith.constant 138 : index
    %1225 = memref.load %arg3[%c138] : memref<192xf32, #tpu.memory_space<smem>>
    %c154 = arith.constant 154 : index
    %1226 = memref.load %arg3[%c154] : memref<192xf32, #tpu.memory_space<smem>>
    %1227 = vector.broadcast %1225 : f32 to vector<1x16xf32>
    %1228 = vector.broadcast %1226 : f32 to vector<1x16xf32>
    %1229 = arith.select %1154, %1227, %1228 : vector<1x16xi1>, vector<1x16xf32>
    %1230 = vector.shape_cast %1229 : vector<1x16xf32> to vector<1x16xf32>
    %1231 = vector.broadcast %1230 : vector<1x16xf32> to vector<2x16xf32>
    %c139 = arith.constant 139 : index
    %1232 = memref.load %arg3[%c139] : memref<192xf32, #tpu.memory_space<smem>>
    %c155 = arith.constant 155 : index
    %1233 = memref.load %arg3[%c155] : memref<192xf32, #tpu.memory_space<smem>>
    %1234 = vector.broadcast %1232 : f32 to vector<1x16xf32>
    %1235 = vector.broadcast %1233 : f32 to vector<1x16xf32>
    %1236 = arith.select %1154, %1234, %1235 : vector<1x16xi1>, vector<1x16xf32>
    %1237 = vector.shape_cast %1236 : vector<1x16xf32> to vector<1x16xf32>
    %1238 = vector.broadcast %1237 : vector<1x16xf32> to vector<2x16xf32>
    %c140 = arith.constant 140 : index
    %1239 = memref.load %arg3[%c140] : memref<192xf32, #tpu.memory_space<smem>>
    %c156 = arith.constant 156 : index
    %1240 = memref.load %arg3[%c156] : memref<192xf32, #tpu.memory_space<smem>>
    %1241 = vector.broadcast %1239 : f32 to vector<1x16xf32>
    %1242 = vector.broadcast %1240 : f32 to vector<1x16xf32>
    %1243 = arith.select %1154, %1241, %1242 : vector<1x16xi1>, vector<1x16xf32>
    %1244 = vector.shape_cast %1243 : vector<1x16xf32> to vector<1x16xf32>
    %1245 = vector.broadcast %1244 : vector<1x16xf32> to vector<2x16xf32>
    %c141 = arith.constant 141 : index
    %1246 = memref.load %arg3[%c141] : memref<192xf32, #tpu.memory_space<smem>>
    %c157 = arith.constant 157 : index
    %1247 = memref.load %arg3[%c157] : memref<192xf32, #tpu.memory_space<smem>>
    %1248 = vector.broadcast %1246 : f32 to vector<1x16xf32>
    %1249 = vector.broadcast %1247 : f32 to vector<1x16xf32>
    %1250 = arith.select %1154, %1248, %1249 : vector<1x16xi1>, vector<1x16xf32>
    %1251 = vector.shape_cast %1250 : vector<1x16xf32> to vector<1x16xf32>
    %1252 = vector.broadcast %1251 : vector<1x16xf32> to vector<2x16xf32>
    %c142 = arith.constant 142 : index
    %1253 = memref.load %arg3[%c142] : memref<192xf32, #tpu.memory_space<smem>>
    %c158 = arith.constant 158 : index
    %1254 = memref.load %arg3[%c158] : memref<192xf32, #tpu.memory_space<smem>>
    %1255 = vector.broadcast %1253 : f32 to vector<1x16xf32>
    %1256 = vector.broadcast %1254 : f32 to vector<1x16xf32>
    %1257 = arith.select %1154, %1255, %1256 : vector<1x16xi1>, vector<1x16xf32>
    %1258 = vector.shape_cast %1257 : vector<1x16xf32> to vector<1x16xf32>
    %1259 = vector.broadcast %1258 : vector<1x16xf32> to vector<2x16xf32>
    %c143 = arith.constant 143 : index
    %1260 = memref.load %arg3[%c143] : memref<192xf32, #tpu.memory_space<smem>>
    %c159 = arith.constant 159 : index
    %1261 = memref.load %arg3[%c159] : memref<192xf32, #tpu.memory_space<smem>>
    %1262 = vector.broadcast %1260 : f32 to vector<1x16xf32>
    %1263 = vector.broadcast %1261 : f32 to vector<1x16xf32>
    %1264 = arith.select %1154, %1262, %1263 : vector<1x16xi1>, vector<1x16xf32>
    %1265 = vector.shape_cast %1264 : vector<1x16xf32> to vector<1x16xf32>
    %1266 = vector.broadcast %1265 : vector<1x16xf32> to vector<2x16xf32>
    %c160 = arith.constant 160 : index
    %1267 = memref.load %arg3[%c160] : memref<192xf32, #tpu.memory_space<smem>>
    %c176 = arith.constant 176 : index
    %1268 = memref.load %arg3[%c176] : memref<192xf32, #tpu.memory_space<smem>>
    %1269 = vector.broadcast %1267 : f32 to vector<1x16xf32>
    %1270 = vector.broadcast %1268 : f32 to vector<1x16xf32>
    %1271 = arith.select %1154, %1269, %1270 : vector<1x16xi1>, vector<1x16xf32>
    %1272 = vector.shape_cast %1271 : vector<1x16xf32> to vector<1x16xf32>
    %1273 = vector.broadcast %1272 : vector<1x16xf32> to vector<2x16xf32>
    %c161 = arith.constant 161 : index
    %1274 = memref.load %arg3[%c161] : memref<192xf32, #tpu.memory_space<smem>>
    %c177 = arith.constant 177 : index
    %1275 = memref.load %arg3[%c177] : memref<192xf32, #tpu.memory_space<smem>>
    %1276 = vector.broadcast %1274 : f32 to vector<1x16xf32>
    %1277 = vector.broadcast %1275 : f32 to vector<1x16xf32>
    %1278 = arith.select %1154, %1276, %1277 : vector<1x16xi1>, vector<1x16xf32>
    %1279 = vector.shape_cast %1278 : vector<1x16xf32> to vector<1x16xf32>
    %1280 = vector.broadcast %1279 : vector<1x16xf32> to vector<2x16xf32>
    %c162 = arith.constant 162 : index
    %1281 = memref.load %arg3[%c162] : memref<192xf32, #tpu.memory_space<smem>>
    %c178 = arith.constant 178 : index
    %1282 = memref.load %arg3[%c178] : memref<192xf32, #tpu.memory_space<smem>>
    %1283 = vector.broadcast %1281 : f32 to vector<1x16xf32>
    %1284 = vector.broadcast %1282 : f32 to vector<1x16xf32>
    %1285 = arith.select %1154, %1283, %1284 : vector<1x16xi1>, vector<1x16xf32>
    %1286 = vector.shape_cast %1285 : vector<1x16xf32> to vector<1x16xf32>
    %1287 = vector.broadcast %1286 : vector<1x16xf32> to vector<2x16xf32>
    %c163 = arith.constant 163 : index
    %1288 = memref.load %arg3[%c163] : memref<192xf32, #tpu.memory_space<smem>>
    %c179 = arith.constant 179 : index
    %1289 = memref.load %arg3[%c179] : memref<192xf32, #tpu.memory_space<smem>>
    %1290 = vector.broadcast %1288 : f32 to vector<1x16xf32>
    %1291 = vector.broadcast %1289 : f32 to vector<1x16xf32>
    %1292 = arith.select %1154, %1290, %1291 : vector<1x16xi1>, vector<1x16xf32>
    %1293 = vector.shape_cast %1292 : vector<1x16xf32> to vector<1x16xf32>
    %1294 = vector.broadcast %1293 : vector<1x16xf32> to vector<2x16xf32>
    %c164 = arith.constant 164 : index
    %1295 = memref.load %arg3[%c164] : memref<192xf32, #tpu.memory_space<smem>>
    %c180 = arith.constant 180 : index
    %1296 = memref.load %arg3[%c180] : memref<192xf32, #tpu.memory_space<smem>>
    %1297 = vector.broadcast %1295 : f32 to vector<1x16xf32>
    %1298 = vector.broadcast %1296 : f32 to vector<1x16xf32>
    %1299 = arith.select %1154, %1297, %1298 : vector<1x16xi1>, vector<1x16xf32>
    %1300 = vector.shape_cast %1299 : vector<1x16xf32> to vector<1x16xf32>
    %1301 = vector.broadcast %1300 : vector<1x16xf32> to vector<2x16xf32>
    %c165 = arith.constant 165 : index
    %1302 = memref.load %arg3[%c165] : memref<192xf32, #tpu.memory_space<smem>>
    %c181 = arith.constant 181 : index
    %1303 = memref.load %arg3[%c181] : memref<192xf32, #tpu.memory_space<smem>>
    %1304 = vector.broadcast %1302 : f32 to vector<1x16xf32>
    %1305 = vector.broadcast %1303 : f32 to vector<1x16xf32>
    %1306 = arith.select %1154, %1304, %1305 : vector<1x16xi1>, vector<1x16xf32>
    %1307 = vector.shape_cast %1306 : vector<1x16xf32> to vector<1x16xf32>
    %1308 = vector.broadcast %1307 : vector<1x16xf32> to vector<2x16xf32>
    %c166 = arith.constant 166 : index
    %1309 = memref.load %arg3[%c166] : memref<192xf32, #tpu.memory_space<smem>>
    %c182 = arith.constant 182 : index
    %1310 = memref.load %arg3[%c182] : memref<192xf32, #tpu.memory_space<smem>>
    %1311 = vector.broadcast %1309 : f32 to vector<1x16xf32>
    %1312 = vector.broadcast %1310 : f32 to vector<1x16xf32>
    %1313 = arith.select %1154, %1311, %1312 : vector<1x16xi1>, vector<1x16xf32>
    %1314 = vector.shape_cast %1313 : vector<1x16xf32> to vector<1x16xf32>
    %1315 = vector.broadcast %1314 : vector<1x16xf32> to vector<2x16xf32>
    %c167 = arith.constant 167 : index
    %1316 = memref.load %arg3[%c167] : memref<192xf32, #tpu.memory_space<smem>>
    %c183 = arith.constant 183 : index
    %1317 = memref.load %arg3[%c183] : memref<192xf32, #tpu.memory_space<smem>>
    %1318 = vector.broadcast %1316 : f32 to vector<1x16xf32>
    %1319 = vector.broadcast %1317 : f32 to vector<1x16xf32>
    %1320 = arith.select %1154, %1318, %1319 : vector<1x16xi1>, vector<1x16xf32>
    %1321 = vector.shape_cast %1320 : vector<1x16xf32> to vector<1x16xf32>
    %1322 = vector.broadcast %1321 : vector<1x16xf32> to vector<2x16xf32>
    %c168 = arith.constant 168 : index
    %1323 = memref.load %arg3[%c168] : memref<192xf32, #tpu.memory_space<smem>>
    %c184 = arith.constant 184 : index
    %1324 = memref.load %arg3[%c184] : memref<192xf32, #tpu.memory_space<smem>>
    %1325 = vector.broadcast %1323 : f32 to vector<1x16xf32>
    %1326 = vector.broadcast %1324 : f32 to vector<1x16xf32>
    %1327 = arith.select %1154, %1325, %1326 : vector<1x16xi1>, vector<1x16xf32>
    %1328 = vector.shape_cast %1327 : vector<1x16xf32> to vector<1x16xf32>
    %1329 = vector.broadcast %1328 : vector<1x16xf32> to vector<2x16xf32>
    %c169 = arith.constant 169 : index
    %1330 = memref.load %arg3[%c169] : memref<192xf32, #tpu.memory_space<smem>>
    %c185 = arith.constant 185 : index
    %1331 = memref.load %arg3[%c185] : memref<192xf32, #tpu.memory_space<smem>>
    %1332 = vector.broadcast %1330 : f32 to vector<1x16xf32>
    %1333 = vector.broadcast %1331 : f32 to vector<1x16xf32>
    %1334 = arith.select %1154, %1332, %1333 : vector<1x16xi1>, vector<1x16xf32>
    %1335 = vector.shape_cast %1334 : vector<1x16xf32> to vector<1x16xf32>
    %1336 = vector.broadcast %1335 : vector<1x16xf32> to vector<2x16xf32>
    %c170 = arith.constant 170 : index
    %1337 = memref.load %arg3[%c170] : memref<192xf32, #tpu.memory_space<smem>>
    %c186 = arith.constant 186 : index
    %1338 = memref.load %arg3[%c186] : memref<192xf32, #tpu.memory_space<smem>>
    %1339 = vector.broadcast %1337 : f32 to vector<1x16xf32>
    %1340 = vector.broadcast %1338 : f32 to vector<1x16xf32>
    %1341 = arith.select %1154, %1339, %1340 : vector<1x16xi1>, vector<1x16xf32>
    %1342 = vector.shape_cast %1341 : vector<1x16xf32> to vector<1x16xf32>
    %1343 = vector.broadcast %1342 : vector<1x16xf32> to vector<2x16xf32>
    %c171 = arith.constant 171 : index
    %1344 = memref.load %arg3[%c171] : memref<192xf32, #tpu.memory_space<smem>>
    %c187 = arith.constant 187 : index
    %1345 = memref.load %arg3[%c187] : memref<192xf32, #tpu.memory_space<smem>>
    %1346 = vector.broadcast %1344 : f32 to vector<1x16xf32>
    %1347 = vector.broadcast %1345 : f32 to vector<1x16xf32>
    %1348 = arith.select %1154, %1346, %1347 : vector<1x16xi1>, vector<1x16xf32>
    %1349 = vector.shape_cast %1348 : vector<1x16xf32> to vector<1x16xf32>
    %1350 = vector.broadcast %1349 : vector<1x16xf32> to vector<2x16xf32>
    %c172 = arith.constant 172 : index
    %1351 = memref.load %arg3[%c172] : memref<192xf32, #tpu.memory_space<smem>>
    %c188 = arith.constant 188 : index
    %1352 = memref.load %arg3[%c188] : memref<192xf32, #tpu.memory_space<smem>>
    %1353 = vector.broadcast %1351 : f32 to vector<1x16xf32>
    %1354 = vector.broadcast %1352 : f32 to vector<1x16xf32>
    %1355 = arith.select %1154, %1353, %1354 : vector<1x16xi1>, vector<1x16xf32>
    %1356 = vector.shape_cast %1355 : vector<1x16xf32> to vector<1x16xf32>
    %1357 = vector.broadcast %1356 : vector<1x16xf32> to vector<2x16xf32>
    %c173 = arith.constant 173 : index
    %1358 = memref.load %arg3[%c173] : memref<192xf32, #tpu.memory_space<smem>>
    %c189 = arith.constant 189 : index
    %1359 = memref.load %arg3[%c189] : memref<192xf32, #tpu.memory_space<smem>>
    %1360 = vector.broadcast %1358 : f32 to vector<1x16xf32>
    %1361 = vector.broadcast %1359 : f32 to vector<1x16xf32>
    %1362 = arith.select %1154, %1360, %1361 : vector<1x16xi1>, vector<1x16xf32>
    %1363 = vector.shape_cast %1362 : vector<1x16xf32> to vector<1x16xf32>
    %1364 = vector.broadcast %1363 : vector<1x16xf32> to vector<2x16xf32>
    %c174 = arith.constant 174 : index
    %1365 = memref.load %arg3[%c174] : memref<192xf32, #tpu.memory_space<smem>>
    %c190 = arith.constant 190 : index
    %1366 = memref.load %arg3[%c190] : memref<192xf32, #tpu.memory_space<smem>>
    %1367 = vector.broadcast %1365 : f32 to vector<1x16xf32>
    %1368 = vector.broadcast %1366 : f32 to vector<1x16xf32>
    %1369 = arith.select %1154, %1367, %1368 : vector<1x16xi1>, vector<1x16xf32>
    %1370 = vector.shape_cast %1369 : vector<1x16xf32> to vector<1x16xf32>
    %1371 = vector.broadcast %1370 : vector<1x16xf32> to vector<2x16xf32>
    %c175 = arith.constant 175 : index
    %1372 = memref.load %arg3[%c175] : memref<192xf32, #tpu.memory_space<smem>>
    %c191 = arith.constant 191 : index
    %1373 = memref.load %arg3[%c191] : memref<192xf32, #tpu.memory_space<smem>>
    %1374 = vector.broadcast %1372 : f32 to vector<1x16xf32>
    %1375 = vector.broadcast %1373 : f32 to vector<1x16xf32>
    %1376 = arith.select %1154, %1374, %1375 : vector<1x16xi1>, vector<1x16xf32>
    %1377 = vector.shape_cast %1376 : vector<1x16xf32> to vector<1x16xf32>
    %1378 = vector.broadcast %1377 : vector<1x16xf32> to vector<2x16xf32>
    %1379 = arith.mulf %1161, %966 : vector<2x16xf32>
    %1380 = arith.mulf %1168, %992 : vector<2x16xf32>
    %1381 = arith.mulf %1175, %1018 : vector<2x16xf32>
    %1382 = arith.mulf %1182, %1044 : vector<2x16xf32>
    %1383 = arith.mulf %1273, %1070 : vector<2x16xf32>
    %1384 = arith.mulf %1280, %1096 : vector<2x16xf32>
    %1385 = arith.mulf %1287, %1122 : vector<2x16xf32>
    %1386 = arith.mulf %1294, %1148 : vector<2x16xf32>
    %1387 = arith.addf %1379, %1380 : vector<2x16xf32>
    %1388 = arith.addf %1381, %1382 : vector<2x16xf32>
    %1389 = arith.addf %1383, %1384 : vector<2x16xf32>
    %1390 = arith.addf %1385, %1386 : vector<2x16xf32>
    %1391 = arith.addf %1387, %1388 : vector<2x16xf32>
    %1392 = arith.addf %1389, %1390 : vector<2x16xf32>
    %1393 = arith.addf %1391, %1392 : vector<2x16xf32>
    %c12_i32 = arith.constant 12 : i32
    %1394 = tpu.dynamic_rotate %1393 by %c12_i32 dim 1 : vector<2x16xf32>, i32 -> vector<2x16xf32>
    %1395 = arith.addf %1393, %1394 : vector<2x16xf32>
    %c8_259 = arith.constant 8 : index
    %1396 = memref.load %arg4[%c8_259] : memref<12xf32, #tpu.memory_space<smem>>
    %1397 = vector.broadcast %1396 : f32 to vector<2x16xf32>
    %1398 = arith.addf %1395, %1397 : vector<2x16xf32>
    %cst_260 = arith.constant 0.000000e+00 : f32
    %1399 = vector.broadcast %cst_260 : f32 to vector<2x16xf32>
    %1400 = arith.cmpf ogt, %1398, %1399 : vector<2x16xf32>
    %c8_261 = arith.constant 8 : index
    %1401 = memref.load %arg5[%c8_261] : memref<12xf32, #tpu.memory_space<smem>>
    %1402 = vector.broadcast %1401 : f32 to vector<2x16xf32>
    %1403 = arith.mulf %1402, %1398 : vector<2x16xf32>
    %1404 = arith.select %1400, %1398, %1403 : vector<2x16xi1>, vector<2x16xf32>
    %1405 = arith.mulf %1189, %966 : vector<2x16xf32>
    %1406 = arith.mulf %1196, %992 : vector<2x16xf32>
    %1407 = arith.mulf %1203, %1018 : vector<2x16xf32>
    %1408 = arith.mulf %1210, %1044 : vector<2x16xf32>
    %1409 = arith.mulf %1301, %1070 : vector<2x16xf32>
    %1410 = arith.mulf %1308, %1096 : vector<2x16xf32>
    %1411 = arith.mulf %1315, %1122 : vector<2x16xf32>
    %1412 = arith.mulf %1322, %1148 : vector<2x16xf32>
    %1413 = arith.addf %1405, %1406 : vector<2x16xf32>
    %1414 = arith.addf %1407, %1408 : vector<2x16xf32>
    %1415 = arith.addf %1409, %1410 : vector<2x16xf32>
    %1416 = arith.addf %1411, %1412 : vector<2x16xf32>
    %1417 = arith.addf %1413, %1414 : vector<2x16xf32>
    %1418 = arith.addf %1415, %1416 : vector<2x16xf32>
    %1419 = arith.addf %1417, %1418 : vector<2x16xf32>
    %c12_i32_262 = arith.constant 12 : i32
    %1420 = tpu.dynamic_rotate %1419 by %c12_i32_262 dim 1 : vector<2x16xf32>, i32 -> vector<2x16xf32>
    %1421 = arith.addf %1419, %1420 : vector<2x16xf32>
    %c9_263 = arith.constant 9 : index
    %1422 = memref.load %arg4[%c9_263] : memref<12xf32, #tpu.memory_space<smem>>
    %1423 = vector.broadcast %1422 : f32 to vector<2x16xf32>
    %1424 = arith.addf %1421, %1423 : vector<2x16xf32>
    %cst_264 = arith.constant 0.000000e+00 : f32
    %1425 = vector.broadcast %cst_264 : f32 to vector<2x16xf32>
    %1426 = arith.cmpf ogt, %1424, %1425 : vector<2x16xf32>
    %c9_265 = arith.constant 9 : index
    %1427 = memref.load %arg5[%c9_265] : memref<12xf32, #tpu.memory_space<smem>>
    %1428 = vector.broadcast %1427 : f32 to vector<2x16xf32>
    %1429 = arith.mulf %1428, %1424 : vector<2x16xf32>
    %1430 = arith.select %1426, %1424, %1429 : vector<2x16xi1>, vector<2x16xf32>
    %1431 = arith.mulf %1217, %966 : vector<2x16xf32>
    %1432 = arith.mulf %1224, %992 : vector<2x16xf32>
    %1433 = arith.mulf %1231, %1018 : vector<2x16xf32>
    %1434 = arith.mulf %1238, %1044 : vector<2x16xf32>
    %1435 = arith.mulf %1329, %1070 : vector<2x16xf32>
    %1436 = arith.mulf %1336, %1096 : vector<2x16xf32>
    %1437 = arith.mulf %1343, %1122 : vector<2x16xf32>
    %1438 = arith.mulf %1350, %1148 : vector<2x16xf32>
    %1439 = arith.addf %1431, %1432 : vector<2x16xf32>
    %1440 = arith.addf %1433, %1434 : vector<2x16xf32>
    %1441 = arith.addf %1435, %1436 : vector<2x16xf32>
    %1442 = arith.addf %1437, %1438 : vector<2x16xf32>
    %1443 = arith.addf %1439, %1440 : vector<2x16xf32>
    %1444 = arith.addf %1441, %1442 : vector<2x16xf32>
    %1445 = arith.addf %1443, %1444 : vector<2x16xf32>
    %c12_i32_266 = arith.constant 12 : i32
    %1446 = tpu.dynamic_rotate %1445 by %c12_i32_266 dim 1 : vector<2x16xf32>, i32 -> vector<2x16xf32>
    %1447 = arith.addf %1445, %1446 : vector<2x16xf32>
    %c10_267 = arith.constant 10 : index
    %1448 = memref.load %arg4[%c10_267] : memref<12xf32, #tpu.memory_space<smem>>
    %1449 = vector.broadcast %1448 : f32 to vector<2x16xf32>
    %1450 = arith.addf %1447, %1449 : vector<2x16xf32>
    %cst_268 = arith.constant 0.000000e+00 : f32
    %1451 = vector.broadcast %cst_268 : f32 to vector<2x16xf32>
    %1452 = arith.cmpf ogt, %1450, %1451 : vector<2x16xf32>
    %c10_269 = arith.constant 10 : index
    %1453 = memref.load %arg5[%c10_269] : memref<12xf32, #tpu.memory_space<smem>>
    %1454 = vector.broadcast %1453 : f32 to vector<2x16xf32>
    %1455 = arith.mulf %1454, %1450 : vector<2x16xf32>
    %1456 = arith.select %1452, %1450, %1455 : vector<2x16xi1>, vector<2x16xf32>
    %1457 = arith.mulf %1245, %966 : vector<2x16xf32>
    %1458 = arith.mulf %1252, %992 : vector<2x16xf32>
    %1459 = arith.mulf %1259, %1018 : vector<2x16xf32>
    %1460 = arith.mulf %1266, %1044 : vector<2x16xf32>
    %1461 = arith.mulf %1357, %1070 : vector<2x16xf32>
    %1462 = arith.mulf %1364, %1096 : vector<2x16xf32>
    %1463 = arith.mulf %1371, %1122 : vector<2x16xf32>
    %1464 = arith.mulf %1378, %1148 : vector<2x16xf32>
    %1465 = arith.addf %1457, %1458 : vector<2x16xf32>
    %1466 = arith.addf %1459, %1460 : vector<2x16xf32>
    %1467 = arith.addf %1461, %1462 : vector<2x16xf32>
    %1468 = arith.addf %1463, %1464 : vector<2x16xf32>
    %1469 = arith.addf %1465, %1466 : vector<2x16xf32>
    %1470 = arith.addf %1467, %1468 : vector<2x16xf32>
    %1471 = arith.addf %1469, %1470 : vector<2x16xf32>
    %c12_i32_270 = arith.constant 12 : i32
    %1472 = tpu.dynamic_rotate %1471 by %c12_i32_270 dim 1 : vector<2x16xf32>, i32 -> vector<2x16xf32>
    %1473 = arith.addf %1471, %1472 : vector<2x16xf32>
    %c11_271 = arith.constant 11 : index
    %1474 = memref.load %arg4[%c11_271] : memref<12xf32, #tpu.memory_space<smem>>
    %1475 = vector.broadcast %1474 : f32 to vector<2x16xf32>
    %1476 = arith.addf %1473, %1475 : vector<2x16xf32>
    %cst_272 = arith.constant 0.000000e+00 : f32
    %1477 = vector.broadcast %cst_272 : f32 to vector<2x16xf32>
    %1478 = arith.cmpf ogt, %1476, %1477 : vector<2x16xf32>
    %c11_273 = arith.constant 11 : index
    %1479 = memref.load %arg5[%c11_273] : memref<12xf32, #tpu.memory_space<smem>>
    %1480 = vector.broadcast %1479 : f32 to vector<2x16xf32>
    %1481 = arith.mulf %1480, %1476 : vector<2x16xf32>
    %1482 = arith.select %1478, %1476, %1481 : vector<2x16xi1>, vector<2x16xf32>
    %c0_274 = arith.constant 0 : index
    %c0_275 = arith.constant 0 : index
    %c0_276 = arith.constant 0 : index
    %c0_277 = arith.constant 0 : index
    %1483 = vector.load %arg7[%c0_274, %c0_275, %c0_276, %c0_277] : memref<1x4x2x16xf32, #tpu.memory_space<vmem>>, vector<1x1x2x16xf32>
    %1484 = vector.shape_cast %1483 : vector<1x1x2x16xf32> to vector<2x16xf32>
    %1485 = vector.shape_cast %1404 : vector<2x16xf32> to vector<1x1x2x16xf32>
    tpu.vector_store %arg7[%c0_274, %c0_275, %c0_276, %c0_277], %1485 {strides = array<i32>} : memref<1x4x2x16xf32, #tpu.memory_space<vmem>>, vector<1x1x2x16xf32>,
    %c0_278 = arith.constant 0 : index
    %c1_279 = arith.constant 1 : index
    %c0_280 = arith.constant 0 : index
    %c0_281 = arith.constant 0 : index
    %1486 = vector.load %arg7[%c0_278, %c1_279, %c0_280, %c0_281] : memref<1x4x2x16xf32, #tpu.memory_space<vmem>>, vector<1x1x2x16xf32>
    %1487 = vector.shape_cast %1486 : vector<1x1x2x16xf32> to vector<2x16xf32>
    %1488 = vector.shape_cast %1430 : vector<2x16xf32> to vector<1x1x2x16xf32>
    tpu.vector_store %arg7[%c0_278, %c1_279, %c0_280, %c0_281], %1488 {strides = array<i32>} : memref<1x4x2x16xf32, #tpu.memory_space<vmem>>, vector<1x1x2x16xf32>,
    %c0_282 = arith.constant 0 : index
    %c2_283 = arith.constant 2 : index
    %c0_284 = arith.constant 0 : index
    %c0_285 = arith.constant 0 : index
    %1489 = vector.load %arg7[%c0_282, %c2_283, %c0_284, %c0_285] : memref<1x4x2x16xf32, #tpu.memory_space<vmem>>, vector<1x1x2x16xf32>
    %1490 = vector.shape_cast %1489 : vector<1x1x2x16xf32> to vector<2x16xf32>
    %1491 = vector.shape_cast %1456 : vector<2x16xf32> to vector<1x1x2x16xf32>
    tpu.vector_store %arg7[%c0_282, %c2_283, %c0_284, %c0_285], %1491 {strides = array<i32>} : memref<1x4x2x16xf32, #tpu.memory_space<vmem>>, vector<1x1x2x16xf32>,
    %c0_286 = arith.constant 0 : index
    %c3_287 = arith.constant 3 : index
    %c0_288 = arith.constant 0 : index
    %c0_289 = arith.constant 0 : index
    %1492 = vector.load %arg7[%c0_286, %c3_287, %c0_288, %c0_289] : memref<1x4x2x16xf32, #tpu.memory_space<vmem>>, vector<1x1x2x16xf32>
    %1493 = vector.shape_cast %1492 : vector<1x1x2x16xf32> to vector<2x16xf32>
    %1494 = vector.shape_cast %1482 : vector<2x16xf32> to vector<1x1x2x16xf32>
    tpu.vector_store %arg7[%c0_286, %c3_287, %c0_288, %c0_289], %1494 {strides = array<i32>} : memref<1x4x2x16xf32, #tpu.memory_space<vmem>>, vector<1x1x2x16xf32>,
    return
  }
  func.func @transform_0(%arg0: i32, %arg1: i32, %arg2: i32) -> i32 {
    %c0_i32 = arith.constant 0 : i32
    %c0_i32_0 = arith.constant 0 : i32
    return %c0_i32 : i32
  }
  func.func @transform_1(%arg0: i32, %arg1: i32, %arg2: i32) -> i32 {
    %c0_i32 = arith.constant 0 : i32
    %c0_i32_0 = arith.constant 0 : i32
    return %c0_i32 : i32
  }
  func.func @transform_2(%arg0: i32, %arg1: i32, %arg2: i32) -> i32 {
    %c0_i32 = arith.constant 0 : i32
    %c0_i32_0 = arith.constant 0 : i32
    return %c0_i32 : i32
  }
  func.func @transform_3(%arg0: i32, %arg1: i32, %arg2: i32) -> (i32, i32, i32, i32, i32) {
    %c0_i32 = arith.constant 0 : i32
    %c0_i32_0 = arith.constant 0 : i32
    %c0_i32_1 = arith.constant 0 : i32
    return %arg0, %c0_i32, %arg1, %c0_i32_0, %arg2 : i32, i32, i32, i32, i32
  }
  func.func @transform_4(%arg0: i32, %arg1: i32, %arg2: i32) -> (i32, i32, i32, i32) {
    %c0_i32 = arith.constant 0 : i32
    %c0_i32_0 = arith.constant 0 : i32
    return %arg0, %c0_i32, %arg1, %arg2 : i32, i32, i32, i32
  }
}

</mosaic_0001>

<llo_original>
// kernel: downconv_forward.1
$region0: #{downconv_forward.1}
  #allocation0 [shape = 'u32[]', space=smem, size = 0x4, offset = 0x4, fixed_abs, tag = 'smem constant byte address 0x4 - core index']
  #allocation1 [shape = 'u32[72,128]{1,0:T(1,128)}', space=vmem, size = 0x9000, scoped, tag = 'internal scratch']
  %s0 = inlined_call_operand.hbm [shape: f32[192], index: 0, kind: input, shape index: {}]
  %s1 = inlined_call_operand.vmem [shape: f32[12], index: 1, kind: input, shape index: {}]
  %s2 = inlined_call_operand.vmem [shape: f32[12], index: 2, kind: input, shape index: {}]
  %s3 = inlined_call_operand.hbm [shape: f32[2,4,2,8,16], index: 3, kind: input, shape index: {}]
  %s4 = inlined_call_operand.vmem [shape: f32[2,4,2,16], index: 4, kind: output, shape index: {}]
  %s5 = sld [smem:[#allocation0]]
  $region65: #{downconv_forward.1} parent=0
    _
  %s7 = ssub.s32 1, %s5
  %s8 = scalar_select 0, %s7, %s5
  $region1: #{downconv_forward.1} parent=0
    #allocation2 [shape = 'u8[1024]{0}', space=smem, size = 0x400, scoped, tag = 'input window, operand 0, single buffered']
    #allocation3 [shape = 's32[2]{0}', space=sflag, size = 0x8, scoped, tag = 'scoped memory for downconv_forward.1']
    #allocation4 [shape = 's32[2]{0}', space=sflag, size = 0x8, scoped, tag = 'scoped memory for downconv_forward.1']
    #allocation5 [shape = 's32[2]{0}', space=sflag, size = 0x8, scoped, tag = 'scoped memory for downconv_forward.1']
    #allocation6 [shape = 'u8[512]{0}', space=smem, size = 0x200, scoped, tag = 'input window, operand 1, single buffered']
    #allocation7 [shape = 'u8[512]{0}', space=smem, size = 0x200, scoped, tag = 'input window, operand 2, single buffered']
    #allocation8 [shape = 's32[1]{0}', space=sflag, size = 0x4, scoped, tag = 'scoped memory for downconv_forward.1']
    #allocation9 [shape = 'u8[65536]{0}', space=vmem, size = 0x10000, scoped, tag = 'input window, operand 3']
    %9 = vsyncpa [#allocation4], 0
    %10 = vsyncpa [#allocation5], 0
    %11 = vsyncpa [#allocation8], 0
    %12 = vsyncpa [#allocation3], 0
    %s13 = scalar_lea.sflag [#allocation3], 1
    %14 = vsyncpa %s13, 0
    loop: start=0, step=1, limit=4
    $region2: #{downconv_forward.1} parent=1 // loop_pre_header
      _
    $region3: #{downconv_forward.1} parent=1 // loop_header
      %s16 = sphi 0, %s20
      %p17 = scmp.ge.s32.totalorder %s16, 4
      %s23 = sphi 0, %s42
      %s24 = sphi 0, %s38
      %s25 = sphi 0, %s34
      %s26 = sphi 0, %s23
      %s27 = sphi 0, %s24
      %s28 = sphi 0, %s25
      %s29 = sphi 0, %s26
      %s30 = sphi 0, %s27
      %s31 = sphi 0, %s28
      %s43 = sphi 0, %s43
      %s45 = sphi 0, %s43
      %s46 = sphi 0, %s45
      %s60 = sphi 0, %s46
      %s64 = sphi 0, %s64
      %s66 = sphi 0, %s64
      %s67 = sphi 0, %s66
      %s81 = sphi 0, %s67
      %s85 = sphi 0, %s85
      %s87 = sphi 0, %s85
      %s88 = sphi 0, %s87
      %s102 = sphi 0, %s88
      %s112 = sphi 0, %s114
      %s115 = sphi 0, %s112
      %s116 = sphi 0, %s115
      %s132 = sphi 0, %s116
      %s142 = sphi 0, %s144
      %s145 = sphi 0, %s142
      %s146 = sphi 0, %s145
      %s162 = sphi 0, %s146
    $region4: #{downconv_forward.1} parent=1 // loop_header_branch
      %19 = sbr.rel (%p17) target = $region8
    $region5: #{downconv_forward.1} parent=1 // loop_body
      %s21 = ssub.s32 %s16, 1
      %s22 = ssub.s32 %s16, 2
      %s32 = sadd.s32 1, %s25
      %p33 = scmp.ge.s32.totalorder %s32, 1
      %s34 = scalar_select %p33, 0, %s32
      %s35 = sadd.s32 1, %s24
      %s36 = scalar_select %p33, %s35, %s24
      %p37 = scmp.ge.s32.totalorder %s36, 1
      %s38 = scalar_select %p37, 0, %s36
      %s39 = sadd.s32 1, %s23
      %s40 = scalar_select %p37, %s39, %s23
      %p41 = scmp.ge.s32.totalorder %s40, 2
      %s42 = scalar_select %p41, 0, %s40
      %s44 = sadd.s32 %s43, 1
      %p47 = scmp.eq.s32.totalorder %s16, 1
      %p48 = scmp.ne.s32.totalorder %s43, %s45
      %p49 = scmp.eq.s32.totalorder %s16, 0
      %p50 = por %p48, %p49
      %p51 = scmp.ne.s32.totalorder %s43, %s45
      %p52 = scmp.eq.s32.totalorder %s21, 1
      %p53 = por %p51, %p52
      %p54 = scmp.ne.s32.totalorder %s45, %s46
      %p55 = scmp.eq.s32.totalorder %s21, 0
      %p56 = por %p54, %p55
      %p57 = scmp.ne.s32.totalorder %s45, %s46
      %p58 = scmp.eq.s32.totalorder %s22, 1
      %p59 = por %p57, %p58
      %p61 = scmp.ne.s32.totalorder %s46, %s60
      %p62 = scmp.eq.s32.totalorder %s22, 0
      %p63 = por %p61, %p62
      %s65 = sadd.s32 %s64, 1
      %p68 = scmp.eq.s32.totalorder %s16, 1
      %p69 = scmp.ne.s32.totalorder %s64, %s66
      %p70 = scmp.eq.s32.totalorder %s16, 0
      %p71 = por %p69, %p70
      %p72 = scmp.ne.s32.totalorder %s64, %s66
      %p73 = scmp.eq.s32.totalorder %s21, 1
      %p74 = por %p72, %p73
      %p75 = scmp.ne.s32.totalorder %s66, %s67
      %p76 = scmp.eq.s32.totalorder %s21, 0
      %p77 = por %p75, %p76
      %p78 = scmp.ne.s32.totalorder %s66, %s67
      %p79 = scmp.eq.s32.totalorder %s22, 1
      %p80 = por %p78, %p79
      %p82 = scmp.ne.s32.totalorder %s67, %s81
      %p83 = scmp.eq.s32.totalorder %s22, 0
      %p84 = por %p82, %p83
      %s86 = sadd.s32 %s85, 1
      %p89 = scmp.eq.s32.totalorder %s16, 1
      %p90 = scmp.ne.s32.totalorder %s85, %s87
      %p91 = scmp.eq.s32.totalorder %s16, 0
      %p92 = por %p90, %p91
      %p93 = scmp.ne.s32.totalorder %s85, %s87
      %p94 = scmp.eq.s32.totalorder %s21, 1
      %p95 = por %p93, %p94
      %p96 = scmp.ne.s32.totalorder %s87, %s88
      %p97 = scmp.eq.s32.totalorder %s21, 0
      %p98 = por %p96, %p97
      %p99 = scmp.ne.s32.totalorder %s87, %s88
      %p100 = scmp.eq.s32.totalorder %s22, 1
      %p101 = por %p99, %p100
      %p103 = scmp.ne.s32.totalorder %s88, %s102
      %p104 = scmp.eq.s32.totalorder %s22, 0
      %p105 = por %p103, %p104
      %s106 = ssub.s32 %s23, %s42
      %s107 = ssub.s32 %s24, %s38
      %s108 = sor.u32 %s106, %s107
      %s109 = ssub.s32 %s25, %s34
      %s110 = sor.u32 %s108, %s109
      %p111 = scmp.eq.s32.totalorder %s110, 0
      %s113 = sadd.s32 %s112, 1
      %s114 = scalar_select %p111, %s112, %s113
      %p117 = pneg %p111
      %p118 = scmp.eq.s32.totalorder %s16, 1
      %p119 = por %p117, %p118
      %p120 = scmp.ne.s32.totalorder %s112, %s115
      %p121 = scmp.eq.s32.totalorder %s16, 0
      %p122 = por %p120, %p121
      %p123 = scmp.ne.s32.totalorder %s112, %s115
      %p124 = scmp.eq.s32.totalorder %s21, 1
      %p125 = por %p123, %p124
      %p126 = scmp.ne.s32.totalorder %s115, %s116
      %p127 = scmp.eq.s32.totalorder %s21, 0
      %p128 = por %p126, %p127
      %p129 = scmp.ne.s32.totalorder %s115, %s116
      %p130 = scmp.eq.s32.totalorder %s22, 1
      %p131 = por %p129, %p130
      %p133 = scmp.ne.s32.totalorder %s116, %s132
      %p134 = scmp.eq.s32.totalorder %s22, 0
      %p135 = por %p133, %p134
      %s136 = ssub.s32 %s23, %s42
      %s137 = ssub.s32 %s24, %s38
      %s138 = sor.u32 %s136, %s137
      %s139 = ssub.s32 %s25, %s34
      %s140 = sor.u32 %s138, %s139
      %p141 = scmp.eq.s32.totalorder %s140, 0
      %s143 = sadd.s32 %s142, 1
      %s144 = scalar_select %p141, %s142, %s143
      %p147 = pneg %p141
      %p148 = scmp.eq.s32.totalorder %s16, 1
      %p149 = por %p147, %p148
      %p150 = scmp.ne.s32.totalorder %s142, %s145
      %p151 = scmp.eq.s32.totalorder %s16, 0
      %p152 = por %p150, %p151
      %p153 = scmp.ne.s32.totalorder %s142, %s145
      %p154 = scmp.eq.s32.totalorder %s21, 1
      %p155 = por %p153, %p154
      %p156 = scmp.ne.s32.totalorder %s145, %s146
      %p157 = scmp.eq.s32.totalorder %s21, 0
      %p158 = por %p156, %p157
      %p159 = scmp.ne.s32.totalorder %s145, %s146
      %p160 = scmp.eq.s32.totalorder %s22, 1
      %p161 = por %p159, %p160
      %p163 = scmp.ne.s32.totalorder %s146, %s162
      %p164 = scmp.eq.s32.totalorder %s22, 0
      %p165 = por %p163, %p164
      %p166 = scmp.le.s32.totalorder 1, %s16
      %p167 = scmp.lt.s32.totalorder %s16, 3
      %p168 = pnand %p166, %p167
      %p169 = pneg %p168
      // Predicated region
      $region9: #{downconv_forward.1} parent=5 // pred_check
        _
      $region10: #{downconv_forward.1} parent=5 // pred_check_branch
        %171 = sbr.rel (%p168) target = $region12
      $region11: #{downconv_forward.1} parent=5 // pred_region
        %s172 = ssub.s32 %s16, 1
        // Predicated region
        $region13: #{downconv_forward.1} parent=11 // pred_check
          %p173 = pneg %p56
        $region14: #{downconv_forward.1} parent=11 // pred_check_branch
          %175 = sbr.rel (%p173) target = $region16
        $region15: #{downconv_forward.1} parent=11 // pred_region
          %177 = vsyncadd [#allocation4], 0
          %s179 = sshll.u32 %s0, 4
          %s180 = int_to_ptr.hbm [resolvable:$true] %s179
          %182 = dma.hbm_to_smem %s180, 32, [#allocation2], [#allocation4]
        $region16: #{downconv_forward.1} parent=11 // pred_fallthru
          _
        // Predicated region
        $region17: #{downconv_forward.1} parent=11 // pred_check
          %p183 = pneg %p77
        $region18: #{downconv_forward.1} parent=11 // pred_check_branch
          %185 = sbr.rel (%p183) target = $region20
        $region19: #{downconv_forward.1} parent=11 // pred_region
          %187 = vsyncadd [#allocation5], 0
          %s189 = sshll.u32 %s1, 4
          %s190 = int_to_ptr.vmem [resolvable:$true] %s189
          %192 = dma.vmem_to_smem %s190, 16, [#allocation6], [#allocation5]
        $region20: #{downconv_forward.1} parent=11 // pred_fallthru
          _
        // Predicated region
        $region21: #{downconv_forward.1} parent=11 // pred_check
          %p193 = pneg %p98
        $region22: #{downconv_forward.1} parent=11 // pred_check_branch
          %195 = sbr.rel (%p193) target = $region24
        $region23: #{downconv_forward.1} parent=11 // pred_region
          %197 = vsyncadd [#allocation8], 0
          %s199 = sshll.u32 %s2, 4
          %s200 = int_to_ptr.vmem [resolvable:$true] %s199
          %202 = dma.vmem_to_smem %s200, 16, [#allocation7], [#allocation8]
        $region24: #{downconv_forward.1} parent=11 // pred_fallthru
          _
      $region12: #{downconv_forward.1} parent=5 // pred_fallthru
        _
      %p203 = scmp.lt.s32.totalorder %s16, 2
      // Predicated region
      $region25: #{downconv_forward.1} parent=5 // pred_check
        %p204 = pneg %p203
      $region26: #{downconv_forward.1} parent=5 // pred_check_branch
        %206 = sbr.rel (%p204) target = $region28
      $region27: #{downconv_forward.1} parent=5 // pred_region
        // Predicated region
        $region29: #{downconv_forward.1} parent=27 // pred_check
          %p207 = pneg %p122
        $region30: #{downconv_forward.1} parent=27 // pred_check_branch
          %209 = sbr.rel (%p207) target = $region32
        $region31: #{downconv_forward.1} parent=27 // pred_region
          %s210 = sand.u32 %s112, 1
          %s211 = scalar_lea.sflag [#allocation3], %s210
          %s212 = sand.u32 %s112, 1
          %s213 = smul.addr %s212, 64
          %s214 = scalar_lea.vmem [#allocation9], %s213
          %s215 = smul.u32 2, %s24
          %217 = vsyncadd %s211, 0
          %s218 = sadd.s32 %s25, %s215
          %s219 = smul.addr %s23, 8
          %s220 = sadd.s32 %s218, %s219
          %s221 = smul.addr %s220, 8
          %s222 = scalar_lea.hbm %s3, %s221
          %s223 = sshll.u32 %s222, 4
          %s224 = int_to_ptr.hbm [resolvable:$true] %s223
          %s225 = sshll.u32 %s214, 4
          %s226 = int_to_ptr.vmem [resolvable:$true] %s225
          %231 = dma.hbm_to_vmem [thread:$0]  %s224, 1024, %s226, %s211, 128, 128, 8
        $region32: #{downconv_forward.1} parent=27 // pred_fallthru
          _
      $region28: #{downconv_forward.1} parent=5 // pred_fallthru
        _
      %p232 = scmp.le.s32.totalorder 1, %s16
      %p233 = scmp.lt.s32.totalorder %s16, 3
      %p234 = pnand %p232, %p233
      %p235 = pneg %p234
      // Predicated region
      $region33: #{downconv_forward.1} parent=5 // pred_check
        _
      $region34: #{downconv_forward.1} parent=5 // pred_check_branch
        %237 = sbr.rel (%p234) target = $region36
      $region35: #{downconv_forward.1} parent=5 // pred_region
        %s238 = ssub.s32 %s16, 1
        // Predicated region
        $region37: #{downconv_forward.1} parent=35 // pred_check
          %p239 = pneg %p56
        $region38: #{downconv_forward.1} parent=35 // pred_check_branch
          %241 = sbr.rel (%p239) target = $region40
        $region39: #{downconv_forward.1} parent=35 // pred_region
          %243 = dma.done [#allocation4], 32
        $region40: #{downconv_forward.1} parent=35 // pred_fallthru
          _
        // Predicated region
        $region41: #{downconv_forward.1} parent=35 // pred_check
          %p244 = pneg %p77
        $region42: #{downconv_forward.1} parent=35 // pred_check_branch
          %246 = sbr.rel (%p244) target = $region44
        $region43: #{downconv_forward.1} parent=35 // pred_region
          %248 = dma.done [#allocation5], 16
        $region44: #{downconv_forward.1} parent=35 // pred_fallthru
          _
        // Predicated region
        $region45: #{downconv_forward.1} parent=35 // pred_check
          %p249 = pneg %p98
        $region46: #{downconv_forward.1} parent=35 // pred_check_branch
          %251 = sbr.rel (%p249) target = $region48
        $region47: #{downconv_forward.1} parent=35 // pred_region
          %253 = dma.done [#allocation8], 16
        $region48: #{downconv_forward.1} parent=35 // pred_fallthru
          _
        %s254 = sand.u32 %s115, 1
        %s255 = scalar_lea.sflag [#allocation3], %s254
        %s256 = sand.u32 %s115, 1
        %s257 = smul.addr %s256, 64
        %s258 = scalar_lea.vmem [#allocation9], %s257
        // Predicated region
        $region49: #{downconv_forward.1} parent=35 // pred_check
          %p259 = pneg %p128
        $region50: #{downconv_forward.1} parent=35 // pred_check_branch
          %261 = sbr.rel (%p259) target = $region52
        $region51: #{downconv_forward.1} parent=35 // pred_region
          %263 = dma.done %s255, 1024
        $region52: #{downconv_forward.1} parent=35 // pred_fallthru
          _
        %264 = sfence
        %p265 = pneg %p56
        %p266 = pneg %p53
        %p267 = pneg %p77
        %p268 = pneg %p74
        %p269 = pneg %p98
        %p270 = pneg %p95
        %s271 = sand.u32 %s115, 1
        %s272 = scalar_lea.sflag [#allocation3], %s271
        %s273 = sand.u32 %s115, 1
        %s274 = smul.addr %s273, 64
        %s275 = scalar_lea.vmem [#allocation9], %s274
        %p276 = pneg %p128
        %p277 = pneg %p125
        %p278 = pneg %p158
        %p279 = pneg %p155
        %p280 = scmp.lt.s32.totalorder %s26, 1
        %s281 = scalar_select %p280, %s26, 1
        %p282 = scmp.lt.s32.totalorder %s27, 0
        %s283 = scalar_select %p282, %s27, 0
        %p284 = scmp.lt.s32.totalorder %s28, 0
        %s285 = scalar_select %p284, %s28, 0
        %s286 = sadd.s32 %s285, %s283
        %s287 = smul.addr %s281, 4
        %s288 = sadd.s32 %s286, %s287
        %s289 = smul.addr %s288, 2
        %s290 = scalar_lea.vmem %s4, %s289
        %s291 = smul.u32 2, %s27
        %p292 = scmp.lt.s32.totalorder %s26, 1
        %s293 = scalar_select %p292, %s26, 1
        %p294 = scmp.lt.s32.totalorder %s27, 0
        %s295 = scalar_select %p294, %s27, 0
        %p296 = scmp.lt.s32.totalorder %s28, 0
        %s297 = scalar_select %p296, %s28, 0
        %s298 = sadd.s32 %s297, %s295
        %s299 = smul.addr %s293, 4
        %s300 = sadd.s32 %s298, %s299
        %s301 = smul.addr %s300, 2
        %s302 = scalar_lea.vmem %s4, %s301
        %v303 = vlaneseq
        %v304 = vand.u32 %v303, 127
        %v305 = vld [vmem:[%s258] sm:$0x1]
        %v306 = vld [vmem:[%s258 + $0x8] sm:$0x1]
        %s307 = scalar_lea.vmem %s258, 16 [#allocation9]
        %v308 = vld [vmem:[%s307] sm:$0x1]
        %v309 = vld [vmem:[%s307 + $0x8] sm:$0x1]
        %s310 = scalar_lea.vmem %s258, 32 [#allocation9]
        %v311 = vld [vmem:[%s310] sm:$0x1]
        %v312 = vld [vmem:[%s310 + $0x8] sm:$0x1]
        %s313 = scalar_lea.vmem %s258, 48 [#allocation9]
        %v314 = vld [vmem:[%s313] sm:$0x1]
        %v315 = vld [vmem:[%s313 + $0x8] sm:$0x1]
        %v316 = vld [vmem:[%s258 + $0x1] sm:$0x1]
        %v317 = vld [vmem:[%s258 + $0x9] sm:$0x1]
        %v318 = vld [vmem:[%s307 + $0x1] sm:$0x1]
        %v319 = vld [vmem:[%s307 + $0x9] sm:$0x1]
        %v320 = vld [vmem:[%s310 + $0x1] sm:$0x1]
        %v321 = vld [vmem:[%s310 + $0x9] sm:$0x1]
        %v322 = vld [vmem:[%s313 + $0x1] sm:$0x1]
        %v323 = vld [vmem:[%s313 + $0x9] sm:$0x1]
        %v324 = vld [vmem:[%s258 + $0x2] sm:$0x1]
        %v325 = vld [vmem:[%s258 + $0xa] sm:$0x1]
        %v326 = vld [vmem:[%s307 + $0x2] sm:$0x1]
        %v327 = vld [vmem:[%s307 + $0xa] sm:$0x1]
        %v328 = vld [vmem:[%s310 + $0x2] sm:$0x1]
        %v329 = vld [vmem:[%s310 + $0xa] sm:$0x1]
        %v330 = vld [vmem:[%s313 + $0x2] sm:$0x1]
        %v331 = vld [vmem:[%s313 + $0xa] sm:$0x1]
        %v332 = vld [vmem:[%s258 + $0x3] sm:$0x1]
        %v333 = vld [vmem:[%s258 + $0xb] sm:$0x1]
        %v334 = vld [vmem:[%s307 + $0x3] sm:$0x1]
        %v335 = vld [vmem:[%s307 + $0xb] sm:$0x1]
        %v336 = vld [vmem:[%s310 + $0x3] sm:$0x1]
        %v337 = vld [vmem:[%s310 + $0xb] sm:$0x1]
        %v338 = vld [vmem:[%s313 + $0x3] sm:$0x1]
        %v339 = vld [vmem:[%s313 + $0xb] sm:$0x1]
        %v340 = vld [vmem:[%s258 + $0x4] sm:$0x1]
        %v341 = vld [vmem:[%s258 + $0xc] sm:$0x1]
        %v342 = vld [vmem:[%s307 + $0x4] sm:$0x1]
        %v343 = vld [vmem:[%s307 + $0xc] sm:$0x1]
        %v344 = vld [vmem:[%s310 + $0x4] sm:$0x1]
        %v345 = vld [vmem:[%s310 + $0xc] sm:$0x1]
        %v346 = vld [vmem:[%s313 + $0x4] sm:$0x1]
        %v347 = vld [vmem:[%s313 + $0xc] sm:$0x1]
        %v348 = vld [vmem:[%s258 + $0x5] sm:$0x1]
        %v349 = vld [vmem:[%s258 + $0xd] sm:$0x1]
        %v350 = vld [vmem:[%s307 + $0x5] sm:$0x1]
        %v351 = vld [vmem:[%s307 + $0xd] sm:$0x1]
        %v352 = vld [vmem:[%s310 + $0x5] sm:$0x1]
        %v353 = vld [vmem:[%s310 + $0xd] sm:$0x1]
        %v354 = vld [vmem:[%s313 + $0x5] sm:$0x1]
        %v355 = vld [vmem:[%s313 + $0xd] sm:$0x1]
        %v356 = vld [vmem:[%s258 + $0x6] sm:$0x1]
        %v357 = vld [vmem:[%s258 + $0xe] sm:$0x1]
        %v358 = vld [vmem:[%s307 + $0x6] sm:$0x1]
        %v359 = vld [vmem:[%s307 + $0xe] sm:$0x1]
        %v360 = vld [vmem:[%s310 + $0x6] sm:$0x1]
        %v361 = vld [vmem:[%s310 + $0xe] sm:$0x1]
        %v362 = vld [vmem:[%s313 + $0x6] sm:$0x1]
        %v363 = vld [vmem:[%s313 + $0xe] sm:$0x1]
        %v364 = vld [vmem:[%s258 + $0x7] sm:$0x1]
        %v365 = vld [vmem:[%s258 + $0xf] sm:$0x1]
        %v366 = vld [vmem:[%s307 + $0x7] sm:$0x1]
        %v367 = vld [vmem:[%s307 + $0xf] sm:$0x1]
        %v368 = vld [vmem:[%s310 + $0x7] sm:$0x1]
        %v369 = vld [vmem:[%s310 + $0xf] sm:$0x1]
        %v370 = vld [vmem:[%s313 + $0x7] sm:$0x1]
        %v371 = vld [vmem:[%s313 + $0xf] sm:$0x1]
        %v372 = vand.u32 %v304, 1
        %vm373 = vcmp.eq.s32.totalorder %v372, 0
        %s374 = sld [smem:[#allocation2]]
        %s375 = sld [smem:[#allocation2 + $0x10]]
        %v376 = vstv %s374
        %v377 = vstv %s375
        %v378 = vsel %vm373, %v376, %v377
        %s379 = sld [smem:[#allocation2 + $0x1]]
        %s380 = sld [smem:[#allocation2 + $0x11]]
        %v381 = vstv %s379
        %v382 = vstv %s380
        %v383 = vsel %vm373, %v381, %v382
        %s384 = sld [smem:[#allocation2 + $0x2]]
        %s385 = sld [smem:[#allocation2 + $0x12]]
        %v386 = vstv %s384
        %v387 = vstv %s385
        %v388 = vsel %vm373, %v386, %v387
        %s389 = sld [smem:[#allocation2 + $0x3]]
        %s390 = sld [smem:[#allocation2 + $0x13]]
        %v391 = vstv %s389
        %v392 = vstv %s390
        %v393 = vsel %vm373, %v391, %v392
        %s394 = sld [smem:[#allocation2 + $0x4]]
        %s395 = sld [smem:[#allocation2 + $0x14]]
        %v396 = vstv %s394
        %v397 = vstv %s395
        %v398 = vsel %vm373, %v396, %v397
        %s399 = sld [smem:[#allocation2 + $0x5]]
        %s400 = sld [smem:[#allocation2 + $0x15]]
        %v401 = vstv %s399
        %v402 = vstv %s400
        %v403 = vsel %vm373, %v401, %v402
        %s404 = sld [smem:[#allocation2 + $0x6]]
        %s405 = sld [smem:[#allocation2 + $0x16]]
        %v406 = vstv %s404
        %v407 = vstv %s405
        %v408 = vsel %vm373, %v406, %v407
        %s409 = sld [smem:[#allocation2 + $0x7]]
        %s410 = sld [smem:[#allocation2 + $0x17]]
        %v411 = vstv %s409
        %v412 = vstv %s410
        %v413 = vsel %vm373, %v411, %v412
        %s414 = sld [smem:[#allocation2 + $0x8]]
        %s415 = sld [smem:[#allocation2 + $0x18]]
        %v416 = vstv %s414
        %v417 = vstv %s415
        %v418 = vsel %vm373, %v416, %v417
        %s419 = sld [smem:[#allocation2 + $0x9]]
        %s420 = sld [smem:[#allocation2 + $0x19]]
        %v421 = vstv %s419
        %v422 = vstv %s420
        %v423 = vsel %vm373, %v421, %v422
        %s424 = sld [smem:[#allocation2 + $0xa]]
        %s425 = sld [smem:[#allocation2 + $0x1a]]
        %v426 = vstv %s424
        %v427 = vstv %s425
        %v428 = vsel %vm373, %v426, %v427
        %s429 = sld [smem:[#allocation2 + $0xb]]
        %s430 = sld [smem:[#allocation2 + $0x1b]]
        %v431 = vstv %s429
        %v432 = vstv %s430
        %v433 = vsel %vm373, %v431, %v432
        %s434 = sld [smem:[#allocation2 + $0xc]]
        %s435 = sld [smem:[#allocation2 + $0x1c]]
        %v436 = vstv %s434
        %v437 = vstv %s435
        %v438 = vsel %vm373, %v436, %v437
        %s439 = sld [smem:[#allocation2 + $0xd]]
        %s440 = sld [smem:[#allocation2 + $0x1d]]
        %v441 = vstv %s439
        %v442 = vstv %s440
        %v443 = vsel %vm373, %v441, %v442
        %s444 = sld [smem:[#allocation2 + $0xe]]
        %s445 = sld [smem:[#allocation2 + $0x1e]]
        %v446 = vstv %s444
        %v447 = vstv %s445
        %v448 = vsel %vm373, %v446, %v447
        %s449 = sld [smem:[#allocation2 + $0xf]]
        %s450 = sld [smem:[#allocation2 + $0x1f]]
        %v451 = vstv %s449
        %v452 = vstv %s450
        %v453 = vsel %vm373, %v451, %v452
        %s454 = sld [smem:[#allocation2 + $0x20]]
        %s455 = sld [smem:[#allocation2 + $0x30]]
        %v456 = vstv %s454
        %v457 = vstv %s455
        %v458 = vsel %vm373, %v456, %v457
        %s459 = sld [smem:[#allocation2 + $0x21]]
        %s460 = sld [smem:[#allocation2 + $0x31]]
        %v461 = vstv %s459
        %v462 = vstv %s460
        %v463 = vsel %vm373, %v461, %v462
        %s464 = sld [smem:[#allocation2 + $0x22]]
        %s465 = sld [smem:[#allocation2 + $0x32]]
        %v466 = vstv %s464
        %v467 = vstv %s465
        %v468 = vsel %vm373, %v466, %v467
        %s469 = sld [smem:[#allocation2 + $0x23]]
        %s470 = sld [smem:[#allocation2 + $0x33]]
        %v471 = vstv %s469
        %v472 = vstv %s470
        %v473 = vsel %vm373, %v471, %v472
        %s474 = sld [smem:[#allocation2 + $0x24]]
        %s475 = sld [smem:[#allocation2 + $0x34]]
        %v476 = vstv %s474
        %v477 = vstv %s475
        %v478 = vsel %vm373, %v476, %v477
        %s479 = sld [smem:[#allocation2 + $0x25]]
        %s480 = sld [smem:[#allocation2 + $0x35]]
        %v481 = vstv %s479
        %v482 = vstv %s480
        %v483 = vsel %vm373, %v481, %v482
        %s484 = sld [smem:[#allocation2 + $0x26]]
        %s485 = sld [smem:[#allocation2 + $0x36]]
        %v486 = vstv %s484
        %v487 = vstv %s485
        %v488 = vsel %vm373, %v486, %v487
        %s489 = sld [smem:[#allocation2 + $0x27]]
        %s490 = sld [smem:[#allocation2 + $0x37]]
        %v491 = vstv %s489
        %v492 = vstv %s490
        %v493 = vsel %vm373, %v491, %v492
        %s494 = sld [smem:[#allocation2 + $0x28]]
        %s495 = sld [smem:[#allocation2 + $0x38]]
        %v496 = vstv %s494
        %v497 = vstv %s495
        %v498 = vsel %vm373, %v496, %v497
        %s499 = sld [smem:[#allocation2 + $0x29]]
        %s500 = sld [smem:[#allocation2 + $0x39]]
        %v501 = vstv %s499
        %v502 = vstv %s500
        %v503 = vsel %vm373, %v501, %v502
        %s504 = sld [smem:[#allocation2 + $0x2a]]
        %s505 = sld [smem:[#allocation2 + $0x3a]]
        %v506 = vstv %s504
        %v507 = vstv %s505
        %v508 = vsel %vm373, %v506, %v507
        %s509 = sld [smem:[#allocation2 + $0x2b]]
        %s510 = sld [smem:[#allocation2 + $0x3b]]
        %v511 = vstv %s509
        %v512 = vstv %s510
        %v513 = vsel %vm373, %v511, %v512
        %s514 = sld [smem:[#allocation2 + $0x2c]]
        %s515 = sld [smem:[#allocation2 + $0x3c]]
        %v516 = vstv %s514
        %v517 = vstv %s515
        %v518 = vsel %vm373, %v516, %v517
        %s519 = sld [smem:[#allocation2 + $0x2d]]
        %s520 = sld [smem:[#allocation2 + $0x3d]]
        %v521 = vstv %s519
        %v522 = vstv %s520
        %v523 = vsel %vm373, %v521, %v522
        %s524 = sld [smem:[#allocation2 + $0x2e]]
        %s525 = sld [smem:[#allocation2 + $0x3e]]
        %v526 = vstv %s524
        %v527 = vstv %s525
        %v528 = vsel %vm373, %v526, %v527
        %s529 = sld [smem:[#allocation2 + $0x2f]]
        %s530 = sld [smem:[#allocation2 + $0x3f]]
        %v531 = vstv %s529
        %v532 = vstv %s530
        %v533 = vsel %vm373, %v531, %v532
        %v536 = vrot.slane %v306, 7
        %vm537 = vcmask 1041409
        %v538 = vsel %vm537, %v536, %v305
        %v540 = vmul.f32 %v378, %v538
        %v543 = vrot.slane %v309, 7
        %v544 = vsel %vm537, %v543, %v308
        %v546 = vmul.f32 %v383, %v544
        %v549 = vrot.slane %v312, 7
        %v550 = vsel %vm537, %v549, %v311
        %v552 = vmul.f32 %v388, %v550
        %v555 = vrot.slane %v315, 7
        %v556 = vsel %vm537, %v555, %v314
        %v558 = vmul.f32 %v393, %v556
        %v561 = vrot.slane %v317, 7
        %v562 = vsel %vm537, %v561, %v316
        %v564 = vmul.f32 %v458, %v562
        %v567 = vrot.slane %v319, 7
        %v568 = vsel %vm537, %v567, %v318
        %v570 = vmul.f32 %v463, %v568
        %v573 = vrot.slane %v321, 7
        %v574 = vsel %vm537, %v573, %v320
        %v576 = vmul.f32 %v468, %v574
        %v579 = vrot.slane %v323, 7
        %v580 = vsel %vm537, %v579, %v322
        %v582 = vmul.f32 %v473, %v580
        %v583 = vadd.f32 %v540, %v546
        %v584 = vadd.f32 %v552, %v558
        %v585 = vadd.f32 %v564, %v570
        %v586 = vadd.f32 %v576, %v582
        %v587 = vadd.f32 %v583, %v584
        %v588 = vadd.f32 %v585, %v586
        %v589 = vadd.f32 %v587, %v588
        %vm590 = vcmask 1047680
        %591 = vrot.lane.b32.xlu0 %v589, 16
        %v592 = vpop.permute.xlu0 %591
        %v593 = vsel %vm590, %v592, %v589
        %594 = vrot.lane.b32.xlu0 %v593, 16
        %v595 = vpop.permute.xlu0 %594
        %v596 = vsel %vm590, %v595, %v589
        %598 = vrot.lane.b32.xlu0 %v596, 127
        %v599 = vpop.permute.xlu0 %598
        %v601 = vadd.f32 %v589, %v599
        %s602 = sld [smem:[#allocation6]]
        %v603 = vstv %s602
        %v604 = vadd.f32 %v601, %v603
        %vm605 = vcmp.gt.f32.partialorder %v604, 0.0
        %s606 = sld [smem:[#allocation7]]
        %v607 = vstv %s606
        %v608 = vmul.f32 %v607, %v604
        %v609 = vsel %vm605, %v604, %v608
        %v610 = vmul.f32 %v398, %v538
        %v611 = vmul.f32 %v403, %v544
        %v612 = vmul.f32 %v408, %v550
        %v613 = vmul.f32 %v413, %v556
        %v614 = vmul.f32 %v478, %v562
        %v615 = vmul.f32 %v483, %v568
        %v616 = vmul.f32 %v488, %v574
        %v617 = vmul.f32 %v493, %v580
        %v618 = vadd.f32 %v610, %v611
        %v619 = vadd.f32 %v612, %v613
        %v620 = vadd.f32 %v614, %v615
        %v621 = vadd.f32 %v616, %v617
        %v622 = vadd.f32 %v618, %v619
        %v623 = vadd.f32 %v620, %v621
        %v624 = vadd.f32 %v622, %v623
        %625 = vrot.lane.b32.xlu0 %v624, 16
        %v626 = vpop.permute.xlu0 %625
        %v627 = vsel %vm590, %v626, %v624
        %628 = vrot.lane.b32.xlu0 %v627, 16
        %v629 = vpop.permute.xlu0 %628
        %v630 = vsel %vm590, %v629, %v624
        %632 = vrot.lane.b32.xlu0 %v630, 127
        %v633 = vpop.permute.xlu0 %632
        %v635 = vadd.f32 %v624, %v633
        %s636 = sld [smem:[#allocation6 + $0x1]]
        %v637 = vstv %s636
        %v638 = vadd.f32 %v635, %v637
        %vm639 = vcmp.gt.f32.partialorder %v638, 0.0
        %s640 = sld [smem:[#allocation7 + $0x1]]
        %v641 = vstv %s640
        %v642 = vmul.f32 %v641, %v638
        %v643 = vsel %vm639, %v638, %v642
        %v644 = vmul.f32 %v418, %v538
        %v645 = vmul.f32 %v423, %v544
        %v646 = vmul.f32 %v428, %v550
        %v647 = vmul.f32 %v433, %v556
        %v648 = vmul.f32 %v498, %v562
        %v649 = vmul.f32 %v503, %v568
        %v650 = vmul.f32 %v508, %v574
        %v651 = vmul.f32 %v513, %v580
        %v652 = vadd.f32 %v644, %v645
        %v653 = vadd.f32 %v646, %v647
        %v654 = vadd.f32 %v648, %v649
        %v655 = vadd.f32 %v650, %v651
        %v656 = vadd.f32 %v652, %v653
        %v657 = vadd.f32 %v654, %v655
        %v658 = vadd.f32 %v656, %v657
        %659 = vrot.lane.b32.xlu0 %v658, 16
        %v660 = vpop.permute.xlu0 %659
        %v661 = vsel %vm590, %v660, %v658
        %662 = vrot.lane.b32.xlu0 %v661, 16
        %v663 = vpop.permute.xlu0 %662
        %v664 = vsel %vm590, %v663, %v658
        %666 = vrot.lane.b32.xlu0 %v664, 127
        %v667 = vpop.permute.xlu0 %666
        %v669 = vadd.f32 %v658, %v667
        %s670 = sld [smem:[#allocation6 + $0x2]]
        %v671 = vstv %s670
        %v672 = vadd.f32 %v669, %v671
        %vm673 = vcmp.gt.f32.partialorder %v672, 0.0
        %s674 = sld [smem:[#allocation7 + $0x2]]
        %v675 = vstv %s674
        %v676 = vmul.f32 %v675, %v672
        %v677 = vsel %vm673, %v672, %v676
        %v678 = vmul.f32 %v438, %v538
        %v679 = vmul.f32 %v443, %v544
        %v680 = vmul.f32 %v448, %v550
        %v681 = vmul.f32 %v453, %v556
        %v682 = vmul.f32 %v518, %v562
        %v683 = vmul.f32 %v523, %v568
        %v684 = vmul.f32 %v528, %v574
        %v685 = vmul.f32 %v533, %v580
        %v686 = vadd.f32 %v678, %v679
        %v687 = vadd.f32 %v680, %v681
        %v688 = vadd.f32 %v682, %v683
        %v689 = vadd.f32 %v684, %v685
        %v690 = vadd.f32 %v686, %v687
        %v691 = vadd.f32 %v688, %v689
        %v692 = vadd.f32 %v690, %v691
        %693 = vrot.lane.b32.xlu0 %v692, 16
        %v694 = vpop.permute.xlu0 %693
        %v695 = vsel %vm590, %v694, %v692
        %696 = vrot.lane.b32.xlu0 %v695, 16
        %v697 = vpop.permute.xlu0 %696
        %v698 = vsel %vm590, %v697, %v692
        %700 = vrot.lane.b32.xlu0 %v698, 127
        %v701 = vpop.permute.xlu0 %700
        %v703 = vadd.f32 %v692, %v701
        %s704 = sld [smem:[#allocation6 + $0x3]]
        %v705 = vstv %s704
        %v706 = vadd.f32 %v703, %v705
        %vm707 = vcmp.gt.f32.partialorder %v706, 0.0
        %s708 = sld [smem:[#allocation7 + $0x3]]
        %v709 = vstv %s708
        %v710 = vmul.f32 %v709, %v706
        %v711 = vsel %vm707, %v706, %v710
        %v714 = vrot.slane %v325, 7
        %v715 = vsel %vm537, %v714, %v324
        %v717 = vmul.f32 %v378, %v715
        %v720 = vrot.slane %v327, 7
        %v721 = vsel %vm537, %v720, %v326
        %v723 = vmul.f32 %v383, %v721
        %v726 = vrot.slane %v329, 7
        %v727 = vsel %vm537, %v726, %v328
        %v729 = vmul.f32 %v388, %v727
        %v732 = vrot.slane %v331, 7
        %v733 = vsel %vm537, %v732, %v330
        %v735 = vmul.f32 %v393, %v733
        %v738 = vrot.slane %v333, 7
        %v739 = vsel %vm537, %v738, %v332
        %v741 = vmul.f32 %v458, %v739
        %v744 = vrot.slane %v335, 7
        %v745 = vsel %vm537, %v744, %v334
        %v747 = vmul.f32 %v463, %v745
        %v750 = vrot.slane %v337, 7
        %v751 = vsel %vm537, %v750, %v336
        %v753 = vmul.f32 %v468, %v751
        %v756 = vrot.slane %v339, 7
        %v757 = vsel %vm537, %v756, %v338
        %v759 = vmul.f32 %v473, %v757
        %v760 = vadd.f32 %v717, %v723
        %v761 = vadd.f32 %v729, %v735
        %v762 = vadd.f32 %v741, %v747
        %v763 = vadd.f32 %v753, %v759
        %v764 = vadd.f32 %v760, %v761
        %v765 = vadd.f32 %v762, %v763
        %v766 = vadd.f32 %v764, %v765
        %767 = vrot.lane.b32.xlu0 %v766, 16
        %v768 = vpop.permute.xlu0 %767
        %v769 = vsel %vm590, %v768, %v766
        %770 = vrot.lane.b32.xlu0 %v769, 16
        %v771 = vpop.permute.xlu0 %770
        %v772 = vsel %vm590, %v771, %v766
        %774 = vrot.lane.b32.xlu0 %v772, 127
        %v775 = vpop.permute.xlu0 %774
        %v777 = vadd.f32 %v766, %v775
        %v778 = vadd.f32 %v777, %v603
        %vm779 = vcmp.gt.f32.partialorder %v778, 0.0
        %v780 = vmul.f32 %v607, %v778
        %v781 = vsel %vm779, %v778, %v780
        %v782 = vmul.f32 %v398, %v715
        %v783 = vmul.f32 %v403, %v721
        %v784 = vmul.f32 %v408, %v727
        %v785 = vmul.f32 %v413, %v733
        %v786 = vmul.f32 %v478, %v739
        %v787 = vmul.f32 %v483, %v745
        %v788 = vmul.f32 %v488, %v751
        %v789 = vmul.f32 %v493, %v757
        %v790 = vadd.f32 %v782, %v783
        %v791 = vadd.f32 %v784, %v785
        %v792 = vadd.f32 %v786, %v787
        %v793 = vadd.f32 %v788, %v789
        %v794 = vadd.f32 %v790, %v791
        %v795 = vadd.f32 %v792, %v793
        %v796 = vadd.f32 %v794, %v795
        %797 = vrot.lane.b32.xlu0 %v796, 16
        %v798 = vpop.permute.xlu0 %797
        %v799 = vsel %vm590, %v798, %v796
        %800 = vrot.lane.b32.xlu0 %v799, 16
        %v801 = vpop.permute.xlu0 %800
        %v802 = vsel %vm590, %v801, %v796
        %804 = vrot.lane.b32.xlu0 %v802, 127
        %v805 = vpop.permute.xlu0 %804
        %v807 = vadd.f32 %v796, %v805
        %v808 = vadd.f32 %v807, %v637
        %vm809 = vcmp.gt.f32.partialorder %v808, 0.0
        %v810 = vmul.f32 %v641, %v808
        %v811 = vsel %vm809, %v808, %v810
        %v812 = vmul.f32 %v418, %v715
        %v813 = vmul.f32 %v423, %v721
        %v814 = vmul.f32 %v428, %v727
        %v815 = vmul.f32 %v433, %v733
        %v816 = vmul.f32 %v498, %v739
        %v817 = vmul.f32 %v503, %v745
        %v818 = vmul.f32 %v508, %v751
        %v819 = vmul.f32 %v513, %v757
        %v820 = vadd.f32 %v812, %v813
        %v821 = vadd.f32 %v814, %v815
        %v822 = vadd.f32 %v816, %v817
        %v823 = vadd.f32 %v818, %v819
        %v824 = vadd.f32 %v820, %v821
        %v825 = vadd.f32 %v822, %v823
        %v826 = vadd.f32 %v824, %v825
        %827 = vrot.lane.b32.xlu0 %v826, 16
        %v828 = vpop.permute.xlu0 %827
        %v829 = vsel %vm590, %v828, %v826
        %830 = vrot.lane.b32.xlu0 %v829, 16
        %v831 = vpop.permute.xlu0 %830
        %v832 = vsel %vm590, %v831, %v826
        %834 = vrot.lane.b32.xlu0 %v832, 127
        %v835 = vpop.permute.xlu0 %834
        %v837 = vadd.f32 %v826, %v835
        %v838 = vadd.f32 %v837, %v671
        %vm839 = vcmp.gt.f32.partialorder %v838, 0.0
        %v840 = vmul.f32 %v675, %v838
        %v841 = vsel %vm839, %v838, %v840
        %v842 = vmul.f32 %v438, %v715
        %v843 = vmul.f32 %v443, %v721
        %v844 = vmul.f32 %v448, %v727
        %v845 = vmul.f32 %v453, %v733
        %v846 = vmul.f32 %v518, %v739
        %v847 = vmul.f32 %v523, %v745
        %v848 = vmul.f32 %v528, %v751
        %v849 = vmul.f32 %v533, %v757
        %v850 = vadd.f32 %v842, %v843
        %v851 = vadd.f32 %v844, %v845
        %v852 = vadd.f32 %v846, %v847
        %v853 = vadd.f32 %v848, %v849
        %v854 = vadd.f32 %v850, %v851
        %v855 = vadd.f32 %v852, %v853
        %v856 = vadd.f32 %v854, %v855
        %857 = vrot.lane.b32.xlu0 %v856, 16
        %v858 = vpop.permute.xlu0 %857
        %v859 = vsel %vm590, %v858, %v856
        %860 = vrot.lane.b32.xlu0 %v859, 16
        %v861 = vpop.permute.xlu0 %860
        %v862 = vsel %vm590, %v861, %v856
        %864 = vrot.lane.b32.xlu0 %v862, 127
        %v865 = vpop.permute.xlu0 %864
        %v867 = vadd.f32 %v856, %v865
        %v868 = vadd.f32 %v867, %v705
        %vm869 = vcmp.gt.f32.partialorder %v868, 0.0
        %v870 = vmul.f32 %v709, %v868
        %v871 = vsel %vm869, %v868, %v870
        %v874 = vrot.slane %v341, 7
        %v875 = vsel %vm537, %v874, %v340
        %v877 = vmul.f32 %v378, %v875
        %v880 = vrot.slane %v343, 7
        %v881 = vsel %vm537, %v880, %v342
        %v883 = vmul.f32 %v383, %v881
        %v886 = vrot.slane %v345, 7
        %v887 = vsel %vm537, %v886, %v344
        %v889 = vmul.f32 %v388, %v887
        %v892 = vrot.slane %v347, 7
        %v893 = vsel %vm537, %v892, %v346
        %v895 = vmul.f32 %v393, %v893
        %v898 = vrot.slane %v349, 7
        %v899 = vsel %vm537, %v898, %v348
        %v901 = vmul.f32 %v458, %v899
        %v904 = vrot.slane %v351, 7
        %v905 = vsel %vm537, %v904, %v350
        %v907 = vmul.f32 %v463, %v905
        %v910 = vrot.slane %v353, 7
        %v911 = vsel %vm537, %v910, %v352
        %v913 = vmul.f32 %v468, %v911
        %v916 = vrot.slane %v355, 7
        %v917 = vsel %vm537, %v916, %v354
        %v919 = vmul.f32 %v473, %v917
        %v920 = vadd.f32 %v877, %v883
        %v921 = vadd.f32 %v889, %v895
        %v922 = vadd.f32 %v901, %v907
        %v923 = vadd.f32 %v913, %v919
        %v924 = vadd.f32 %v920, %v921
        %v925 = vadd.f32 %v922, %v923
        %v926 = vadd.f32 %v924, %v925
        %927 = vrot.lane.b32.xlu0 %v926, 16
        %v928 = vpop.permute.xlu0 %927
        %v929 = vsel %vm590, %v928, %v926
        %930 = vrot.lane.b32.xlu0 %v929, 16
        %v931 = vpop.permute.xlu0 %930
        %v932 = vsel %vm590, %v931, %v926
        %934 = vrot.lane.b32.xlu0 %v932, 127
        %v935 = vpop.permute.xlu0 %934
        %v937 = vadd.f32 %v926, %v935
        %v938 = vadd.f32 %v937, %v603
        %vm939 = vcmp.gt.f32.partialorder %v938, 0.0
        %v940 = vmul.f32 %v607, %v938
        %v941 = vsel %vm939, %v938, %v940
        %v942 = vmul.f32 %v398, %v875
        %v943 = vmul.f32 %v403, %v881
        %v944 = vmul.f32 %v408, %v887
        %v945 = vmul.f32 %v413, %v893
        %v946 = vmul.f32 %v478, %v899
        %v947 = vmul.f32 %v483, %v905
        %v948 = vmul.f32 %v488, %v911
        %v949 = vmul.f32 %v493, %v917
        %v950 = vadd.f32 %v942, %v943
        %v951 = vadd.f32 %v944, %v945
        %v952 = vadd.f32 %v946, %v947
        %v953 = vadd.f32 %v948, %v949
        %v954 = vadd.f32 %v950, %v951
        %v955 = vadd.f32 %v952, %v953
        %v956 = vadd.f32 %v954, %v955
        %957 = vrot.lane.b32.xlu0 %v956, 16
        %v958 = vpop.permute.xlu0 %957
        %v959 = vsel %vm590, %v958, %v956
        %960 = vrot.lane.b32.xlu0 %v959, 16
        %v961 = vpop.permute.xlu0 %960
        %v962 = vsel %vm590, %v961, %v956
        %964 = vrot.lane.b32.xlu0 %v962, 127
        %v965 = vpop.permute.xlu0 %964
        %v967 = vadd.f32 %v956, %v965
        %v968 = vadd.f32 %v967, %v637
        %vm969 = vcmp.gt.f32.partialorder %v968, 0.0
        %v970 = vmul.f32 %v641, %v968
        %v971 = vsel %vm969, %v968, %v970
        %v972 = vmul.f32 %v418, %v875
        %v973 = vmul.f32 %v423, %v881
        %v974 = vmul.f32 %v428, %v887
        %v975 = vmul.f32 %v433, %v893
        %v976 = vmul.f32 %v498, %v899
        %v977 = vmul.f32 %v503, %v905
        %v978 = vmul.f32 %v508, %v911
        %v979 = vmul.f32 %v513, %v917
        %v980 = vadd.f32 %v972, %v973
        %v981 = vadd.f32 %v974, %v975
        %v982 = vadd.f32 %v976, %v977
        %v983 = vadd.f32 %v978, %v979
        %v984 = vadd.f32 %v980, %v981
        %v985 = vadd.f32 %v982, %v983
        %v986 = vadd.f32 %v984, %v985
        %987 = vrot.lane.b32.xlu0 %v986, 16
        %v988 = vpop.permute.xlu0 %987
        %v989 = vsel %vm590, %v988, %v986
        %990 = vrot.lane.b32.xlu0 %v989, 16
        %v991 = vpop.permute.xlu0 %990
        %v992 = vsel %vm590, %v991, %v986
        %994 = vrot.lane.b32.xlu0 %v992, 127
        %v995 = vpop.permute.xlu0 %994
        %v997 = vadd.f32 %v986, %v995
        %v998 = vadd.f32 %v997, %v671
        %vm999 = vcmp.gt.f32.partialorder %v998, 0.0
        %v1000 = vmul.f32 %v675, %v998
        %v1001 = vsel %vm999, %v998, %v1000
        %v1002 = vmul.f32 %v438, %v875
        %v1003 = vmul.f32 %v443, %v881
        %v1004 = vmul.f32 %v448, %v887
        %v1005 = vmul.f32 %v453, %v893
        %v1006 = vmul.f32 %v518, %v899
        %v1007 = vmul.f32 %v523, %v905
        %v1008 = vmul.f32 %v528, %v911
        %v1009 = vmul.f32 %v533, %v917
        %v1010 = vadd.f32 %v1002, %v1003
        %v1011 = vadd.f32 %v1004, %v1005
        %v1012 = vadd.f32 %v1006, %v1007
        %v1013 = vadd.f32 %v1008, %v1009
        %v1014 = vadd.f32 %v1010, %v1011
        %v1015 = vadd.f32 %v1012, %v1013
        %v1016 = vadd.f32 %v1014, %v1015
        %1017 = vrot.lane.b32.xlu0 %v1016, 16
        %v1018 = vpop.permute.xlu0 %1017
        %v1019 = vsel %vm590, %v1018, %v1016
        %1020 = vrot.lane.b32.xlu0 %v1019, 16
        %v1021 = vpop.permute.xlu0 %1020
        %v1022 = vsel %vm590, %v1021, %v1016
        %1024 = vrot.lane.b32.xlu0 %v1022, 127
        %v1025 = vpop.permute.xlu0 %1024
        %v1027 = vadd.f32 %v1016, %v1025
        %v1028 = vadd.f32 %v1027, %v705
        %vm1029 = vcmp.gt.f32.partialorder %v1028, 0.0
        %v1030 = vmul.f32 %v709, %v1028
        %v1031 = vsel %vm1029, %v1028, %v1030
        %v1034 = vrot.slane %v357, 7
        %v1035 = vsel %vm537, %v1034, %v356
        %v1037 = vmul.f32 %v378, %v1035
        %v1040 = vrot.slane %v359, 7
        %v1041 = vsel %vm537, %v1040, %v358
        %v1043 = vmul.f32 %v383, %v1041
        %v1046 = vrot.slane %v361, 7
        %v1047 = vsel %vm537, %v1046, %v360
        %v1049 = vmul.f32 %v388, %v1047
        %v1052 = vrot.slane %v363, 7
        %v1053 = vsel %vm537, %v1052, %v362
        %v1055 = vmul.f32 %v393, %v1053
        %v1058 = vrot.slane %v365, 7
        %v1059 = vsel %vm537, %v1058, %v364
        %v1061 = vmul.f32 %v458, %v1059
        %v1064 = vrot.slane %v367, 7
        %v1065 = vsel %vm537, %v1064, %v366
        %v1067 = vmul.f32 %v463, %v1065
        %v1070 = vrot.slane %v369, 7
        %v1071 = vsel %vm537, %v1070, %v368
        %v1073 = vmul.f32 %v468, %v1071
        %v1076 = vrot.slane %v371, 7
        %v1077 = vsel %vm537, %v1076, %v370
        %v1079 = vmul.f32 %v473, %v1077
        %v1080 = vadd.f32 %v1037, %v1043
        %v1081 = vadd.f32 %v1049, %v1055
        %v1082 = vadd.f32 %v1061, %v1067
        %v1083 = vadd.f32 %v1073, %v1079
        %v1084 = vadd.f32 %v1080, %v1081
        %v1085 = vadd.f32 %v1082, %v1083
        %v1086 = vadd.f32 %v1084, %v1085
        %1087 = vrot.lane.b32.xlu0 %v1086, 16
        %v1088 = vpop.permute.xlu0 %1087
        %v1089 = vsel %vm590, %v1088, %v1086
        %1090 = vrot.lane.b32.xlu0 %v1089, 16
        %v1091 = vpop.permute.xlu0 %1090
        %v1092 = vsel %vm590, %v1091, %v1086
        %1094 = vrot.lane.b32.xlu0 %v1092, 127
        %v1095 = vpop.permute.xlu0 %1094
        %v1097 = vadd.f32 %v1086, %v1095
        %v1098 = vadd.f32 %v1097, %v603
        %vm1099 = vcmp.gt.f32.partialorder %v1098, 0.0
        %v1100 = vmul.f32 %v607, %v1098
        %v1101 = vsel %vm1099, %v1098, %v1100
        %v1102 = vmul.f32 %v398, %v1035
        %v1103 = vmul.f32 %v403, %v1041
        %v1104 = vmul.f32 %v408, %v1047
        %v1105 = vmul.f32 %v413, %v1053
        %v1106 = vmul.f32 %v478, %v1059
        %v1107 = vmul.f32 %v483, %v1065
        %v1108 = vmul.f32 %v488, %v1071
        %v1109 = vmul.f32 %v493, %v1077
        %v1110 = vadd.f32 %v1102, %v1103
        %v1111 = vadd.f32 %v1104, %v1105
        %v1112 = vadd.f32 %v1106, %v1107
        %v1113 = vadd.f32 %v1108, %v1109
        %v1114 = vadd.f32 %v1110, %v1111
        %v1115 = vadd.f32 %v1112, %v1113
        %v1116 = vadd.f32 %v1114, %v1115
        %1117 = vrot.lane.b32.xlu0 %v1116, 16
        %v1118 = vpop.permute.xlu0 %1117
        %v1119 = vsel %vm590, %v1118, %v1116
        %1120 = vrot.lane.b32.xlu0 %v1119, 16
        %v1121 = vpop.permute.xlu0 %1120
        %v1122 = vsel %vm590, %v1121, %v1116
        %1124 = vrot.lane.b32.xlu0 %v1122, 127
        %v1125 = vpop.permute.xlu0 %1124
        %v1127 = vadd.f32 %v1116, %v1125
        %v1128 = vadd.f32 %v1127, %v637
        %vm1129 = vcmp.gt.f32.partialorder %v1128, 0.0
        %v1130 = vmul.f32 %v641, %v1128
        %v1131 = vsel %vm1129, %v1128, %v1130
        %v1132 = vmul.f32 %v418, %v1035
        %v1133 = vmul.f32 %v423, %v1041
        %v1134 = vmul.f32 %v428, %v1047
        %v1135 = vmul.f32 %v433, %v1053
        %v1136 = vmul.f32 %v498, %v1059
        %v1137 = vmul.f32 %v503, %v1065
        %v1138 = vmul.f32 %v508, %v1071
        %v1139 = vmul.f32 %v513, %v1077
        %v1140 = vadd.f32 %v1132, %v1133
        %v1141 = vadd.f32 %v1134, %v1135
        %v1142 = vadd.f32 %v1136, %v1137
        %v1143 = vadd.f32 %v1138, %v1139
        %v1144 = vadd.f32 %v1140, %v1141
        %v1145 = vadd.f32 %v1142, %v1143
        %v1146 = vadd.f32 %v1144, %v1145
        %1147 = vrot.lane.b32.xlu0 %v1146, 16
        %v1148 = vpop.permute.xlu0 %1147
        %v1149 = vsel %vm590, %v1148, %v1146
        %1150 = vrot.lane.b32.xlu0 %v1149, 16
        %v1151 = vpop.permute.xlu0 %1150
        %v1152 = vsel %vm590, %v1151, %v1146
        %1154 = vrot.lane.b32.xlu0 %v1152, 127
        %v1155 = vpop.permute.xlu0 %1154
        %v1157 = vadd.f32 %v1146, %v1155
        %v1158 = vadd.f32 %v1157, %v671
        %vm1159 = vcmp.gt.f32.partialorder %v1158, 0.0
        %v1160 = vmul.f32 %v675, %v1158
        %v1161 = vsel %vm1159, %v1158, %v1160
        %v1162 = vmul.f32 %v438, %v1035
        %v1163 = vmul.f32 %v443, %v1041
        %v1164 = vmul.f32 %v448, %v1047
        %v1165 = vmul.f32 %v453, %v1053
        %v1166 = vmul.f32 %v518, %v1059
        %v1167 = vmul.f32 %v523, %v1065
        %v1168 = vmul.f32 %v528, %v1071
        %v1169 = vmul.f32 %v533, %v1077
        %v1170 = vadd.f32 %v1162, %v1163
        %v1171 = vadd.f32 %v1164, %v1165
        %v1172 = vadd.f32 %v1166, %v1167
        %v1173 = vadd.f32 %v1168, %v1169
        %v1174 = vadd.f32 %v1170, %v1171
        %v1175 = vadd.f32 %v1172, %v1173
        %v1176 = vadd.f32 %v1174, %v1175
        %1177 = vrot.lane.b32.xlu0 %v1176, 16
        %v1178 = vpop.permute.xlu0 %1177
        %v1179 = vsel %vm590, %v1178, %v1176
        %1180 = vrot.lane.b32.xlu0 %v1179, 16
        %v1181 = vpop.permute.xlu0 %1180
        %v1182 = vsel %vm590, %v1181, %v1176
        %1184 = vrot.lane.b32.xlu0 %v1182, 127
        %v1185 = vpop.permute.xlu0 %1184
        %v1187 = vadd.f32 %v1176, %v1185
        %v1188 = vadd.f32 %v1187, %v705
        %vm1189 = vcmp.gt.f32.partialorder %v1188, 0.0
        %v1190 = vmul.f32 %v709, %v1188
        %v1191 = vsel %vm1189, %v1188, %v1190
        %v1192 = vshra.s32 %v304, 1
        %v1193 = vand.u32 %v1192, 1
        %vm1194 = vcmp.eq.s32.totalorder %v1193, 0
        %s1195 = sld [smem:[#allocation2 + $0x40]]
        %s1196 = sld [smem:[#allocation2 + $0x50]]
        %v1197 = vstv %s1195
        %v1198 = vstv %s1196
        %v1199 = vsel %vm1194, %v1197, %v1198
        %s1200 = sld [smem:[#allocation2 + $0x41]]
        %s1201 = sld [smem:[#allocation2 + $0x51]]
        %v1202 = vstv %s1200
        %v1203 = vstv %s1201
        %v1204 = vsel %vm1194, %v1202, %v1203
        %s1205 = sld [smem:[#allocation2 + $0x42]]
        %s1206 = sld [smem:[#allocation2 + $0x52]]
        %v1207 = vstv %s1205
        %v1208 = vstv %s1206
        %v1209 = vsel %vm1194, %v1207, %v1208
        %s1210 = sld [smem:[#allocation2 + $0x43]]
        %s1211 = sld [smem:[#allocation2 + $0x53]]
        %v1212 = vstv %s1210
        %v1213 = vstv %s1211
        %v1214 = vsel %vm1194, %v1212, %v1213
        %s1215 = sld [smem:[#allocation2 + $0x44]]
        %s1216 = sld [smem:[#allocation2 + $0x54]]
        %v1217 = vstv %s1215
        %v1218 = vstv %s1216
        %v1219 = vsel %vm1194, %v1217, %v1218
        %s1220 = sld [smem:[#allocation2 + $0x45]]
        %s1221 = sld [smem:[#allocation2 + $0x55]]
        %v1222 = vstv %s1220
        %v1223 = vstv %s1221
        %v1224 = vsel %vm1194, %v1222, %v1223
        %s1225 = sld [smem:[#allocation2 + $0x46]]
        %s1226 = sld [smem:[#allocation2 + $0x56]]
        %v1227 = vstv %s1225
        %v1228 = vstv %s1226
        %v1229 = vsel %vm1194, %v1227, %v1228
        %s1230 = sld [smem:[#allocation2 + $0x47]]
        %s1231 = sld [smem:[#allocation2 + $0x57]]
        %v1232 = vstv %s1230
        %v1233 = vstv %s1231
        %v1234 = vsel %vm1194, %v1232, %v1233
        %s1235 = sld [smem:[#allocation2 + $0x48]]
        %s1236 = sld [smem:[#allocation2 + $0x58]]
        %v1237 = vstv %s1235
        %v1238 = vstv %s1236
        %v1239 = vsel %vm1194, %v1237, %v1238
        %s1240 = sld [smem:[#allocation2 + $0x49]]
        %s1241 = sld [smem:[#allocation2 + $0x59]]
        %v1242 = vstv %s1240
        %v1243 = vstv %s1241
        %v1244 = vsel %vm1194, %v1242, %v1243
        %s1245 = sld [smem:[#allocation2 + $0x4a]]
        %s1246 = sld [smem:[#allocation2 + $0x5a]]
        %v1247 = vstv %s1245
        %v1248 = vstv %s1246
        %v1249 = vsel %vm1194, %v1247, %v1248
        %s1250 = sld [smem:[#allocation2 + $0x4b]]
        %s1251 = sld [smem:[#allocation2 + $0x5b]]
        %v1252 = vstv %s1250
        %v1253 = vstv %s1251
        %v1254 = vsel %vm1194, %v1252, %v1253
        %s1255 = sld [smem:[#allocation2 + $0x4c]]
        %s1256 = sld [smem:[#allocation2 + $0x5c]]
        %v1257 = vstv %s1255
        %v1258 = vstv %s1256
        %v1259 = vsel %vm1194, %v1257, %v1258
        %s1260 = sld [smem:[#allocation2 + $0x4d]]
        %s1261 = sld [smem:[#allocation2 + $0x5d]]
        %v1262 = vstv %s1260
        %v1263 = vstv %s1261
        %v1264 = vsel %vm1194, %v1262, %v1263
        %s1265 = sld [smem:[#allocation2 + $0x4e]]
        %s1266 = sld [smem:[#allocation2 + $0x5e]]
        %v1267 = vstv %s1265
        %v1268 = vstv %s1266
        %v1269 = vsel %vm1194, %v1267, %v1268
        %s1270 = sld [smem:[#allocation2 + $0x4f]]
        %s1271 = sld [smem:[#allocation2 + $0x5f]]
        %v1272 = vstv %s1270
        %v1273 = vstv %s1271
        %v1274 = vsel %vm1194, %v1272, %v1273
        %s1275 = sld [smem:[#allocation2 + $0x60]]
        %s1276 = sld [smem:[#allocation2 + $0x70]]
        %v1277 = vstv %s1275
        %v1278 = vstv %s1276
        %v1279 = vsel %vm1194, %v1277, %v1278
        %s1280 = sld [smem:[#allocation2 + $0x61]]
        %s1281 = sld [smem:[#allocation2 + $0x71]]
        %v1282 = vstv %s1280
        %v1283 = vstv %s1281
        %v1284 = vsel %vm1194, %v1282, %v1283
        %s1285 = sld [smem:[#allocation2 + $0x62]]
        %s1286 = sld [smem:[#allocation2 + $0x72]]
        %v1287 = vstv %s1285
        %v1288 = vstv %s1286
        %v1289 = vsel %vm1194, %v1287, %v1288
        %s1290 = sld [smem:[#allocation2 + $0x63]]
        %s1291 = sld [smem:[#allocation2 + $0x73]]
        %v1292 = vstv %s1290
        %v1293 = vstv %s1291
        %v1294 = vsel %vm1194, %v1292, %v1293
        %s1295 = sld [smem:[#allocation2 + $0x64]]
        %s1296 = sld [smem:[#allocation2 + $0x74]]
        %v1297 = vstv %s1295
        %v1298 = vstv %s1296
        %v1299 = vsel %vm1194, %v1297, %v1298
        %s1300 = sld [smem:[#allocation2 + $0x65]]
        %s1301 = sld [smem:[#allocation2 + $0x75]]
        %v1302 = vstv %s1300
        %v1303 = vstv %s1301
        %v1304 = vsel %vm1194, %v1302, %v1303
        %s1305 = sld [smem:[#allocation2 + $0x66]]
        %s1306 = sld [smem:[#allocation2 + $0x76]]
        %v1307 = vstv %s1305
        %v1308 = vstv %s1306
        %v1309 = vsel %vm1194, %v1307, %v1308
        %s1310 = sld [smem:[#allocation2 + $0x67]]
        %s1311 = sld [smem:[#allocation2 + $0x77]]
        %v1312 = vstv %s1310
        %v1313 = vstv %s1311
        %v1314 = vsel %vm1194, %v1312, %v1313
        %s1315 = sld [smem:[#allocation2 + $0x68]]
        %s1316 = sld [smem:[#allocation2 + $0x78]]
        %v1317 = vstv %s1315
        %v1318 = vstv %s1316
        %v1319 = vsel %vm1194, %v1317, %v1318
        %s1320 = sld [smem:[#allocation2 + $0x69]]
        %s1321 = sld [smem:[#allocation2 + $0x79]]
        %v1322 = vstv %s1320
        %v1323 = vstv %s1321
        %v1324 = vsel %vm1194, %v1322, %v1323
        %s1325 = sld [smem:[#allocation2 + $0x6a]]
        %s1326 = sld [smem:[#allocation2 + $0x7a]]
        %v1327 = vstv %s1325
        %v1328 = vstv %s1326
        %v1329 = vsel %vm1194, %v1327, %v1328
        %s1330 = sld [smem:[#allocation2 + $0x6b]]
        %s1331 = sld [smem:[#allocation2 + $0x7b]]
        %v1332 = vstv %s1330
        %v1333 = vstv %s1331
        %v1334 = vsel %vm1194, %v1332, %v1333
        %s1335 = sld [smem:[#allocation2 + $0x6c]]
        %s1336 = sld [smem:[#allocation2 + $0x7c]]
        %v1337 = vstv %s1335
        %v1338 = vstv %s1336
        %v1339 = vsel %vm1194, %v1337, %v1338
        %s1340 = sld [smem:[#allocation2 + $0x6d]]
        %s1341 = sld [smem:[#allocation2 + $0x7d]]
        %v1342 = vstv %s1340
        %v1343 = vstv %s1341
        %v1344 = vsel %vm1194, %v1342, %v1343
        %s1345 = sld [smem:[#allocation2 + $0x6e]]
        %s1346 = sld [smem:[#allocation2 + $0x7e]]
        %v1347 = vstv %s1345
        %v1348 = vstv %s1346
        %v1349 = vsel %vm1194, %v1347, %v1348
        %s1350 = sld [smem:[#allocation2 + $0x6f]]
        %s1351 = sld [smem:[#allocation2 + $0x7f]]
        %v1352 = vstv %s1350
        %v1353 = vstv %s1351
        %v1354 = vsel %vm1194, %v1352, %v1353
        %v1355 = vmul.f32 %v1199, %v609
        %v1356 = vmul.f32 %v1204, %v643
        %v1357 = vmul.f32 %v1209, %v677
        %v1358 = vmul.f32 %v1214, %v711
        %v1359 = vmul.f32 %v1279, %v781
        %v1360 = vmul.f32 %v1284, %v811
        %v1361 = vmul.f32 %v1289, %v841
        %v1362 = vmul.f32 %v1294, %v871
        %v1363 = vadd.f32 %v1355, %v1356
        %v1364 = vadd.f32 %v1357, %v1358
        %v1365 = vadd.f32 %v1359, %v1360
        %v1366 = vadd.f32 %v1361, %v1362
        %v1367 = vadd.f32 %v1363, %v1364
        %v1368 = vadd.f32 %v1365, %v1366
        %v1369 = vadd.f32 %v1367, %v1368
        %1370 = vrot.lane.b32.xlu0 %v1369, 16
        %v1371 = vpop.permute.xlu0 %1370
        %v1372 = vsel %vm590, %v1371, %v1369
        %1373 = vrot.lane.b32.xlu0 %v1372, 16
        %v1374 = vpop.permute.xlu0 %1373
        %v1375 = vsel %vm590, %v1374, %v1369
        %1377 = vrot.lane.b32.xlu0 %v1375, 126
        %v1378 = vpop.permute.xlu0 %1377
        %v1380 = vadd.f32 %v1369, %v1378
        %s1381 = sld [smem:[#allocation6 + $0x4]]
        %v1382 = vstv %s1381
        %v1383 = vadd.f32 %v1380, %v1382
        %vm1384 = vcmp.gt.f32.partialorder %v1383, 0.0
        %s1385 = sld [smem:[#allocation7 + $0x4]]
        %v1386 = vstv %s1385
        %v1387 = vmul.f32 %v1386, %v1383
        %v1388 = vsel %vm1384, %v1383, %v1387
        %v1389 = vmul.f32 %v1219, %v609
        %v1390 = vmul.f32 %v1224, %v643
        %v1391 = vmul.f32 %v1229, %v677
        %v1392 = vmul.f32 %v1234, %v711
        %v1393 = vmul.f32 %v1299, %v781
        %v1394 = vmul.f32 %v1304, %v811
        %v1395 = vmul.f32 %v1309, %v841
        %v1396 = vmul.f32 %v1314, %v871
        %v1397 = vadd.f32 %v1389, %v1390
        %v1398 = vadd.f32 %v1391, %v1392
        %v1399 = vadd.f32 %v1393, %v1394
        %v1400 = vadd.f32 %v1395, %v1396
        %v1401 = vadd.f32 %v1397, %v1398
        %v1402 = vadd.f32 %v1399, %v1400
        %v1403 = vadd.f32 %v1401, %v1402
        %1404 = vrot.lane.b32.xlu0 %v1403, 16
        %v1405 = vpop.permute.xlu0 %1404
        %v1406 = vsel %vm590, %v1405, %v1403
        %1407 = vrot.lane.b32.xlu0 %v1406, 16
        %v1408 = vpop.permute.xlu0 %1407
        %v1409 = vsel %vm590, %v1408, %v1403
        %1411 = vrot.lane.b32.xlu0 %v1409, 126
        %v1412 = vpop.permute.xlu0 %1411
        %v1414 = vadd.f32 %v1403, %v1412
        %s1415 = sld [smem:[#allocation6 + $0x5]]
        %v1416 = vstv %s1415
        %v1417 = vadd.f32 %v1414, %v1416
        %vm1418 = vcmp.gt.f32.partialorder %v1417, 0.0
        %s1419 = sld [smem:[#allocation7 + $0x5]]
        %v1420 = vstv %s1419
        %v1421 = vmul.f32 %v1420, %v1417
        %v1422 = vsel %vm1418, %v1417, %v1421
        %v1423 = vmul.f32 %v1239, %v609
        %v1424 = vmul.f32 %v1244, %v643
        %v1425 = vmul.f32 %v1249, %v677
        %v1426 = vmul.f32 %v1254, %v711
        %v1427 = vmul.f32 %v1319, %v781
        %v1428 = vmul.f32 %v1324, %v811
        %v1429 = vmul.f32 %v1329, %v841
        %v1430 = vmul.f32 %v1334, %v871
        %v1431 = vadd.f32 %v1423, %v1424
        %v1432 = vadd.f32 %v1425, %v1426
        %v1433 = vadd.f32 %v1427, %v1428
        %v1434 = vadd.f32 %v1429, %v1430
        %v1435 = vadd.f32 %v1431, %v1432
        %v1436 = vadd.f32 %v1433, %v1434
        %v1437 = vadd.f32 %v1435, %v1436
        %1438 = vrot.lane.b32.xlu0 %v1437, 16
        %v1439 = vpop.permute.xlu0 %1438
        %v1440 = vsel %vm590, %v1439, %v1437
        %1441 = vrot.lane.b32.xlu0 %v1440, 16
        %v1442 = vpop.permute.xlu0 %1441
        %v1443 = vsel %vm590, %v1442, %v1437
        %1445 = vrot.lane.b32.xlu0 %v1443, 126
        %v1446 = vpop.permute.xlu0 %1445
        %v1448 = vadd.f32 %v1437, %v1446
        %s1449 = sld [smem:[#allocation6 + $0x6]]
        %v1450 = vstv %s1449
        %v1451 = vadd.f32 %v1448, %v1450
        %vm1452 = vcmp.gt.f32.partialorder %v1451, 0.0
        %s1453 = sld [smem:[#allocation7 + $0x6]]
        %v1454 = vstv %s1453
        %v1455 = vmul.f32 %v1454, %v1451
        %v1456 = vsel %vm1452, %v1451, %v1455
        %v1457 = vmul.f32 %v1259, %v609
        %v1458 = vmul.f32 %v1264, %v643
        %v1459 = vmul.f32 %v1269, %v677
        %v1460 = vmul.f32 %v1274, %v711
        %v1461 = vmul.f32 %v1339, %v781
        %v1462 = vmul.f32 %v1344, %v811
        %v1463 = vmul.f32 %v1349, %v841
        %v1464 = vmul.f32 %v1354, %v871
        %v1465 = vadd.f32 %v1457, %v1458
        %v1466 = vadd.f32 %v1459, %v1460
        %v1467 = vadd.f32 %v1461, %v1462
        %v1468 = vadd.f32 %v1463, %v1464
        %v1469 = vadd.f32 %v1465, %v1466
        %v1470 = vadd.f32 %v1467, %v1468
        %v1471 = vadd.f32 %v1469, %v1470
        %1472 = vrot.lane.b32.xlu0 %v1471, 16
        %v1473 = vpop.permute.xlu0 %1472
        %v1474 = vsel %vm590, %v1473, %v1471
        %1475 = vrot.lane.b32.xlu0 %v1474, 16
        %v1476 = vpop.permute.xlu0 %1475
        %v1477 = vsel %vm590, %v1476, %v1471
        %1479 = vrot.lane.b32.xlu0 %v1477, 126
        %v1480 = vpop.permute.xlu0 %1479
        %v1482 = vadd.f32 %v1471, %v1480
        %s1483 = sld [smem:[#allocation6 + $0x7]]
        %v1484 = vstv %s1483
        %v1485 = vadd.f32 %v1482, %v1484
        %vm1486 = vcmp.gt.f32.partialorder %v1485, 0.0
        %s1487 = sld [smem:[#allocation7 + $0x7]]
        %v1488 = vstv %s1487
        %v1489 = vmul.f32 %v1488, %v1485
        %v1490 = vsel %vm1486, %v1485, %v1489
        %v1491 = vmul.f32 %v1199, %v941
        %v1492 = vmul.f32 %v1204, %v971
        %v1493 = vmul.f32 %v1209, %v1001
        %v1494 = vmul.f32 %v1214, %v1031
        %v1495 = vmul.f32 %v1279, %v1101
        %v1496 = vmul.f32 %v1284, %v1131
        %v1497 = vmul.f32 %v1289, %v1161
        %v1498 = vmul.f32 %v1294, %v1191
        %v1499 = vadd.f32 %v1491, %v1492
        %v1500 = vadd.f32 %v1493, %v1494
        %v1501 = vadd.f32 %v1495, %v1496
        %v1502 = vadd.f32 %v1497, %v1498
        %v1503 = vadd.f32 %v1499, %v1500
        %v1504 = vadd.f32 %v1501, %v1502
        %v1505 = vadd.f32 %v1503, %v1504
        %1506 = vrot.lane.b32.xlu0 %v1505, 16
        %v1507 = vpop.permute.xlu0 %1506
        %v1508 = vsel %vm590, %v1507, %v1505
        %1509 = vrot.lane.b32.xlu0 %v1508, 16
        %v1510 = vpop.permute.xlu0 %1509
        %v1511 = vsel %vm590, %v1510, %v1505
        %1513 = vrot.lane.b32.xlu0 %v1511, 126
        %v1514 = vpop.permute.xlu0 %1513
        %v1516 = vadd.f32 %v1505, %v1514
        %v1517 = vadd.f32 %v1516, %v1382
        %vm1518 = vcmp.gt.f32.partialorder %v1517, 0.0
        %v1519 = vmul.f32 %v1386, %v1517
        %v1520 = vsel %vm1518, %v1517, %v1519
        %v1521 = vmul.f32 %v1219, %v941
        %v1522 = vmul.f32 %v1224, %v971
        %v1523 = vmul.f32 %v1229, %v1001
        %v1524 = vmul.f32 %v1234, %v1031
        %v1525 = vmul.f32 %v1299, %v1101
        %v1526 = vmul.f32 %v1304, %v1131
        %v1527 = vmul.f32 %v1309, %v1161
        %v1528 = vmul.f32 %v1314, %v1191
        %v1529 = vadd.f32 %v1521, %v1522
        %v1530 = vadd.f32 %v1523, %v1524
        %v1531 = vadd.f32 %v1525, %v1526
        %v1532 = vadd.f32 %v1527, %v1528
        %v1533 = vadd.f32 %v1529, %v1530
        %v1534 = vadd.f32 %v1531, %v1532
        %v1535 = vadd.f32 %v1533, %v1534
        %1536 = vrot.lane.b32.xlu0 %v1535, 16
        %v1537 = vpop.permute.xlu0 %1536
        %v1538 = vsel %vm590, %v1537, %v1535
        %1539 = vrot.lane.b32.xlu0 %v1538, 16
        %v1540 = vpop.permute.xlu0 %1539
        %v1541 = vsel %vm590, %v1540, %v1535
        %1543 = vrot.lane.b32.xlu0 %v1541, 126
        %v1544 = vpop.permute.xlu0 %1543
        %v1546 = vadd.f32 %v1535, %v1544
        %v1547 = vadd.f32 %v1546, %v1416
        %vm1548 = vcmp.gt.f32.partialorder %v1547, 0.0
        %v1549 = vmul.f32 %v1420, %v1547
        %v1550 = vsel %vm1548, %v1547, %v1549
        %v1551 = vmul.f32 %v1239, %v941
        %v1552 = vmul.f32 %v1244, %v971
        %v1553 = vmul.f32 %v1249, %v1001
        %v1554 = vmul.f32 %v1254, %v1031
        %v1555 = vmul.f32 %v1319, %v1101
        %v1556 = vmul.f32 %v1324, %v1131
        %v1557 = vmul.f32 %v1329, %v1161
        %v1558 = vmul.f32 %v1334, %v1191
        %v1559 = vadd.f32 %v1551, %v1552
        %v1560 = vadd.f32 %v1553, %v1554
        %v1561 = vadd.f32 %v1555, %v1556
        %v1562 = vadd.f32 %v1557, %v1558
        %v1563 = vadd.f32 %v1559, %v1560
        %v1564 = vadd.f32 %v1561, %v1562
        %v1565 = vadd.f32 %v1563, %v1564
        %1566 = vrot.lane.b32.xlu0 %v1565, 16
        %v1567 = vpop.permute.xlu0 %1566
        %v1568 = vsel %vm590, %v1567, %v1565
        %1569 = vrot.lane.b32.xlu0 %v1568, 16
        %v1570 = vpop.permute.xlu0 %1569
        %v1571 = vsel %vm590, %v1570, %v1565
        %1573 = vrot.lane.b32.xlu0 %v1571, 126
        %v1574 = vpop.permute.xlu0 %1573
        %v1576 = vadd.f32 %v1565, %v1574
        %v1577 = vadd.f32 %v1576, %v1450
        %vm1578 = vcmp.gt.f32.partialorder %v1577, 0.0
        %v1579 = vmul.f32 %v1454, %v1577
        %v1580 = vsel %vm1578, %v1577, %v1579
        %v1581 = vmul.f32 %v1259, %v941
        %v1582 = vmul.f32 %v1264, %v971
        %v1583 = vmul.f32 %v1269, %v1001
        %v1584 = vmul.f32 %v1274, %v1031
        %v1585 = vmul.f32 %v1339, %v1101
        %v1586 = vmul.f32 %v1344, %v1131
        %v1587 = vmul.f32 %v1349, %v1161
        %v1588 = vmul.f32 %v1354, %v1191
        %v1589 = vadd.f32 %v1581, %v1582
        %v1590 = vadd.f32 %v1583, %v1584
        %v1591 = vadd.f32 %v1585, %v1586
        %v1592 = vadd.f32 %v1587, %v1588
        %v1593 = vadd.f32 %v1589, %v1590
        %v1594 = vadd.f32 %v1591, %v1592
        %v1595 = vadd.f32 %v1593, %v1594
        %1596 = vrot.lane.b32.xlu0 %v1595, 16
        %v1597 = vpop.permute.xlu0 %1596
        %v1598 = vsel %vm590, %v1597, %v1595
        %1599 = vrot.lane.b32.xlu0 %v1598, 16
        %v1600 = vpop.permute.xlu0 %1599
        %v1601 = vsel %vm590, %v1600, %v1595
        %1603 = vrot.lane.b32.xlu0 %v1601, 126
        %v1604 = vpop.permute.xlu0 %1603
        %v1606 = vadd.f32 %v1595, %v1604
        %v1607 = vadd.f32 %v1606, %v1484
        %vm1608 = vcmp.gt.f32.partialorder %v1607, 0.0
        %v1609 = vmul.f32 %v1488, %v1607
        %v1610 = vsel %vm1608, %v1607, %v1609
        %v1611 = vshra.s32 %v304, 2
        %v1612 = vand.u32 %v1611, 1
        %vm1613 = vcmp.eq.s32.totalorder %v1612, 0
        %s1614 = sld [smem:[#allocation2 + $0x80]]
        %s1615 = sld [smem:[#allocation2 + $0x90]]
        %v1616 = vstv %s1614
        %v1617 = vstv %s1615
        %v1618 = vsel %vm1613, %v1616, %v1617
        %s1619 = sld [smem:[#allocation2 + $0x81]]
        %s1620 = sld [smem:[#allocation2 + $0x91]]
        %v1621 = vstv %s1619
        %v1622 = vstv %s1620
        %v1623 = vsel %vm1613, %v1621, %v1622
        %s1624 = sld [smem:[#allocation2 + $0x82]]
        %s1625 = sld [smem:[#allocation2 + $0x92]]
        %v1626 = vstv %s1624
        %v1627 = vstv %s1625
        %v1628 = vsel %vm1613, %v1626, %v1627
        %s1629 = sld [smem:[#allocation2 + $0x83]]
        %s1630 = sld [smem:[#allocation2 + $0x93]]
        %v1631 = vstv %s1629
        %v1632 = vstv %s1630
        %v1633 = vsel %vm1613, %v1631, %v1632
        %s1634 = sld [smem:[#allocation2 + $0x84]]
        %s1635 = sld [smem:[#allocation2 + $0x94]]
        %v1636 = vstv %s1634
        %v1637 = vstv %s1635
        %v1638 = vsel %vm1613, %v1636, %v1637
        %s1639 = sld [smem:[#allocation2 + $0x85]]
        %s1640 = sld [smem:[#allocation2 + $0x95]]
        %v1641 = vstv %s1639
        %v1642 = vstv %s1640
        %v1643 = vsel %vm1613, %v1641, %v1642
        %s1644 = sld [smem:[#allocation2 + $0x86]]
        %s1645 = sld [smem:[#allocation2 + $0x96]]
        %v1646 = vstv %s1644
        %v1647 = vstv %s1645
        %v1648 = vsel %vm1613, %v1646, %v1647
        %s1649 = sld [smem:[#allocation2 + $0x87]]
        %s1650 = sld [smem:[#allocation2 + $0x97]]
        %v1651 = vstv %s1649
        %v1652 = vstv %s1650
        %v1653 = vsel %vm1613, %v1651, %v1652
        %s1654 = sld [smem:[#allocation2 + $0x88]]
        %s1655 = sld [smem:[#allocation2 + $0x98]]
        %v1656 = vstv %s1654
        %v1657 = vstv %s1655
        %v1658 = vsel %vm1613, %v1656, %v1657
        %s1659 = sld [smem:[#allocation2 + $0x89]]
        %s1660 = sld [smem:[#allocation2 + $0x99]]
        %v1661 = vstv %s1659
        %v1662 = vstv %s1660
        %v1663 = vsel %vm1613, %v1661, %v1662
        %s1664 = sld [smem:[#allocation2 + $0x8a]]
        %s1665 = sld [smem:[#allocation2 + $0x9a]]
        %v1666 = vstv %s1664
        %v1667 = vstv %s1665
        %v1668 = vsel %vm1613, %v1666, %v1667
        %s1669 = sld [smem:[#allocation2 + $0x8b]]
        %s1670 = sld [smem:[#allocation2 + $0x9b]]
        %v1671 = vstv %s1669
        %v1672 = vstv %s1670
        %v1673 = vsel %vm1613, %v1671, %v1672
        %s1674 = sld [smem:[#allocation2 + $0x8c]]
        %s1675 = sld [smem:[#allocation2 + $0x9c]]
        %v1676 = vstv %s1674
        %v1677 = vstv %s1675
        %v1678 = vsel %vm1613, %v1676, %v1677
        %s1679 = sld [smem:[#allocation2 + $0x8d]]
        %s1680 = sld [smem:[#allocation2 + $0x9d]]
        %v1681 = vstv %s1679
        %v1682 = vstv %s1680
        %v1683 = vsel %vm1613, %v1681, %v1682
        %s1684 = sld [smem:[#allocation2 + $0x8e]]
        %s1685 = sld [smem:[#allocation2 + $0x9e]]
        %v1686 = vstv %s1684
        %v1687 = vstv %s1685
        %v1688 = vsel %vm1613, %v1686, %v1687
        %s1689 = sld [smem:[#allocation2 + $0x8f]]
        %s1690 = sld [smem:[#allocation2 + $0x9f]]
        %v1691 = vstv %s1689
        %v1692 = vstv %s1690
        %v1693 = vsel %vm1613, %v1691, %v1692
        %s1694 = sld [smem:[#allocation2 + $0xa0]]
        %s1695 = sld [smem:[#allocation2 + $0xb0]]
        %v1696 = vstv %s1694
        %v1697 = vstv %s1695
        %v1698 = vsel %vm1613, %v1696, %v1697
        %s1699 = sld [smem:[#allocation2 + $0xa1]]
        %s1700 = sld [smem:[#allocation2 + $0xb1]]
        %v1701 = vstv %s1699
        %v1702 = vstv %s1700
        %v1703 = vsel %vm1613, %v1701, %v1702
        %s1704 = sld [smem:[#allocation2 + $0xa2]]
        %s1705 = sld [smem:[#allocation2 + $0xb2]]
        %v1706 = vstv %s1704
        %v1707 = vstv %s1705
        %v1708 = vsel %vm1613, %v1706, %v1707
        %s1709 = sld [smem:[#allocation2 + $0xa3]]
        %s1710 = sld [smem:[#allocation2 + $0xb3]]
        %v1711 = vstv %s1709
        %v1712 = vstv %s1710
        %v1713 = vsel %vm1613, %v1711, %v1712
        %s1714 = sld [smem:[#allocation2 + $0xa4]]
        %s1715 = sld [smem:[#allocation2 + $0xb4]]
        %v1716 = vstv %s1714
        %v1717 = vstv %s1715
        %v1718 = vsel %vm1613, %v1716, %v1717
        %s1719 = sld [smem:[#allocation2 + $0xa5]]
        %s1720 = sld [smem:[#allocation2 + $0xb5]]
        %v1721 = vstv %s1719
        %v1722 = vstv %s1720
        %v1723 = vsel %vm1613, %v1721, %v1722
        %s1724 = sld [smem:[#allocation2 + $0xa6]]
        %s1725 = sld [smem:[#allocation2 + $0xb6]]
        %v1726 = vstv %s1724
        %v1727 = vstv %s1725
        %v1728 = vsel %vm1613, %v1726, %v1727
        %s1729 = sld [smem:[#allocation2 + $0xa7]]
        %s1730 = sld [smem:[#allocation2 + $0xb7]]
        %v1731 = vstv %s1729
        %v1732 = vstv %s1730
        %v1733 = vsel %vm1613, %v1731, %v1732
        %s1734 = sld [smem:[#allocation2 + $0xa8]]
        %s1735 = sld [smem:[#allocation2 + $0xb8]]
        %v1736 = vstv %s1734
        %v1737 = vstv %s1735
        %v1738 = vsel %vm1613, %v1736, %v1737
        %s1739 = sld [smem:[#allocation2 + $0xa9]]
        %s1740 = sld [smem:[#allocation2 + $0xb9]]
        %v1741 = vstv %s1739
        %v1742 = vstv %s1740
        %v1743 = vsel %vm1613, %v1741, %v1742
        %s1744 = sld [smem:[#allocation2 + $0xaa]]
        %s1745 = sld [smem:[#allocation2 + $0xba]]
        %v1746 = vstv %s1744
        %v1747 = vstv %s1745
        %v1748 = vsel %vm1613, %v1746, %v1747
        %s1749 = sld [smem:[#allocation2 + $0xab]]
        %s1750 = sld [smem:[#allocation2 + $0xbb]]
        %v1751 = vstv %s1749
        %v1752 = vstv %s1750
        %v1753 = vsel %vm1613, %v1751, %v1752
        %s1754 = sld [smem:[#allocation2 + $0xac]]
        %s1755 = sld [smem:[#allocation2 + $0xbc]]
        %v1756 = vstv %s1754
        %v1757 = vstv %s1755
        %v1758 = vsel %vm1613, %v1756, %v1757
        %s1759 = sld [smem:[#allocation2 + $0xad]]
        %s1760 = sld [smem:[#allocation2 + $0xbd]]
        %v1761 = vstv %s1759
        %v1762 = vstv %s1760
        %v1763 = vsel %vm1613, %v1761, %v1762
        %s1764 = sld [smem:[#allocation2 + $0xae]]
        %s1765 = sld [smem:[#allocation2 + $0xbe]]
        %v1766 = vstv %s1764
        %v1767 = vstv %s1765
        %v1768 = vsel %vm1613, %v1766, %v1767
        %s1769 = sld [smem:[#allocation2 + $0xaf]]
        %s1770 = sld [smem:[#allocation2 + $0xbf]]
        %v1771 = vstv %s1769
        %v1772 = vstv %s1770
        %v1773 = vsel %vm1613, %v1771, %v1772
        %v1774 = vmul.f32 %v1618, %v1388
        %v1775 = vmul.f32 %v1623, %v1422
        %v1776 = vmul.f32 %v1628, %v1456
        %v1777 = vmul.f32 %v1633, %v1490
        %v1778 = vmul.f32 %v1698, %v1520
        %v1779 = vmul.f32 %v1703, %v1550
        %v1780 = vmul.f32 %v1708, %v1580
        %v1781 = vmul.f32 %v1713, %v1610
        %v1782 = vadd.f32 %v1774, %v1775
        %v1783 = vadd.f32 %v1776, %v1777
        %v1784 = vadd.f32 %v1778, %v1779
        %v1785 = vadd.f32 %v1780, %v1781
        %v1786 = vadd.f32 %v1782, %v1783
        %v1787 = vadd.f32 %v1784, %v1785
        %v1788 = vadd.f32 %v1786, %v1787
        %1789 = vrot.lane.b32.xlu0 %v1788, 16
        %v1790 = vpop.permute.xlu0 %1789
        %v1791 = vsel %vm590, %v1790, %v1788
        %1792 = vrot.lane.b32.xlu0 %v1791, 16
        %v1793 = vpop.permute.xlu0 %1792
        %v1794 = vsel %vm590, %v1793, %v1788
        %1796 = vrot.lane.b32.xlu0 %v1794, 124
        %v1797 = vpop.permute.xlu0 %1796
        %v1799 = vadd.f32 %v1788, %v1797
        %s1800 = sld [smem:[#allocation6 + $0x8]]
        %v1801 = vstv %s1800
        %v1802 = vadd.f32 %v1799, %v1801
        %vm1803 = vcmp.gt.f32.partialorder %v1802, 0.0
        %s1804 = sld [smem:[#allocation7 + $0x8]]
        %v1805 = vstv %s1804
        %v1806 = vmul.f32 %v1805, %v1802
        %v1807 = vsel %vm1803, %v1802, %v1806
        %v1808 = vmul.f32 %v1638, %v1388
        %v1809 = vmul.f32 %v1643, %v1422
        %v1810 = vmul.f32 %v1648, %v1456
        %v1811 = vmul.f32 %v1653, %v1490
        %v1812 = vmul.f32 %v1718, %v1520
        %v1813 = vmul.f32 %v1723, %v1550
        %v1814 = vmul.f32 %v1728, %v1580
        %v1815 = vmul.f32 %v1733, %v1610
        %v1816 = vadd.f32 %v1808, %v1809
        %v1817 = vadd.f32 %v1810, %v1811
        %v1818 = vadd.f32 %v1812, %v1813
        %v1819 = vadd.f32 %v1814, %v1815
        %v1820 = vadd.f32 %v1816, %v1817
        %v1821 = vadd.f32 %v1818, %v1819
        %v1822 = vadd.f32 %v1820, %v1821
        %1823 = vrot.lane.b32.xlu0 %v1822, 16
        %v1824 = vpop.permute.xlu0 %1823
        %v1825 = vsel %vm590, %v1824, %v1822
        %1826 = vrot.lane.b32.xlu0 %v1825, 16
        %v1827 = vpop.permute.xlu0 %1826
        %v1828 = vsel %vm590, %v1827, %v1822
        %1830 = vrot.lane.b32.xlu0 %v1828, 124
        %v1831 = vpop.permute.xlu0 %1830
        %v1833 = vadd.f32 %v1822, %v1831
        %s1834 = sld [smem:[#allocation6 + $0x9]]
        %v1835 = vstv %s1834
        %v1836 = vadd.f32 %v1833, %v1835
        %vm1837 = vcmp.gt.f32.partialorder %v1836, 0.0
        %s1838 = sld [smem:[#allocation7 + $0x9]]
        %v1839 = vstv %s1838
        %v1840 = vmul.f32 %v1839, %v1836
        %v1841 = vsel %vm1837, %v1836, %v1840
        %v1842 = vmul.f32 %v1658, %v1388
        %v1843 = vmul.f32 %v1663, %v1422
        %v1844 = vmul.f32 %v1668, %v1456
        %v1845 = vmul.f32 %v1673, %v1490
        %v1846 = vmul.f32 %v1738, %v1520
        %v1847 = vmul.f32 %v1743, %v1550
        %v1848 = vmul.f32 %v1748, %v1580
        %v1849 = vmul.f32 %v1753, %v1610
        %v1850 = vadd.f32 %v1842, %v1843
        %v1851 = vadd.f32 %v1844, %v1845
        %v1852 = vadd.f32 %v1846, %v1847
        %v1853 = vadd.f32 %v1848, %v1849
        %v1854 = vadd.f32 %v1850, %v1851
        %v1855 = vadd.f32 %v1852, %v1853
        %v1856 = vadd.f32 %v1854, %v1855
        %1857 = vrot.lane.b32.xlu0 %v1856, 16
        %v1858 = vpop.permute.xlu0 %1857
        %v1859 = vsel %vm590, %v1858, %v1856
        %1860 = vrot.lane.b32.xlu0 %v1859, 16
        %v1861 = vpop.permute.xlu0 %1860
        %v1862 = vsel %vm590, %v1861, %v1856
        %1864 = vrot.lane.b32.xlu0 %v1862, 124
        %v1865 = vpop.permute.xlu0 %1864
        %v1867 = vadd.f32 %v1856, %v1865
        %s1868 = sld [smem:[#allocation6 + $0xa]]
        %v1869 = vstv %s1868
        %v1870 = vadd.f32 %v1867, %v1869
        %vm1871 = vcmp.gt.f32.partialorder %v1870, 0.0
        %s1872 = sld [smem:[#allocation7 + $0xa]]
        %v1873 = vstv %s1872
        %v1874 = vmul.f32 %v1873, %v1870
        %v1875 = vsel %vm1871, %v1870, %v1874
        %v1876 = vmul.f32 %v1678, %v1388
        %v1877 = vmul.f32 %v1683, %v1422
        %v1878 = vmul.f32 %v1688, %v1456
        %v1879 = vmul.f32 %v1693, %v1490
        %v1880 = vmul.f32 %v1758, %v1520
        %v1881 = vmul.f32 %v1763, %v1550
        %v1882 = vmul.f32 %v1768, %v1580
        %v1883 = vmul.f32 %v1773, %v1610
        %v1884 = vadd.f32 %v1876, %v1877
        %v1885 = vadd.f32 %v1878, %v1879
        %v1886 = vadd.f32 %v1880, %v1881
        %v1887 = vadd.f32 %v1882, %v1883
        %v1888 = vadd.f32 %v1884, %v1885
        %v1889 = vadd.f32 %v1886, %v1887
        %v1890 = vadd.f32 %v1888, %v1889
        %1891 = vrot.lane.b32.xlu0 %v1890, 16
        %v1892 = vpop.permute.xlu0 %1891
        %v1893 = vsel %vm590, %v1892, %v1890
        %1894 = vrot.lane.b32.xlu0 %v1893, 16
        %v1895 = vpop.permute.xlu0 %1894
        %v1896 = vsel %vm590, %v1895, %v1890
        %1898 = vrot.lane.b32.xlu0 %v1896, 124
        %v1899 = vpop.permute.xlu0 %1898
        %v1901 = vadd.f32 %v1890, %v1899
        %s1902 = sld [smem:[#allocation6 + $0xb]]
        %v1903 = vstv %s1902
        %v1904 = vadd.f32 %v1901, %v1903
        %vm1905 = vcmp.gt.f32.partialorder %v1904, 0.0
        %s1906 = sld [smem:[#allocation7 + $0xb]]
        %v1907 = vstv %s1906
        %v1908 = vmul.f32 %v1907, %v1904
        %v1909 = vsel %vm1905, %v1904, %v1908
        %vm1910 = vcmask 123904
        %1911 = vst.msk [vmem:[%s302] sm:$0x3] %vm1910, %v1807
        %s1912 = scalar_lea.vmem %s302, 2
        %1913 = vst.msk [vmem:[%s1912] sm:$0x3] %vm1910, %v1841
        %s1914 = scalar_lea.vmem %s302, 4
        %1915 = vst.msk [vmem:[%s1914] sm:$0x3] %vm1910, %v1875
        %s1916 = scalar_lea.vmem %s302, 6
        %1917 = vst.msk [vmem:[%s1916] sm:$0x3] %vm1910, %v1909
        %p1918 = scmp.lt.s32.totalorder %s26, 1
        %s1919 = scalar_select %p1918, %s26, 1
        %p1920 = scmp.lt.s32.totalorder %s27, 0
        %s1921 = scalar_select %p1920, %s27, 0
        %p1922 = scmp.lt.s32.totalorder %s28, 0
        %s1923 = scalar_select %p1922, %s28, 0
        %s1924 = sadd.s32 %s1923, %s1921
        %s1925 = smul.addr %s1919, 4
        %s1926 = sadd.s32 %s1924, %s1925
        %s1927 = smul.addr %s1926, 2
        %s1928 = scalar_lea.vmem %s4, %s1927
        // Predicated region
        $region53: #{downconv_forward.1} parent=35 // pred_check
          %p1929 = pneg %p155
        $region54: #{downconv_forward.1} parent=35 // pred_check_branch
          %1931 = sbr.rel (%p1929) target = $region56
        $region55: #{downconv_forward.1} parent=35 // pred_region
          _
        $region56: #{downconv_forward.1} parent=35 // pred_fallthru
          _
      $region36: #{downconv_forward.1} parent=5 // pred_fallthru
        _
      %p1932 = scmp.le.s32.totalorder 2, %s16
      // Predicated region
      $region57: #{downconv_forward.1} parent=5 // pred_check
        %p1933 = pneg %p1932
      $region58: #{downconv_forward.1} parent=5 // pred_check_branch
        %1935 = sbr.rel (%p1933) target = $region60
      $region59: #{downconv_forward.1} parent=5 // pred_region
        %s1936 = ssub.s32 %s16, 2
        // Predicated region
        $region61: #{downconv_forward.1} parent=59 // pred_check
          %p1937 = pneg %p161
        $region62: #{downconv_forward.1} parent=59 // pred_check_branch
          %1939 = sbr.rel (%p1937) target = $region64
        $region63: #{downconv_forward.1} parent=59 // pred_region
          %p1940 = scmp.lt.s32.totalorder %s29, 1
          %s1941 = scalar_select %p1940, %s29, 1
          %p1942 = scmp.lt.s32.totalorder %s30, 0
          %s1943 = scalar_select %p1942, %s30, 0
          %p1944 = scmp.lt.s32.totalorder %s31, 0
          %s1945 = scalar_select %p1944, %s31, 0
          %s1946 = sadd.s32 %s1945, %s1943
          %s1947 = smul.addr %s1941, 4
          %s1948 = sadd.s32 %s1946, %s1947
          %s1949 = smul.addr %s1948, 2
          %s1950 = scalar_lea.vmem %s4, %s1949
        $region64: #{downconv_forward.1} parent=59 // pred_fallthru
          _
      $region60: #{downconv_forward.1} parent=5 // pred_fallthru
        _
    $region6: #{downconv_forward.1} parent=1 // loop_footer
      %s20 = sadd.s32 1, %s16
    $region7: #{downconv_forward.1} parent=1 // loop_footer_branch
      %15 = sbr.rel target = $region3
    $region8: #{downconv_forward.1} parent=1 // loop_exit
      _
    %1951 = vsyncpa [#allocation3], 1
    %s1952 = scalar_lea.sflag [#allocation3], 1
    %1953 = vsyncpa %s1952, 1
    %1954 = vsyncpa [#allocation4], 1
    %s1955 = scalar_lea.sflag [#allocation4], 1
    %1956 = vsyncpa %s1955, 1
    %1957 = vsyncpa [#allocation5], 1
    %s1958 = scalar_lea.sflag [#allocation5], 1
    %1959 = vsyncpa %s1958, 1
    %1960 = vsyncpa [#allocation8], 1

</llo_original>
